<compile_context>
chip_gen: v6e
topology: v6e:2x2x1
jax: 0.10.0
libtpu: 0.0.40
codegen_flags: <defaults>
</compile_context>

<pallas_src>
import functools

import jax
import jax.numpy as jnp
from jax import lax
from jax.experimental import pallas as pl
from jax.experimental.pallas import tpu as pltpu

# ----------------------------- config (small) ------------------------------
BATCH = 2
SEQ = 8
EMBED = 32
NUM_HEADS = 4
HEAD_DIM = EMBED // NUM_HEADS
MAX_SEQ = 16  # size of the module's tril buffer; only [:SEQ, :SEQ] is used


# ----------------------------- fused MHA kernel ----------------------------
def _mha_kernel(x_ref, wqkv_ref, wo_ref, bo_ref, o_ref,
                *, num_heads, head_dim, batch):
    b_, s, e = x_ref.shape
    hd = num_heads * head_dim

    # Fused Q/K/V projection over all batches at once (one MXU push, bf16
    # operands, f32 accumulation). 1/sqrt(head_dim) already folded into the
    # Q columns of wqkv at pack time.
    xb = x_ref[...].reshape(b_ * s, e).astype(jnp.bfloat16)
    qkv = jnp.dot(xb, wqkv_ref[...],
                  preferred_element_type=jnp.float32)          # (B*S, 3*H*Dh)
    q = qkv[:, 0 * hd:1 * hd]
    k = qkv[:, 1 * hd:2 * hd]
    v = qkv[:, 2 * hd:3 * hd]

    # In-kernel causal mask (iota compare — no mask DMA). Finite negative so
    # even a fully-masked row stays NaN-free.
    row = lax.broadcasted_iota(jnp.int32, (s, s), 0)
    col = lax.broadcasted_iota(jnp.int32, (s, s), 1)
    causal = (row >= col)[None]                                 # (1, S, S)
    neg = jnp.float32(-1e30)

    wo = wo_ref[...]
    bo = bo_ref[...]

    # Trace-time unrolled batch loop (B is tiny); heads ride a single
    # dot_general batch dim inside each einsum.
    for b in range(batch):
        qb = q[b * s:(b + 1) * s].reshape(s, num_heads, head_dim)
        kb = k[b * s:(b + 1) * s].reshape(s, num_heads, head_dim)
        vb = v[b * s:(b + 1) * s].reshape(s, num_heads, head_dim)

        sc = jnp.einsum('qhd,khd->hqk',
                        qb.astype(jnp.bfloat16), kb.astype(jnp.bfloat16),
                        preferred_element_type=jnp.float32)     # (H, S, S)
        sc = jnp.where(causal, sc, neg)

        # Softmax in f32; denominator via EUP approximate reciprocal.
        m = jnp.max(sc, axis=-1, keepdims=True)
        ex = jnp.exp(sc - m)
        p = ex * pl.reciprocal(jnp.sum(ex, axis=-1, keepdims=True), approx=True)

        ctx = jnp.einsum('hqk,khd->qhd',
                         p.astype(jnp.bfloat16), vb.astype(jnp.bfloat16),
                         preferred_element_type=jnp.float32)    # (S, H, Dh)

        out = jnp.dot(ctx.reshape(s, hd).astype(jnp.bfloat16), wo,
                      preferred_element_type=jnp.float32) + bo  # (S, E)
        o_ref[b] = out

    # TODO(synk): training-mode dropout (attention-weight and output dropout)
    # and the optional additive attention_mask argument are not implemented
    # (eval mode / attention_mask=None path only).


def multihead_attention(x, wqkv, wo, bo):
    """x: (B, S, E) f32. wqkv: (E, 3*H*Dh) bf16 (Q cols pre-scaled by
    head_dim**-0.5). wo: (H*Dh, E) bf16. bo: (1, E) f32."""
    B, S, E = x.shape
    kernel = functools.partial(_mha_kernel, num_heads=NUM_HEADS,
                               head_dim=HEAD_DIM, batch=B)
    full = lambda shp: pl.BlockSpec(shp, lambda i: (0,) * len(shp))
    return pl.pallas_call(
        kernel,
        out_shape=jax.ShapeDtypeStruct((B, S, E), jnp.float32),
        grid=(1,),
        in_specs=[full(x.shape), full(wqkv.shape), full(wo.shape),
                  full(bo.shape)],
        out_specs=full((B, S, E)),
        compiler_params=pltpu.CompilerParams(
            dimension_semantics=("arbitrary",)),
    )(x, wqkv, wo, bo)


# ----------------------------- parameters ----------------------------------
def init_params(key):
    scale = 0.02
    ks = jax.random.split(key, 5)
    nrm = lambda k, s: (scale * jax.random.normal(k, s)).astype(jnp.float32)
    return {
        # packed per-head weights: head h = columns [h*Dh:(h+1)*Dh]
        # (matches torch.cat(head_outputs, dim=-1) ordering); stored as
        # torch weight.T ([in, out]).
        "wq": nrm(ks[0], (EMBED, NUM_HEADS * HEAD_DIM)),
        "wk": nrm(ks[1], (EMBED, NUM_HEADS * HEAD_DIM)),
        "wv": nrm(ks[2], (EMBED, NUM_HEADS * HEAD_DIM)),
        "wo": nrm(ks[3], (NUM_HEADS * HEAD_DIM, EMBED)),
        "bo": nrm(ks[4], (EMBED,)),
    }


def pack_params(p):
    # Fold softmax scale into Q columns; fuse QKV; bf16 MXU operands.
    sm_scale = HEAD_DIM ** -0.5
    wqkv = jnp.concatenate([p["wq"] * sm_scale, p["wk"], p["wv"]],
                           axis=1).astype(jnp.bfloat16)
    wo = p["wo"].astype(jnp.bfloat16)
    bo = p["bo"].reshape(1, EMBED).astype(jnp.float32)
    return wqkv, wo, bo


# ----------------------------- pure-JAX reference (f32) --------------------
def _ref_multihead(x, p):
    B, S, _ = x.shape
    q = (x @ p["wq"]).reshape(B, S, NUM_HEADS, HEAD_DIM)
    k = (x @ p["wk"]).reshape(B, S, NUM_HEADS, HEAD_DIM)
    v = (x @ p["wv"]).reshape(B, S, NUM_HEADS, HEAD_DIM)
    s = jnp.einsum('bqhd,bkhd->bhqk', q, k) * HEAD_DIM ** -0.5
    causal = jnp.tril(jnp.ones((S, S), bool))
    s = jnp.where(causal[None, None], s, -jnp.inf)
    w = jax.nn.softmax(s, axis=-1)
    ctx = jnp.einsum('bhqk,bkhd->bqhd', w, v).reshape(B, S, NUM_HEADS * HEAD_DIM)
    return ctx @ p["wo"] + p["bo"]


# ----------------------------- main -----------------------------------------
if __name__ == "__main__":
    key = jax.random.PRNGKey(0)
    pkey, xkey = jax.random.split(key)
    params = init_params(pkey)
    x = jax.random.normal(xkey, (BATCH, SEQ, EMBED), dtype=jnp.float32)

    wqkv, wo, bo = pack_params(params)

    out = multihead_attention(x, wqkv, wo, bo)
    out = jax.block_until_ready(out)
    assert out.shape == (BATCH, SEQ, EMBED), out.shape

    # bf16 matmul operands + approx reciprocal => loosened tolerance vs f32 ref.
    ref = _ref_multihead(x, params)
    max_err = float(jnp.max(jnp.abs(out - ref)))
    assert jnp.allclose(out, ref, atol=5e-3, rtol=5e-2), max_err

    print("KERNEL_OK")
</pallas_src>

<mosaic_0001>
module attributes {stable_mosaic.version = 11 : i64} {
  func.func @_mha_kernel(%arg0: i32, %arg1: memref<2x8x32xf32, #tpu.memory_space<vmem>>, %arg2: memref<32x96xbf16, #tpu.memory_space<vmem>>, %arg3: memref<32x32xbf16, #tpu.memory_space<vmem>>, %arg4: memref<1x32xf32, #tpu.memory_space<vmem>>, %arg5: memref<2x8x32xf32, #tpu.memory_space<vmem>>) attributes {dimension_semantics = [#tpu.dimension_semantics<arbitrary>], iteration_bounds = array<i64: 1>, scalar_prefetch = 0 : i64, scratch_operands = 0 : i64, tpu.core_type = #tpu.core_type<tc>, window_params = [{pipeline_mode = #tpu.pipeline_mode<synchronous>, transform_indices = @transform_0, window_bounds = array<i64: 2, 8, 32>}, {pipeline_mode = #tpu.pipeline_mode<synchronous>, transform_indices = @transform_1, window_bounds = array<i64: 32, 96>}, {pipeline_mode = #tpu.pipeline_mode<synchronous>, transform_indices = @transform_2, window_bounds = array<i64: 32, 32>}, {pipeline_mode = #tpu.pipeline_mode<synchronous>, transform_indices = @transform_3, window_bounds = array<i64: 1, 32>}, {pipeline_mode = #tpu.pipeline_mode<synchronous>, transform_indices = @transform_4, window_bounds = array<i64: 2, 8, 32>}]} {
    %c0 = arith.constant 0 : index
    %c0_0 = arith.constant 0 : index
    %c0_1 = arith.constant 0 : index
    %0 = vector.load %arg1[%c0, %c0_0, %c0_1] : memref<2x8x32xf32, #tpu.memory_space<vmem>>, vector<2x8x32xf32>
    %1 = vector.shape_cast %0 : vector<2x8x32xf32> to vector<16x32xf32>
    %2 = arith.truncf %1 : vector<16x32xf32> to vector<16x32xbf16>
    %c0_2 = arith.constant 0 : index
    %c0_3 = arith.constant 0 : index
    %3 = vector.load %arg2[%c0_2, %c0_3] : memref<32x96xbf16, #tpu.memory_space<vmem>>, vector<32x96xbf16>
    %cst = arith.constant dense<0.000000e+00> : vector<16x96xf32>
    %4 = tpu.matmul %2, %3, %cst {dimension_numbers = #tpu.dot_dimension_numbers<[1], [0], [0], [1], [0, 0, 1, 1], [], []>} : vector<16x32xbf16>, vector<32x96xbf16>, vector<16x96xf32> -> vector<16x96xf32>
    %5 = vector.extract_strided_slice %4 {offsets = [0, 0], sizes = [16, 32], strides = [1, 1]} : vector<16x96xf32> to vector<16x32xf32>
    %6 = vector.extract_strided_slice %4 {offsets = [0, 32], sizes = [16, 32], strides = [1, 1]} : vector<16x96xf32> to vector<16x32xf32>
    %7 = vector.extract_strided_slice %4 {offsets = [0, 64], sizes = [16, 32], strides = [1, 1]} : vector<16x96xf32> to vector<16x32xf32>
    %8 = tpu.iota {dimensions = array<i32: 0>} : vector<8x8xi32>
    %9 = tpu.iota {dimensions = array<i32: 1>} : vector<8x8xi32>
    %10 = arith.cmpi sge, %8, %9 : vector<8x8xi32>
    %11 = vector.shape_cast %10 : vector<8x8xi1> to vector<1x8x8xi1>
    %c0_4 = arith.constant 0 : index
    %c0_5 = arith.constant 0 : index
    %12 = vector.load %arg3[%c0_4, %c0_5] : memref<32x32xbf16, #tpu.memory_space<vmem>>, vector<32x32xbf16>
    %c0_6 = arith.constant 0 : index
    %c0_7 = arith.constant 0 : index
    %13 = vector.load %arg4[%c0_6, %c0_7] : memref<1x32xf32, #tpu.memory_space<vmem>>, vector<1x32xf32>
    %14 = vector.extract_strided_slice %5 {offsets = [0, 0], sizes = [8, 32], strides = [1, 1]} : vector<16x32xf32> to vector<8x32xf32>
    %15 = vector.shape_cast %14 : vector<8x32xf32> to vector<8x4x8xf32>
    %16 = vector.extract_strided_slice %6 {offsets = [0, 0], sizes = [8, 32], strides = [1, 1]} : vector<16x32xf32> to vector<8x32xf32>
    %17 = vector.shape_cast %16 : vector<8x32xf32> to vector<8x4x8xf32>
    %18 = vector.extract_strided_slice %7 {offsets = [0, 0], sizes = [8, 32], strides = [1, 1]} : vector<16x32xf32> to vector<8x32xf32>
    %19 = vector.shape_cast %18 : vector<8x32xf32> to vector<8x4x8xf32>
    %20 = arith.truncf %15 : vector<8x4x8xf32> to vector<8x4x8xbf16>
    %21 = arith.truncf %17 : vector<8x4x8xf32> to vector<8x4x8xbf16>
    "tpu.trace_start"() <{level = 10 : i32, message = "qhd,khd->hqk"}> : () -> ()
    %cst_8 = arith.constant dense<0.000000e+00> : vector<4x8x8xf32>
    %22 = tpu.matmul %20, %21, %cst_8 {dimension_numbers = #tpu.dot_dimension_numbers<[2], [2], [0], [0], [0, 1, 0, 0, 1, 0], [1], [1]>} : vector<8x4x8xbf16>, vector<8x4x8xbf16>, vector<4x8x8xf32> -> vector<4x8x8xf32>
    %cst_9 = arith.constant -1.000000e+30 : f32
    "tpu.trace_stop"() : () -> ()
    %23 = vector.shape_cast %11 : vector<1x8x8xi1> to vector<1x8x8xi1>
    %24 = vector.broadcast %23 : vector<1x8x8xi1> to vector<4x8x8xi1>
    %25 = vector.broadcast %cst_9 : f32 to vector<4x8x8xf32>
    %26 = arith.select %24, %22, %25 : vector<4x8x8xi1>, vector<4x8x8xf32>
    %cst_10 = arith.constant dense<0xFF800000> : vector<4x8xf32>
    %27 = vector.multi_reduction <maximumf>, %26, %cst_10 [2] : vector<4x8x8xf32> to vector<4x8xf32>
    %28 = vector.shape_cast %27 : vector<4x8xf32> to vector<4x8x1xf32>
    %29 = vector.broadcast %28 : vector<4x8x1xf32> to vector<4x8x8xf32>
    %30 = arith.subf %26, %29 : vector<4x8x8xf32>
    %31 = math.exp %30 : vector<4x8x8xf32>
    %cst_11 = arith.constant dense<0.000000e+00> : vector<4x8xf32>
    %32 = vector.multi_reduction <add>, %31, %cst_11 [2] : vector<4x8x8xf32> to vector<4x8xf32>
    %33 = vector.shape_cast %32 : vector<4x8xf32> to vector<4x8x1xf32>
    %34 = tpu.reciprocal %33 {approx = true} : vector<4x8x1xf32> -> vector<4x8x1xf32>
    %35 = vector.broadcast %34 : vector<4x8x1xf32> to vector<4x8x8xf32>
    %36 = arith.mulf %31, %35 : vector<4x8x8xf32>
    %37 = arith.truncf %36 : vector<4x8x8xf32> to vector<4x8x8xbf16>
    %38 = arith.truncf %19 : vector<8x4x8xf32> to vector<8x4x8xbf16>
    "tpu.trace_start"() <{level = 10 : i32, message = "hqk,khd->qhd"}> : () -> ()
    %cst_12 = arith.constant dense<0.000000e+00> : vector<4x8x8xf32>
    %39 = tpu.matmul %38, %37, %cst_12 {dimension_numbers = #tpu.dot_dimension_numbers<[0], [2], [2], [1], [0, 1, 0, 2, 1, 1], [1], [0]>} : vector<8x4x8xbf16>, vector<4x8x8xbf16>, vector<4x8x8xf32> -> vector<4x8x8xf32>
    %40 = tpu.transpose %39, [2, 0, 1] : vector<4x8x8xf32> -> vector<8x4x8xf32>
    "tpu.trace_stop"() : () -> ()
    %41 = vector.shape_cast %40 : vector<8x4x8xf32> to vector<8x32xf32>
    %42 = arith.truncf %41 : vector<8x32xf32> to vector<8x32xbf16>
    %cst_13 = arith.constant dense<0.000000e+00> : vector<8x32xf32>
    %43 = tpu.matmul %42, %12, %cst_13 {dimension_numbers = #tpu.dot_dimension_numbers<[1], [0], [0], [1], [0, 0, 1, 1], [], []>} : vector<8x32xbf16>, vector<32x32xbf16>, vector<8x32xf32> -> vector<8x32xf32>
    %44 = vector.broadcast %13 : vector<1x32xf32> to vector<8x32xf32>
    %45 = arith.addf %43, %44 : vector<8x32xf32>
    %c0_14 = arith.constant 0 : index
    %c0_15 = arith.constant 0 : index
    %c0_16 = arith.constant 0 : index
    %46 = vector.load %arg5[%c0_14, %c0_15, %c0_16] : memref<2x8x32xf32, #tpu.memory_space<vmem>>, vector<1x8x32xf32>
    %47 = vector.shape_cast %46 : vector<1x8x32xf32> to vector<8x32xf32>
    %48 = vector.shape_cast %45 : vector<8x32xf32> to vector<1x8x32xf32>
    tpu.vector_store %arg5[%c0_14, %c0_15, %c0_16], %48 {strides = array<i32>} : memref<2x8x32xf32, #tpu.memory_space<vmem>>, vector<1x8x32xf32>,
    %49 = vector.extract_strided_slice %5 {offsets = [8, 0], sizes = [8, 32], strides = [1, 1]} : vector<16x32xf32> to vector<8x32xf32>
    %50 = vector.shape_cast %49 : vector<8x32xf32> to vector<8x4x8xf32>
    %51 = vector.extract_strided_slice %6 {offsets = [8, 0], sizes = [8, 32], strides = [1, 1]} : vector<16x32xf32> to vector<8x32xf32>
    %52 = vector.shape_cast %51 : vector<8x32xf32> to vector<8x4x8xf32>
    %53 = vector.extract_strided_slice %7 {offsets = [8, 0], sizes = [8, 32], strides = [1, 1]} : vector<16x32xf32> to vector<8x32xf32>
    %54 = vector.shape_cast %53 : vector<8x32xf32> to vector<8x4x8xf32>
    %55 = arith.truncf %50 : vector<8x4x8xf32> to vector<8x4x8xbf16>
    %56 = arith.truncf %52 : vector<8x4x8xf32> to vector<8x4x8xbf16>
    "tpu.trace_start"() <{level = 10 : i32, message = "qhd,khd->hqk"}> : () -> ()
    %cst_17 = arith.constant dense<0.000000e+00> : vector<4x8x8xf32>
    %57 = tpu.matmul %55, %56, %cst_17 {dimension_numbers = #tpu.dot_dimension_numbers<[2], [2], [0], [0], [0, 1, 0, 0, 1, 0], [1], [1]>} : vector<8x4x8xbf16>, vector<8x4x8xbf16>, vector<4x8x8xf32> -> vector<4x8x8xf32>
    %cst_18 = arith.constant -1.000000e+30 : f32
    "tpu.trace_stop"() : () -> ()
    %58 = vector.shape_cast %11 : vector<1x8x8xi1> to vector<1x8x8xi1>
    %59 = vector.broadcast %58 : vector<1x8x8xi1> to vector<4x8x8xi1>
    %60 = vector.broadcast %cst_18 : f32 to vector<4x8x8xf32>
    %61 = arith.select %59, %57, %60 : vector<4x8x8xi1>, vector<4x8x8xf32>
    %cst_19 = arith.constant dense<0xFF800000> : vector<4x8xf32>
    %62 = vector.multi_reduction <maximumf>, %61, %cst_19 [2] : vector<4x8x8xf32> to vector<4x8xf32>
    %63 = vector.shape_cast %62 : vector<4x8xf32> to vector<4x8x1xf32>
    %64 = vector.broadcast %63 : vector<4x8x1xf32> to vector<4x8x8xf32>
    %65 = arith.subf %61, %64 : vector<4x8x8xf32>
    %66 = math.exp %65 : vector<4x8x8xf32>
    %cst_20 = arith.constant dense<0.000000e+00> : vector<4x8xf32>
    %67 = vector.multi_reduction <add>, %66, %cst_20 [2] : vector<4x8x8xf32> to vector<4x8xf32>
    %68 = vector.shape_cast %67 : vector<4x8xf32> to vector<4x8x1xf32>
    %69 = tpu.reciprocal %68 {approx = true} : vector<4x8x1xf32> -> vector<4x8x1xf32>
    %70 = vector.broadcast %69 : vector<4x8x1xf32> to vector<4x8x8xf32>
    %71 = arith.mulf %66, %70 : vector<4x8x8xf32>
    %72 = arith.truncf %71 : vector<4x8x8xf32> to vector<4x8x8xbf16>
    %73 = arith.truncf %54 : vector<8x4x8xf32> to vector<8x4x8xbf16>
    "tpu.trace_start"() <{level = 10 : i32, message = "hqk,khd->qhd"}> : () -> ()
    %cst_21 = arith.constant dense<0.000000e+00> : vector<4x8x8xf32>
    %74 = tpu.matmul %73, %72, %cst_21 {dimension_numbers = #tpu.dot_dimension_numbers<[0], [2], [2], [1], [0, 1, 0, 2, 1, 1], [1], [0]>} : vector<8x4x8xbf16>, vector<4x8x8xbf16>, vector<4x8x8xf32> -> vector<4x8x8xf32>
    %75 = tpu.transpose %74, [2, 0, 1] : vector<4x8x8xf32> -> vector<8x4x8xf32>
    "tpu.trace_stop"() : () -> ()
    %76 = vector.shape_cast %75 : vector<8x4x8xf32> to vector<8x32xf32>
    %77 = arith.truncf %76 : vector<8x32xf32> to vector<8x32xbf16>
    %cst_22 = arith.constant dense<0.000000e+00> : vector<8x32xf32>
    %78 = tpu.matmul %77, %12, %cst_22 {dimension_numbers = #tpu.dot_dimension_numbers<[1], [0], [0], [1], [0, 0, 1, 1], [], []>} : vector<8x32xbf16>, vector<32x32xbf16>, vector<8x32xf32> -> vector<8x32xf32>
    %79 = vector.broadcast %13 : vector<1x32xf32> to vector<8x32xf32>
    %80 = arith.addf %78, %79 : vector<8x32xf32>
    %c1 = arith.constant 1 : index
    %c0_23 = arith.constant 0 : index
    %c0_24 = arith.constant 0 : index
    %81 = vector.load %arg5[%c1, %c0_23, %c0_24] : memref<2x8x32xf32, #tpu.memory_space<vmem>>, vector<1x8x32xf32>
    %82 = vector.shape_cast %81 : vector<1x8x32xf32> to vector<8x32xf32>
    %83 = vector.shape_cast %80 : vector<8x32xf32> to vector<1x8x32xf32>
    tpu.vector_store %arg5[%c1, %c0_23, %c0_24], %83 {strides = array<i32>} : memref<2x8x32xf32, #tpu.memory_space<vmem>>, vector<1x8x32xf32>,
    return
  }
  func.func @transform_0(%arg0: i32) -> (i32, i32, i32) {
    %c0_i32 = arith.constant 0 : i32
    %c0_i32_0 = arith.constant 0 : i32
    %c0_i32_1 = arith.constant 0 : i32
    %c0_i32_2 = arith.constant 0 : i32
    return %c0_i32, %c0_i32_0, %c0_i32_1 : i32, i32, i32
  }
  func.func @transform_1(%arg0: i32) -> (i32, i32) {
    %c0_i32 = arith.constant 0 : i32
    %c0_i32_0 = arith.constant 0 : i32
    %c0_i32_1 = arith.constant 0 : i32
    return %c0_i32, %c0_i32_0 : i32, i32
  }
  func.func @transform_2(%arg0: i32) -> (i32, i32) {
    %c0_i32 = arith.constant 0 : i32
    %c0_i32_0 = arith.constant 0 : i32
    %c0_i32_1 = arith.constant 0 : i32
    return %c0_i32, %c0_i32_0 : i32, i32
  }
  func.func @transform_3(%arg0: i32) -> (i32, i32) {
    %c0_i32 = arith.constant 0 : i32
    %c0_i32_0 = arith.constant 0 : i32
    %c0_i32_1 = arith.constant 0 : i32
    return %c0_i32, %c0_i32_0 : i32, i32
  }
  func.func @transform_4(%arg0: i32) -> (i32, i32, i32) {
    %c0_i32 = arith.constant 0 : i32
    %c0_i32_0 = arith.constant 0 : i32
    %c0_i32_1 = arith.constant 0 : i32
    %c0_i32_2 = arith.constant 0 : i32
    return %c0_i32, %c0_i32_0, %c0_i32_1 : i32, i32, i32
  }
}

</mosaic_0001>

<llo_original>
// kernel: tpu_custom_call.1
$region0: #{tpu_custom_call.1}
  #allocation0 [shape = 'u32[]', space=smem, size = 0x4, offset = 0x4, fixed_abs, tag = 'smem constant byte address 0x4 - core index']
  #allocation1 [shape = 'u32[144,128]{1,0:T(1,128)}', space=vmem, size = 0x12000, scoped, tag = 'internal scratch']
  %s0 = inlined_call_operand.hbm [shape: f32[2,8,32], index: 0, kind: input, shape index: {}]
  %s1 = inlined_call_operand.hbm [shape: bf16[32,96], index: 1, kind: input, shape index: {}]
  %s2 = inlined_call_operand.hbm [shape: bf16[32,32], index: 2, kind: input, shape index: {}]
  %s3 = inlined_call_operand.vmem [shape: f32[1,32], index: 3, kind: input, shape index: {}]
  %s4 = inlined_call_operand.hbm [shape: f32[2,8,32], index: 4, kind: output, shape index: {}]
  %s5 = sld [smem:[#allocation0]]
  $region38: #{tpu_custom_call.1} parent=0
    _
  %s7 = ssub.s32 1, %s5
  %s8 = scalar_select 0, %s7, %s5
  $region1: #{tpu_custom_call.1} parent=0
    #allocation2 [shape = 'u8[8192]{0}', space=vmem, size = 0x2000, scoped, tag = 'input window, operand 0, single buffered']
    #allocation3 [shape = 's32[1]{0}', space=sflag, size = 0x4, scoped, tag = 'scoped memory for tpu_custom_call.1']
    #allocation4 [shape = 's32[1]{0}', space=sflag, size = 0x4, scoped, tag = 'scoped memory for tpu_custom_call.1']
    #allocation5 [shape = 'u8[8192]{0}', space=vmem, size = 0x2000, scoped, tag = 'input window, operand 1, single buffered']
    #allocation6 [shape = 's32[1]{0}', space=sflag, size = 0x4, scoped, tag = 'scoped memory for tpu_custom_call.1']
    #allocation7 [shape = 'u8[8192]{0}', space=vmem, size = 0x2000, scoped, tag = 'input window, operand 2, single buffered']
    #allocation8 [shape = 'u8[8192]{0}', space=vmem, size = 0x2000, scoped, tag = 'output window, operand 0, single buffered']
    %9 = vsyncpa [#allocation3], 0
    %10 = vsyncpa [#allocation6], 0
    %11 = vsyncpa [#allocation4], 0
    // Predicated region
    $region2: #{tpu_custom_call.1} parent=1 // pred_check
      _
    $region3: #{tpu_custom_call.1} parent=1 // pred_check_branch
      %13 = sbr.rel (0) target = $region5
    $region4: #{tpu_custom_call.1} parent=1 // pred_region
      %s15 = ssub.s32 256, 256
      %16 = vsyncadd [#allocation3], %s15
      %s17 = sshll.u32 [#allocation2], 4
      %s18 = int_to_ptr.vmem [resolvable:$true] %s17
      %23 = dma.hbm_to_vmem [thread:$0]  %s0, 256, %s18, [#allocation3], 128, 128, 8
    $region5: #{tpu_custom_call.1} parent=1 // pred_fallthru
      _
    // Predicated region
    $region6: #{tpu_custom_call.1} parent=1 // pred_check
      _
    $region7: #{tpu_custom_call.1} parent=1 // pred_check_branch
      %25 = sbr.rel (0) target = $region9
    $region8: #{tpu_custom_call.1} parent=1 // pred_region
      %s27 = ssub.s32 256, 256
      %28 = vsyncadd [#allocation6], %s27
      %s29 = sshll.u32 [#allocation5], 4
      %s30 = int_to_ptr.vmem [resolvable:$true] %s29
      %35 = dma.hbm_to_vmem [thread:$0]  %s1, 256, %s30, [#allocation6], 64, 64, 4
    $region9: #{tpu_custom_call.1} parent=1 // pred_fallthru
      _
    // Predicated region
    $region10: #{tpu_custom_call.1} parent=1 // pred_check
      _
    $region11: #{tpu_custom_call.1} parent=1 // pred_check_branch
      %37 = sbr.rel (0) target = $region13
    $region12: #{tpu_custom_call.1} parent=1 // pred_region
      %s39 = ssub.s32 256, 256
      %40 = vsyncadd [#allocation6], %s39
      %s41 = sshll.u32 [#allocation7], 4
      %s42 = int_to_ptr.vmem [resolvable:$true] %s41
      %47 = dma.hbm_to_vmem [thread:$0]  %s2, 256, %s42, [#allocation6], 64, 64, 4
    $region13: #{tpu_custom_call.1} parent=1 // pred_fallthru
      _
    // Predicated region
    $region14: #{tpu_custom_call.1} parent=1 // pred_check
      _
    $region15: #{tpu_custom_call.1} parent=1 // pred_check_branch
      %49 = sbr.rel (0) target = $region17
    $region16: #{tpu_custom_call.1} parent=1 // pred_region
      _
    $region17: #{tpu_custom_call.1} parent=1 // pred_fallthru
      _
    // Predicated region
    $region18: #{tpu_custom_call.1} parent=1 // pred_check
      _
    $region19: #{tpu_custom_call.1} parent=1 // pred_check_branch
      %51 = sbr.rel (0) target = $region21
    $region20: #{tpu_custom_call.1} parent=1 // pred_region
      %52 = dma.done [#allocation3], 256
    $region21: #{tpu_custom_call.1} parent=1 // pred_fallthru
      _
    // Predicated region
    $region22: #{tpu_custom_call.1} parent=1 // pred_check
      _
    $region23: #{tpu_custom_call.1} parent=1 // pred_check_branch
      %54 = sbr.rel (0) target = $region25
    $region24: #{tpu_custom_call.1} parent=1 // pred_region
      %55 = dma.done [#allocation6], 256
    $region25: #{tpu_custom_call.1} parent=1 // pred_fallthru
      _
    // Predicated region
    $region26: #{tpu_custom_call.1} parent=1 // pred_check
      _
    $region27: #{tpu_custom_call.1} parent=1 // pred_check_branch
      %57 = sbr.rel (0) target = $region29
    $region28: #{tpu_custom_call.1} parent=1 // pred_region
      %58 = dma.done [#allocation6], 256
    $region29: #{tpu_custom_call.1} parent=1 // pred_fallthru
      _
    %v60 = vld [vmem:[#allocation2] sm:$0xff]
    %v61 = vld [vmem:[#allocation2 + $0x8] sm:$0xff]
    %v62 = vpack.c.bf16 %v61, %v60
    %v63 = vld [vmem:[#allocation5] sm:$0xf]
    %v64 = vld [vmem:[#allocation5 + $0x4] sm:$0xf]
    %v65 = vld [vmem:[#allocation5 + $0x8] sm:$0xf]
    %v66 = vld [vmem:[#allocation5 + $0xc] sm:$0xf]
    %v71 = vunpack.c.l.b16 %v63
    %v72 = vunpack.c.l.b16 %v64
    %v73 = vunpack.c.l.b16 %v65
    %v74 = vunpack.c.l.b16 %v66
    %v75 = vpack.c.b16 %v72, %v71
    %v76 = vpack.c.b16 %v74, %v73
    %vm79 = vcmask 261120
    %v81 = vsel %vm79, %v62, 0
    %83 = vmatprep.subr.bf16.mxu0 0
    %84 = vmatpush1.bf16.msra.mxu0 0
    %85 = vmatprep.subr.bf16.mxu0 0
    %86 = vmatpush1.bf16.msra.mxu0 0
    %87 = vmatprep.subr.bf16.mxu0 0
    %88 = vmatpush1.bf16.msra.mxu0 0
    %89 = vmatprep.subr.bf16.mxu0 0
    %90 = vmatpush1.bf16.msra.mxu0 0
    %91 = vmatprep.subr.bf16.mxu0 0
    %92 = vmatpush1.bf16.msra.mxu0 0
    %93 = vmatprep.subr.bf16.mxu0 0
    %94 = vmatpush1.bf16.msra.mxu0 0
    %95 = vmatprep.subr.bf16.mxu0 0
    %96 = vmatpush1.bf16.msra.mxu0 %v76
    %97 = vmatprep.subr.bf16.mxu0 0
    %98 = vmatpush1.bf16.msra.mxu0 %v75
    %99 = vmatprep.subr.bf16.mxu0 0
    %100 = vmatpush2.bf16.msra.mxu0 0
    %101 = vmatprep.subr.bf16.mxu0 0
    %102 = vmatpush2.bf16.msra.mxu0 0
    %103 = vmatprep.subr.bf16.mxu0 0
    %104 = vmatpush2.bf16.msra.mxu0 0
    %105 = vmatprep.subr.bf16.mxu0 0
    %106 = vmatpush2.bf16.msra.mxu0 0
    %107 = vmatprep.subr.bf16.mxu0 0
    %108 = vmatpush2.bf16.msra.mxu0 0
    %109 = vmatprep.subr.bf16.mxu0 0
    %110 = vmatpush2.bf16.msra.mxu0 0
    %111 = vmatprep.subr.bf16.mxu0 0
    %112 = vmatpush2.bf16.msra.mxu0 0
    %113 = vmatprep.subr.bf16.mxu0 0
    %114 = vmatpush2.bf16.msra.mxu0 0
    %115 = vmatprep.mubr.bf16.mxu0 0
    %116 = vmatmul.mubr.bf16.gmra.mxu0 %v81
    %v117 = vpop.f32.mrf.mxu0
    %v118 = vadd.f32 0.0, %v117
    %v119 = vpop.f32.mrf.mxu0
    %v120 = vpop.f32.mrf.mxu0
    %v121 = vadd.f32 0.0, %v120
    %v122 = vpop.f32.mrf.mxu0
    %123 = vdwg.mxu0
    %v124 = vlaneseq
    %v125 = vshrl.u32 %v124, 7
    %v126 = vlaneseq
    %v127 = vand.u32 %v126, 127
    %vm128 = vcmp.ge.s32.totalorder %v125, %v127
    %v129 = vld [vmem:[#allocation7] sm:$0xf]
    %v130 = vld [vmem:[#allocation7 + $0x4] sm:$0xf]
    %v131 = vld [vmem:[#allocation7 + $0x8] sm:$0xf]
    %v132 = vld [vmem:[#allocation7 + $0xc] sm:$0xf]
    %v133 = vld [vmem:[%s3] sm:$0x1]
    %135 = vrot.lane.b32.xlu0 %v118, 120
    %v136 = vpop.permute.xlu0 %135
    %138 = vrot.lane.b32.xlu0 %v118, 112
    %v139 = vpop.permute.xlu0 %138
    %141 = vrot.lane.b32.xlu0 %v118, 104
    %v142 = vpop.permute.xlu0 %141
    %v144 = vcombine.low %v118, %v139
    %v145 = vcombine.high %v118, %v139
    %v147 = vunpack.c.l.s4 1983009808
    %v148 = vunpack.c.0.s8 %v147
    %v149 = vlaneseq
    %v150 = vshrl.u32 %v149, 7
    %v151 = vsub.s32 %v148, %v150
    %v152 = vrot.slane %v144, %v151
    %v154 = vunpack.c.l.s4 1983009808
    %v155 = vunpack.c.0.s8 %v154
    %v156 = vlaneseq
    %v157 = vshrl.u32 %v156, 7
    %v158 = vsub.s32 %v155, %v157
    %v159 = vrot.slane %v145, %v158
    %v160 = vcombine.low %v136, %v142
    %v161 = vcombine.high %v136, %v142
    %v163 = vunpack.c.l.s4 1983009808
    %v164 = vunpack.c.0.s8 %v163
    %v165 = vlaneseq
    %v166 = vshrl.u32 %v165, 7
    %v167 = vsub.s32 %v164, %v166
    %v168 = vrot.slane %v160, %v167
    %v170 = vunpack.c.l.s4 1983009808
    %v171 = vunpack.c.0.s8 %v170
    %v172 = vlaneseq
    %v173 = vshrl.u32 %v172, 7
    %v174 = vsub.s32 %v171, %v173
    %v175 = vrot.slane %v161, %v174
    %v176 = vcombine.low %v152, %v168
    %v177 = vcombine.high %v152, %v168
    %v179 = vunpack.c.l.s4 1934713408
    %v180 = vunpack.c.0.s8 %v179
    %v181 = vlaneseq
    %v182 = vshrl.u32 %v181, 7
    %v183 = vsub.s32 %v180, %v182
    %v184 = vrot.slane %v176, %v183
    %v186 = vunpack.c.l.s4 1934713408
    %v187 = vunpack.c.0.s8 %v186
    %v188 = vlaneseq
    %v189 = vshrl.u32 %v188, 7
    %v190 = vsub.s32 %v187, %v189
    %v191 = vrot.slane %v177, %v190
    %v192 = vcombine.low %v159, %v175
    %v193 = vcombine.high %v159, %v175
    %v195 = vunpack.c.l.s4 1934713408
    %v196 = vunpack.c.0.s8 %v195
    %v197 = vlaneseq
    %v198 = vshrl.u32 %v197, 7
    %v199 = vsub.s32 %v196, %v198
    %v200 = vrot.slane %v192, %v199
    %v202 = vunpack.c.l.s4 1934713408
    %v203 = vunpack.c.0.s8 %v202
    %v204 = vlaneseq
    %v205 = vshrl.u32 %v204, 7
    %v206 = vsub.s32 %v203, %v205
    %v207 = vrot.slane %v193, %v206
    %v208 = vcombine.high %v184, 0.0
    %v209 = vcombine.high %v191, 0.0
    %v210 = vcombine.high %v200, 0.0
    %v211 = vcombine.high %v207, 0.0
    %212 = vrot.lane.b32.xlu0 %v118, 96
    %v213 = vpop.permute.xlu0 %212
    %214 = vrot.lane.b32.xlu0 %v136, 96
    %v215 = vpop.permute.xlu0 %214
    %216 = vrot.lane.b32.xlu0 %v139, 96
    %v217 = vpop.permute.xlu0 %216
    %218 = vrot.lane.b32.xlu0 %v142, 96
    %v219 = vpop.permute.xlu0 %218
    %v224 = vcombine.low %v213, %v217
    %v225 = vcombine.high %v213, %v217
    %v227 = vunpack.c.l.s4 1983009808
    %v228 = vunpack.c.0.s8 %v227
    %v229 = vlaneseq
    %v230 = vshrl.u32 %v229, 7
    %v231 = vsub.s32 %v228, %v230
    %v232 = vrot.slane %v224, %v231
    %v234 = vunpack.c.l.s4 1983009808
    %v235 = vunpack.c.0.s8 %v234
    %v236 = vlaneseq
    %v237 = vshrl.u32 %v236, 7
    %v238 = vsub.s32 %v235, %v237
    %v239 = vrot.slane %v225, %v238
    %v240 = vcombine.low %v215, %v219
    %v241 = vcombine.high %v215, %v219
    %v243 = vunpack.c.l.s4 1983009808
    %v244 = vunpack.c.0.s8 %v243
    %v245 = vlaneseq
    %v246 = vshrl.u32 %v245, 7
    %v247 = vsub.s32 %v244, %v246
    %v248 = vrot.slane %v240, %v247
    %v250 = vunpack.c.l.s4 1983009808
    %v251 = vunpack.c.0.s8 %v250
    %v252 = vlaneseq
    %v253 = vshrl.u32 %v252, 7
    %v254 = vsub.s32 %v251, %v253
    %v255 = vrot.slane %v241, %v254
    %v256 = vcombine.low %v232, %v248
    %v257 = vcombine.high %v232, %v248
    %v259 = vunpack.c.l.s4 1934713408
    %v260 = vunpack.c.0.s8 %v259
    %v261 = vlaneseq
    %v262 = vshrl.u32 %v261, 7
    %v263 = vsub.s32 %v260, %v262
    %v264 = vrot.slane %v256, %v263
    %v266 = vunpack.c.l.s4 1934713408
    %v267 = vunpack.c.0.s8 %v266
    %v268 = vlaneseq
    %v269 = vshrl.u32 %v268, 7
    %v270 = vsub.s32 %v267, %v269
    %v271 = vrot.slane %v257, %v270
    %v272 = vcombine.low %v239, %v255
    %v273 = vcombine.high %v239, %v255
    %v275 = vunpack.c.l.s4 1934713408
    %v276 = vunpack.c.0.s8 %v275
    %v277 = vlaneseq
    %v278 = vshrl.u32 %v277, 7
    %v279 = vsub.s32 %v276, %v278
    %v280 = vrot.slane %v272, %v279
    %v282 = vunpack.c.l.s4 1934713408
    %v283 = vunpack.c.0.s8 %v282
    %v284 = vlaneseq
    %v285 = vshrl.u32 %v284, 7
    %v286 = vsub.s32 %v283, %v285
    %v287 = vrot.slane %v273, %v286
    %v288 = vcombine.high %v264, 0.0
    %v289 = vcombine.high %v271, 0.0
    %v290 = vcombine.high %v280, 0.0
    %v291 = vcombine.high %v287, 0.0
    %292 = vrot.lane.b32.xlu0 %v118, 64
    %v293 = vpop.permute.xlu0 %292
    %294 = vrot.lane.b32.xlu0 %v136, 64
    %v295 = vpop.permute.xlu0 %294
    %296 = vrot.lane.b32.xlu0 %v139, 64
    %v297 = vpop.permute.xlu0 %296
    %298 = vrot.lane.b32.xlu0 %v142, 64
    %v299 = vpop.permute.xlu0 %298
    %v304 = vcombine.low %v293, %v297
    %v305 = vcombine.high %v293, %v297
    %v307 = vunpack.c.l.s4 1983009808
    %v308 = vunpack.c.0.s8 %v307
    %v309 = vlaneseq
    %v310 = vshrl.u32 %v309, 7
    %v311 = vsub.s32 %v308, %v310
    %v312 = vrot.slane %v304, %v311
    %v314 = vunpack.c.l.s4 1983009808
    %v315 = vunpack.c.0.s8 %v314
    %v316 = vlaneseq
    %v317 = vshrl.u32 %v316, 7
    %v318 = vsub.s32 %v315, %v317
    %v319 = vrot.slane %v305, %v318
    %v320 = vcombine.low %v295, %v299
    %v321 = vcombine.high %v295, %v299
    %v323 = vunpack.c.l.s4 1983009808
    %v324 = vunpack.c.0.s8 %v323
    %v325 = vlaneseq
    %v326 = vshrl.u32 %v325, 7
    %v327 = vsub.s32 %v324, %v326
    %v328 = vrot.slane %v320, %v327
    %v330 = vunpack.c.l.s4 1983009808
    %v331 = vunpack.c.0.s8 %v330
    %v332 = vlaneseq
    %v333 = vshrl.u32 %v332, 7
    %v334 = vsub.s32 %v331, %v333
    %v335 = vrot.slane %v321, %v334
    %v336 = vcombine.low %v312, %v328
    %v337 = vcombine.high %v312, %v328
    %v339 = vunpack.c.l.s4 1934713408
    %v340 = vunpack.c.0.s8 %v339
    %v341 = vlaneseq
    %v342 = vshrl.u32 %v341, 7
    %v343 = vsub.s32 %v340, %v342
    %v344 = vrot.slane %v336, %v343
    %v346 = vunpack.c.l.s4 1934713408
    %v347 = vunpack.c.0.s8 %v346
    %v348 = vlaneseq
    %v349 = vshrl.u32 %v348, 7
    %v350 = vsub.s32 %v347, %v349
    %v351 = vrot.slane %v337, %v350
    %v352 = vcombine.low %v319, %v335
    %v353 = vcombine.high %v319, %v335
    %v355 = vunpack.c.l.s4 1934713408
    %v356 = vunpack.c.0.s8 %v355
    %v357 = vlaneseq
    %v358 = vshrl.u32 %v357, 7
    %v359 = vsub.s32 %v356, %v358
    %v360 = vrot.slane %v352, %v359
    %v362 = vunpack.c.l.s4 1934713408
    %v363 = vunpack.c.0.s8 %v362
    %v364 = vlaneseq
    %v365 = vshrl.u32 %v364, 7
    %v366 = vsub.s32 %v363, %v365
    %v367 = vrot.slane %v353, %v366
    %v368 = vcombine.high %v344, 0.0
    %v369 = vcombine.high %v351, 0.0
    %v370 = vcombine.high %v360, 0.0
    %v371 = vcombine.high %v367, 0.0
    %v372 = vpack.c.bf16 %v184, %v184
    %v373 = vpack.c.bf16 %v208, %v208
    %v374 = vpack.c.bf16 %v191, %v191
    %v375 = vpack.c.bf16 %v209, %v209
    %v376 = vpack.c.bf16 %v200, %v200
    %v377 = vpack.c.bf16 %v210, %v210
    %v378 = vpack.c.bf16 %v207, %v207
    %v379 = vpack.c.bf16 %v211, %v211
    %v380 = vpack.c.bf16 %v264, %v264
    %v381 = vpack.c.bf16 %v288, %v288
    %v382 = vpack.c.bf16 %v271, %v271
    %v383 = vpack.c.bf16 %v289, %v289
    %v384 = vpack.c.bf16 %v280, %v280
    %v385 = vpack.c.bf16 %v290, %v290
    %v386 = vpack.c.bf16 %v287, %v287
    %v387 = vpack.c.bf16 %v291, %v291
    %v388 = vcombine.low %v372, %v376
    %v390 = vunpack.c.l.s4 1983009808
    %v391 = vunpack.c.0.s8 %v390
    %v392 = vlaneseq
    %v393 = vshrl.u32 %v392, 7
    %v394 = vsub.s32 %v391, %v393
    %v395 = vrot.slane %v388, %v394
    %v396 = vcombine.low %v374, %v378
    %v398 = vunpack.c.l.s4 1983009808
    %v399 = vunpack.c.0.s8 %v398
    %v400 = vlaneseq
    %v401 = vshrl.u32 %v400, 7
    %v402 = vsub.s32 %v399, %v401
    %v403 = vrot.slane %v396, %v402
    %v404 = vcombine.low %v395, %v403
    %v406 = vunpack.c.l.s4 1934713408
    %v407 = vunpack.c.0.s8 %v406
    %v408 = vlaneseq
    %v409 = vshrl.u32 %v408, 7
    %v410 = vsub.s32 %v407, %v409
    %v411 = vrot.slane %v404, %v410
    %v412 = vcombine.high %v411, 0
    %v413 = vcombine.low %v373, %v377
    %v415 = vunpack.c.l.s4 1983009808
    %v416 = vunpack.c.0.s8 %v415
    %v417 = vlaneseq
    %v418 = vshrl.u32 %v417, 7
    %v419 = vsub.s32 %v416, %v418
    %v420 = vrot.slane %v413, %v419
    %v421 = vcombine.low %v375, %v379
    %v423 = vunpack.c.l.s4 1983009808
    %v424 = vunpack.c.0.s8 %v423
    %v425 = vlaneseq
    %v426 = vshrl.u32 %v425, 7
    %v427 = vsub.s32 %v424, %v426
    %v428 = vrot.slane %v421, %v427
    %v429 = vcombine.low %v420, %v428
    %v431 = vunpack.c.l.s4 1934713408
    %v432 = vunpack.c.0.s8 %v431
    %v433 = vlaneseq
    %v434 = vshrl.u32 %v433, 7
    %v435 = vsub.s32 %v432, %v434
    %v436 = vrot.slane %v429, %v435
    %v437 = vcombine.high %v436, 0
    %v440 = vpack.i.b16 %v436, %v411
    %v441 = vshrl.u32 %v411, 16
    %v442 = vshrl.u32 %v436, 16
    %v443 = vpack.i.b16 %v442, %v441
    %v446 = vpack.i.b16 %v437, %v412
    %v447 = vshrl.u32 %v412, 16
    %v448 = vshrl.u32 %v437, 16
    %v449 = vpack.i.b16 %v448, %v447
    %450 = vxpose.xlu0.c.b16.start [1/8] %v380, 128
    %451 = vxpose.xlu0.c.b16.cont [2/8] 0, 128
    %452 = vxpose.xlu0.c.b16.cont [3/8] 0, 128
    %453 = vxpose.xlu0.c.b16.cont [4/8] 0, 128
    %454 = vxpose.xlu0.c.b16.cont [5/8] 0, 128
    %455 = vxpose.xlu0.c.b16.cont [6/8] 0, 128
    %456 = vxpose.xlu0.c.b16.cont [7/8] 0, 128
    %457 = vxpose.xlu0.c.b16.end [8/8] 0, 128
    %v458 = vpop.trf.xlu0
    %v459 = vpop.trf.xlu0
    %v460 = vpop.trf.xlu0
    %v461 = vpop.trf.xlu0
    %v462 = vpop.trf.xlu0
    %v463 = vpop.trf.xlu0
    %v464 = vpop.trf.xlu0
    %v465 = vpop.trf.xlu0
    %466 = vxpose.xlu0.c.b16.start [1/8] %v381, 128
    %467 = vxpose.xlu0.c.b16.cont [2/8] 0, 128
    %468 = vxpose.xlu0.c.b16.cont [3/8] 0, 128
    %469 = vxpose.xlu0.c.b16.cont [4/8] 0, 128
    %470 = vxpose.xlu0.c.b16.cont [5/8] 0, 128
    %471 = vxpose.xlu0.c.b16.cont [6/8] 0, 128
    %472 = vxpose.xlu0.c.b16.cont [7/8] 0, 128
    %473 = vxpose.xlu0.c.b16.end [8/8] 0, 128
    %v474 = vpop.trf.xlu0
    %v475 = vpop.trf.xlu0
    %v476 = vpop.trf.xlu0
    %v477 = vpop.trf.xlu0
    %v478 = vpop.trf.xlu0
    %v479 = vpop.trf.xlu0
    %v480 = vpop.trf.xlu0
    %v481 = vpop.trf.xlu0
    %482 = vxpose.xlu0.c.b16.start [1/8] %v382, 128
    %483 = vxpose.xlu0.c.b16.cont [2/8] 0, 128
    %484 = vxpose.xlu0.c.b16.cont [3/8] 0, 128
    %485 = vxpose.xlu0.c.b16.cont [4/8] 0, 128
    %486 = vxpose.xlu0.c.b16.cont [5/8] 0, 128
    %487 = vxpose.xlu0.c.b16.cont [6/8] 0, 128
    %488 = vxpose.xlu0.c.b16.cont [7/8] 0, 128
    %489 = vxpose.xlu0.c.b16.end [8/8] 0, 128
    %v490 = vpop.trf.xlu0
    %v491 = vpop.trf.xlu0
    %v492 = vpop.trf.xlu0
    %v493 = vpop.trf.xlu0
    %v494 = vpop.trf.xlu0
    %v495 = vpop.trf.xlu0
    %v496 = vpop.trf.xlu0
    %v497 = vpop.trf.xlu0
    %498 = vxpose.xlu0.c.b16.start [1/8] %v383, 128
    %499 = vxpose.xlu0.c.b16.cont [2/8] 0, 128
    %500 = vxpose.xlu0.c.b16.cont [3/8] 0, 128
    %501 = vxpose.xlu0.c.b16.cont [4/8] 0, 128
    %502 = vxpose.xlu0.c.b16.cont [5/8] 0, 128
    %503 = vxpose.xlu0.c.b16.cont [6/8] 0, 128
    %504 = vxpose.xlu0.c.b16.cont [7/8] 0, 128
    %505 = vxpose.xlu0.c.b16.end [8/8] 0, 128
    %v506 = vpop.trf.xlu0
    %v507 = vpop.trf.xlu0
    %v508 = vpop.trf.xlu0
    %v509 = vpop.trf.xlu0
    %v510 = vpop.trf.xlu0
    %v511 = vpop.trf.xlu0
    %v512 = vpop.trf.xlu0
    %v513 = vpop.trf.xlu0
    %514 = vxpose.xlu0.c.b16.start [1/8] %v384, 128
    %515 = vxpose.xlu0.c.b16.cont [2/8] 0, 128
    %516 = vxpose.xlu0.c.b16.cont [3/8] 0, 128
    %517 = vxpose.xlu0.c.b16.cont [4/8] 0, 128
    %518 = vxpose.xlu0.c.b16.cont [5/8] 0, 128
    %519 = vxpose.xlu0.c.b16.cont [6/8] 0, 128
    %520 = vxpose.xlu0.c.b16.cont [7/8] 0, 128
    %521 = vxpose.xlu0.c.b16.end [8/8] 0, 128
    %v522 = vpop.trf.xlu0
    %v523 = vpop.trf.xlu0
    %v524 = vpop.trf.xlu0
    %v525 = vpop.trf.xlu0
    %v526 = vpop.trf.xlu0
    %v527 = vpop.trf.xlu0
    %v528 = vpop.trf.xlu0
    %v529 = vpop.trf.xlu0
    %530 = vxpose.xlu0.c.b16.start [1/8] %v385, 128
    %531 = vxpose.xlu0.c.b16.cont [2/8] 0, 128
    %532 = vxpose.xlu0.c.b16.cont [3/8] 0, 128
    %533 = vxpose.xlu0.c.b16.cont [4/8] 0, 128
    %534 = vxpose.xlu0.c.b16.cont [5/8] 0, 128
    %535 = vxpose.xlu0.c.b16.cont [6/8] 0, 128
    %536 = vxpose.xlu0.c.b16.cont [7/8] 0, 128
    %537 = vxpose.xlu0.c.b16.end [8/8] 0, 128
    %v538 = vpop.trf.xlu0
    %v539 = vpop.trf.xlu0
    %v540 = vpop.trf.xlu0
    %v541 = vpop.trf.xlu0
    %v542 = vpop.trf.xlu0
    %v543 = vpop.trf.xlu0
    %v544 = vpop.trf.xlu0
    %v545 = vpop.trf.xlu0
    %546 = vxpose.xlu0.c.b16.start [1/8] %v386, 128
    %547 = vxpose.xlu0.c.b16.cont [2/8] 0, 128
    %548 = vxpose.xlu0.c.b16.cont [3/8] 0, 128
    %549 = vxpose.xlu0.c.b16.cont [4/8] 0, 128
    %550 = vxpose.xlu0.c.b16.cont [5/8] 0, 128
    %551 = vxpose.xlu0.c.b16.cont [6/8] 0, 128
    %552 = vxpose.xlu0.c.b16.cont [7/8] 0, 128
    %553 = vxpose.xlu0.c.b16.end [8/8] 0, 128
    %v554 = vpop.trf.xlu0
    %v555 = vpop.trf.xlu0
    %v556 = vpop.trf.xlu0
    %v557 = vpop.trf.xlu0
    %v558 = vpop.trf.xlu0
    %v559 = vpop.trf.xlu0
    %v560 = vpop.trf.xlu0
    %v561 = vpop.trf.xlu0
    %562 = vxpose.xlu0.c.b16.start [1/8] %v387, 128
    %563 = vxpose.xlu0.c.b16.cont [2/8] 0, 128
    %564 = vxpose.xlu0.c.b16.cont [3/8] 0, 128
    %565 = vxpose.xlu0.c.b16.cont [4/8] 0, 128
    %566 = vxpose.xlu0.c.b16.cont [5/8] 0, 128
    %567 = vxpose.xlu0.c.b16.cont [6/8] 0, 128
    %568 = vxpose.xlu0.c.b16.cont [7/8] 0, 128
    %569 = vxpose.xlu0.c.b16.end [8/8] 0, 128
    %v570 = vpop.trf.xlu0
    %v571 = vpop.trf.xlu0
    %v572 = vpop.trf.xlu0
    %v573 = vpop.trf.xlu0
    %v574 = vpop.trf.xlu0
    %v575 = vpop.trf.xlu0
    %v576 = vpop.trf.xlu0
    %v577 = vpop.trf.xlu0
    %v578 = vcombine.low %v458, %v522
    %v580 = vunpack.c.l.s4 1983009808
    %v581 = vunpack.c.0.s8 %v580
    %v582 = vlaneseq
    %v583 = vshrl.u32 %v582, 7
    %v584 = vsub.s32 %v581, %v583
    %v585 = vrot.slane %v578, %v584
    %v586 = vcombine.low %v490, %v554
    %v588 = vunpack.c.l.s4 1983009808
    %v589 = vunpack.c.0.s8 %v588
    %v590 = vlaneseq
    %v591 = vshrl.u32 %v590, 7
    %v592 = vsub.s32 %v589, %v591
    %v593 = vrot.slane %v586, %v592
    %v594 = vcombine.low %v585, %v593
    %v595 = vcombine.high %v585, %v593
    %v597 = vunpack.c.l.s4 1934713408
    %v598 = vunpack.c.0.s8 %v597
    %v599 = vlaneseq
    %v600 = vshrl.u32 %v599, 7
    %v601 = vsub.s32 %v598, %v600
    %v602 = vrot.slane %v594, %v601
    %v604 = vunpack.c.l.s4 1934713408
    %v605 = vunpack.c.0.s8 %v604
    %v606 = vlaneseq
    %v607 = vshrl.u32 %v606, 7
    %v608 = vsub.s32 %v605, %v607
    %v609 = vrot.slane %v595, %v608
    %v610 = vcombine.high %v602, 0
    %v611 = vcombine.high %v609, 0
    %v612 = vcombine.low %v474, %v538
    %v614 = vunpack.c.l.s4 1983009808
    %v615 = vunpack.c.0.s8 %v614
    %v616 = vlaneseq
    %v617 = vshrl.u32 %v616, 7
    %v618 = vsub.s32 %v615, %v617
    %v619 = vrot.slane %v612, %v618
    %v620 = vcombine.low %v506, %v570
    %v622 = vunpack.c.l.s4 1983009808
    %v623 = vunpack.c.0.s8 %v622
    %v624 = vlaneseq
    %v625 = vshrl.u32 %v624, 7
    %v626 = vsub.s32 %v623, %v625
    %v627 = vrot.slane %v620, %v626
    %v628 = vcombine.low %v619, %v627
    %v629 = vcombine.high %v619, %v627
    %v631 = vunpack.c.l.s4 1934713408
    %v632 = vunpack.c.0.s8 %v631
    %v633 = vlaneseq
    %v634 = vshrl.u32 %v633, 7
    %v635 = vsub.s32 %v632, %v634
    %v636 = vrot.slane %v628, %v635
    %v638 = vunpack.c.l.s4 1934713408
    %v639 = vunpack.c.0.s8 %v638
    %v640 = vlaneseq
    %v641 = vshrl.u32 %v640, 7
    %v642 = vsub.s32 %v639, %v641
    %v643 = vrot.slane %v629, %v642
    %v644 = vcombine.high %v636, 0
    %v645 = vcombine.high %v643, 0
    %v648 = vpack.i.b16 %v636, %v602
    %v650 = vshrl.u32 %v602, 16
    %v651 = vshrl.u32 %v636, 16
    %v652 = vpack.i.b16 %v651, %v650
    %v656 = vpack.i.b16 %v644, %v610
    %v658 = vshrl.u32 %v610, 16
    %v659 = vshrl.u32 %v644, 16
    %v660 = vpack.i.b16 %v659, %v658
    %v664 = vpack.i.b16 %v643, %v609
    %v666 = vshrl.u32 %v609, 16
    %v667 = vshrl.u32 %v643, 16
    %v668 = vpack.i.b16 %v667, %v666
    %v672 = vpack.i.b16 %v645, %v611
    %v674 = vshrl.u32 %v611, 16
    %v675 = vshrl.u32 %v645, 16
    %v676 = vpack.i.b16 %v675, %v674
    %678 = vxpose.xlu0.c.b16.start [1/8] %v648, 128
    %679 = vxpose.xlu0.c.b16.cont [2/8] 0, 128
    %680 = vxpose.xlu0.c.b16.cont [3/8] 0, 128
    %681 = vxpose.xlu0.c.b16.cont [4/8] 0, 128
    %682 = vxpose.xlu0.c.b16.cont [5/8] 0, 128
    %683 = vxpose.xlu0.c.b16.cont [6/8] 0, 128
    %684 = vxpose.xlu0.c.b16.cont [7/8] 0, 128
    %685 = vxpose.xlu0.c.b16.end [8/8] 0, 128
    %v686 = vpop.trf.xlu0
    %v687 = vpop.trf.xlu0
    %v688 = vpop.trf.xlu0
    %v689 = vpop.trf.xlu0
    %v690 = vpop.trf.xlu0
    %v691 = vpop.trf.xlu0
    %v692 = vpop.trf.xlu0
    %v693 = vpop.trf.xlu0
    %694 = vxpose.xlu0.c.b16.start [1/8] %v652, 128
    %695 = vxpose.xlu0.c.b16.cont [2/8] 0, 128
    %696 = vxpose.xlu0.c.b16.cont [3/8] 0, 128
    %697 = vxpose.xlu0.c.b16.cont [4/8] 0, 128
    %698 = vxpose.xlu0.c.b16.cont [5/8] 0, 128
    %699 = vxpose.xlu0.c.b16.cont [6/8] 0, 128
    %700 = vxpose.xlu0.c.b16.cont [7/8] 0, 128
    %701 = vxpose.xlu0.c.b16.end [8/8] 0, 128
    %v702 = vpop.trf.xlu0
    %v703 = vpop.trf.xlu0
    %v704 = vpop.trf.xlu0
    %v705 = vpop.trf.xlu0
    %v706 = vpop.trf.xlu0
    %v707 = vpop.trf.xlu0
    %v708 = vpop.trf.xlu0
    %v709 = vpop.trf.xlu0
    %710 = vxpose.xlu0.c.b16.start [1/8] %v656, 128
    %711 = vxpose.xlu0.c.b16.cont [2/8] 0, 128
    %712 = vxpose.xlu0.c.b16.cont [3/8] 0, 128
    %713 = vxpose.xlu0.c.b16.cont [4/8] 0, 128
    %714 = vxpose.xlu0.c.b16.cont [5/8] 0, 128
    %715 = vxpose.xlu0.c.b16.cont [6/8] 0, 128
    %716 = vxpose.xlu0.c.b16.cont [7/8] 0, 128
    %717 = vxpose.xlu0.c.b16.end [8/8] 0, 128
    %v718 = vpop.trf.xlu0
    %v719 = vpop.trf.xlu0
    %v720 = vpop.trf.xlu0
    %v721 = vpop.trf.xlu0
    %v722 = vpop.trf.xlu0
    %v723 = vpop.trf.xlu0
    %v724 = vpop.trf.xlu0
    %v725 = vpop.trf.xlu0
    %726 = vxpose.xlu0.c.b16.start [1/8] %v660, 128
    %727 = vxpose.xlu0.c.b16.cont [2/8] 0, 128
    %728 = vxpose.xlu0.c.b16.cont [3/8] 0, 128
    %729 = vxpose.xlu0.c.b16.cont [4/8] 0, 128
    %730 = vxpose.xlu0.c.b16.cont [5/8] 0, 128
    %731 = vxpose.xlu0.c.b16.cont [6/8] 0, 128
    %732 = vxpose.xlu0.c.b16.cont [7/8] 0, 128
    %733 = vxpose.xlu0.c.b16.end [8/8] 0, 128
    %v734 = vpop.trf.xlu0
    %v735 = vpop.trf.xlu0
    %v736 = vpop.trf.xlu0
    %v737 = vpop.trf.xlu0
    %v738 = vpop.trf.xlu0
    %v739 = vpop.trf.xlu0
    %v740 = vpop.trf.xlu0
    %v741 = vpop.trf.xlu0
    %742 = vxpose.xlu0.c.b16.start [1/8] %v664, 128
    %743 = vxpose.xlu0.c.b16.cont [2/8] 0, 128
    %744 = vxpose.xlu0.c.b16.cont [3/8] 0, 128
    %745 = vxpose.xlu0.c.b16.cont [4/8] 0, 128
    %746 = vxpose.xlu0.c.b16.cont [5/8] 0, 128
    %747 = vxpose.xlu0.c.b16.cont [6/8] 0, 128
    %748 = vxpose.xlu0.c.b16.cont [7/8] 0, 128
    %749 = vxpose.xlu0.c.b16.end [8/8] 0, 128
    %v750 = vpop.trf.xlu0
    %v751 = vpop.trf.xlu0
    %v752 = vpop.trf.xlu0
    %v753 = vpop.trf.xlu0
    %v754 = vpop.trf.xlu0
    %v755 = vpop.trf.xlu0
    %v756 = vpop.trf.xlu0
    %v757 = vpop.trf.xlu0
    %758 = vxpose.xlu0.c.b16.start [1/8] %v668, 128
    %759 = vxpose.xlu0.c.b16.cont [2/8] 0, 128
    %760 = vxpose.xlu0.c.b16.cont [3/8] 0, 128
    %761 = vxpose.xlu0.c.b16.cont [4/8] 0, 128
    %762 = vxpose.xlu0.c.b16.cont [5/8] 0, 128
    %763 = vxpose.xlu0.c.b16.cont [6/8] 0, 128
    %764 = vxpose.xlu0.c.b16.cont [7/8] 0, 128
    %765 = vxpose.xlu0.c.b16.end [8/8] 0, 128
    %v766 = vpop.trf.xlu0
    %v767 = vpop.trf.xlu0
    %v768 = vpop.trf.xlu0
    %v769 = vpop.trf.xlu0
    %v770 = vpop.trf.xlu0
    %v771 = vpop.trf.xlu0
    %v772 = vpop.trf.xlu0
    %v773 = vpop.trf.xlu0
    %774 = vxpose.xlu0.c.b16.start [1/8] %v672, 128
    %775 = vxpose.xlu0.c.b16.cont [2/8] 0, 128
    %776 = vxpose.xlu0.c.b16.cont [3/8] 0, 128
    %777 = vxpose.xlu0.c.b16.cont [4/8] 0, 128
    %778 = vxpose.xlu0.c.b16.cont [5/8] 0, 128
    %779 = vxpose.xlu0.c.b16.cont [6/8] 0, 128
    %780 = vxpose.xlu0.c.b16.cont [7/8] 0, 128
    %781 = vxpose.xlu0.c.b16.end [8/8] 0, 128
    %v782 = vpop.trf.xlu0
    %v783 = vpop.trf.xlu0
    %v784 = vpop.trf.xlu0
    %v785 = vpop.trf.xlu0
    %v786 = vpop.trf.xlu0
    %v787 = vpop.trf.xlu0
    %v788 = vpop.trf.xlu0
    %v789 = vpop.trf.xlu0
    %790 = vxpose.xlu0.c.b16.start [1/8] %v676, 128
    %791 = vxpose.xlu0.c.b16.cont [2/8] 0, 128
    %792 = vxpose.xlu0.c.b16.cont [3/8] 0, 128
    %793 = vxpose.xlu0.c.b16.cont [4/8] 0, 128
    %794 = vxpose.xlu0.c.b16.cont [5/8] 0, 128
    %795 = vxpose.xlu0.c.b16.cont [6/8] 0, 128
    %796 = vxpose.xlu0.c.b16.cont [7/8] 0, 128
    %797 = vxpose.xlu0.c.b16.end [8/8] 0, 128
    %v798 = vpop.trf.xlu0
    %v799 = vpop.trf.xlu0
    %v800 = vpop.trf.xlu0
    %v801 = vpop.trf.xlu0
    %v802 = vpop.trf.xlu0
    %v803 = vpop.trf.xlu0
    %v804 = vpop.trf.xlu0
    %v805 = vpop.trf.xlu0
    %v806 = vcombine.low %v686, %v750
    %v808 = vunpack.c.l.s4 1983009808
    %v809 = vunpack.c.0.s8 %v808
    %v810 = vlaneseq
    %v811 = vshrl.u32 %v810, 7
    %v812 = vsub.s32 %v809, %v811
    %v813 = vrot.slane %v806, %v812
    %v814 = vcombine.low %v718, %v782
    %v816 = vunpack.c.l.s4 1983009808
    %v817 = vunpack.c.0.s8 %v816
    %v818 = vlaneseq
    %v819 = vshrl.u32 %v818, 7
    %v820 = vsub.s32 %v817, %v819
    %v821 = vrot.slane %v814, %v820
    %v822 = vcombine.low %v813, %v821
    %v824 = vunpack.c.l.s4 1934713408
    %v825 = vunpack.c.0.s8 %v824
    %v826 = vlaneseq
    %v827 = vshrl.u32 %v826, 7
    %v828 = vsub.s32 %v825, %v827
    %v829 = vrot.slane %v822, %v828
    %v830 = vcombine.high %v829, 0
    %v831 = vcombine.low %v702, %v766
    %v833 = vunpack.c.l.s4 1983009808
    %v834 = vunpack.c.0.s8 %v833
    %v835 = vlaneseq
    %v836 = vshrl.u32 %v835, 7
    %v837 = vsub.s32 %v834, %v836
    %v838 = vrot.slane %v831, %v837
    %v839 = vcombine.low %v734, %v798
    %v841 = vunpack.c.l.s4 1983009808
    %v842 = vunpack.c.0.s8 %v841
    %v843 = vlaneseq
    %v844 = vshrl.u32 %v843, 7
    %v845 = vsub.s32 %v842, %v844
    %v846 = vrot.slane %v839, %v845
    %v847 = vcombine.low %v838, %v846
    %v849 = vunpack.c.l.s4 1934713408
    %v850 = vunpack.c.0.s8 %v849
    %v851 = vlaneseq
    %v852 = vshrl.u32 %v851, 7
    %v853 = vsub.s32 %v850, %v852
    %v854 = vrot.slane %v847, %v853
    %v855 = vcombine.high %v854, 0
    %v858 = vpack.i.b16 %v854, %v829
    %v859 = vshrl.u32 %v829, 16
    %v860 = vshrl.u32 %v854, 16
    %v861 = vpack.i.b16 %v860, %v859
    %v864 = vpack.i.b16 %v855, %v830
    %v865 = vshrl.u32 %v830, 16
    %v866 = vshrl.u32 %v855, 16
    %v867 = vpack.i.b16 %v866, %v865
    %vm868 = vcmask 64512
    %v870 = vsel %vm868, %v440, 0
    %vm872 = vcmask 1043456
    %v874 = vsel %vm872, %v858, 0
    %876 = vmatprep.subr.bf16.mxu0 0
    %877 = vmatpush1.bf16.msra.mxu0 0
    %878 = vmatprep.subr.bf16.mxu0 0
    %879 = vmatpush1.bf16.msra.mxu0 0
    %880 = vmatprep.subr.bf16.mxu0 0
    %881 = vmatpush1.bf16.msra.mxu0 0
    %882 = vmatprep.subr.bf16.mxu0 0
    %883 = vmatpush1.bf16.msra.mxu0 0
    %884 = vmatprep.subr.bf16.mxu0 0
    %885 = vmatpush1.bf16.msra.mxu0 0
    %886 = vmatprep.subr.bf16.mxu0 0
    %887 = vmatpush1.bf16.msra.mxu0 0
    %888 = vmatprep.subr.bf16.mxu0 0
    %889 = vmatpush1.bf16.msra.mxu0 0
    %890 = vmatprep.subr.bf16.mxu0 0
    %891 = vmatpush1.bf16.msra.mxu0 %v874
    %892 = vmatprep.subr.bf16.mxu0 0
    %893 = vmatpush2.bf16.msra.mxu0 0
    %894 = vmatprep.subr.bf16.mxu0 0
    %895 = vmatpush2.bf16.msra.mxu0 0
    %896 = vmatprep.subr.bf16.mxu0 0
    %897 = vmatpush2.bf16.msra.mxu0 0
    %898 = vmatprep.subr.bf16.mxu0 0
    %899 = vmatpush2.bf16.msra.mxu0 0
    %900 = vmatprep.subr.bf16.mxu0 0
    %901 = vmatpush2.bf16.msra.mxu0 0
    %902 = vmatprep.subr.bf16.mxu0 0
    %903 = vmatpush2.bf16.msra.mxu0 0
    %904 = vmatprep.subr.bf16.mxu0 0
    %905 = vmatpush2.bf16.msra.mxu0 0
    %906 = vmatprep.subr.bf16.mxu0 0
    %907 = vmatpush2.bf16.msra.mxu0 0
    %908 = vmatprep.mubr.bf16.mxu0 0
    %909 = vmatmul.mubr.bf16.gmra.mxu0 %v870
    %v910 = vpop.f32.mrf.mxu0
    %v911 = vadd.f32 0.0, %v910
    %v912 = vpop.f32.mrf.mxu0
    %v913 = vpop.f32.mrf.mxu0
    %v914 = vpop.f32.mrf.mxu0
    %915 = vdwg.mxu0
    %v917 = vsel %vm868, %v443, 0
    %v920 = vsel %vm872, %v861, 0
    %922 = vmatprep.subr.bf16.mxu0 0
    %923 = vmatpush1.bf16.msra.mxu0 0
    %924 = vmatprep.subr.bf16.mxu0 0
    %925 = vmatpush1.bf16.msra.mxu0 0
    %926 = vmatprep.subr.bf16.mxu0 0
    %927 = vmatpush1.bf16.msra.mxu0 0
    %928 = vmatprep.subr.bf16.mxu0 0
    %929 = vmatpush1.bf16.msra.mxu0 0
    %930 = vmatprep.subr.bf16.mxu0 0
    %931 = vmatpush1.bf16.msra.mxu0 0
    %932 = vmatprep.subr.bf16.mxu0 0
    %933 = vmatpush1.bf16.msra.mxu0 0
    %934 = vmatprep.subr.bf16.mxu0 0
    %935 = vmatpush1.bf16.msra.mxu0 0
    %936 = vmatprep.subr.bf16.mxu0 0
    %937 = vmatpush1.bf16.msra.mxu0 %v920
    %938 = vmatprep.subr.bf16.mxu0 0
    %939 = vmatpush2.bf16.msra.mxu0 0
    %940 = vmatprep.subr.bf16.mxu0 0
    %941 = vmatpush2.bf16.msra.mxu0 0
    %942 = vmatprep.subr.bf16.mxu0 0
    %943 = vmatpush2.bf16.msra.mxu0 0
    %944 = vmatprep.subr.bf16.mxu0 0
    %945 = vmatpush2.bf16.msra.mxu0 0
    %946 = vmatprep.subr.bf16.mxu0 0
    %947 = vmatpush2.bf16.msra.mxu0 0
    %948 = vmatprep.subr.bf16.mxu0 0
    %949 = vmatpush2.bf16.msra.mxu0 0
    %950 = vmatprep.subr.bf16.mxu0 0
    %951 = vmatpush2.bf16.msra.mxu0 0
    %952 = vmatprep.subr.bf16.mxu0 0
    %953 = vmatpush2.bf16.msra.mxu0 0
    %954 = vmatprep.mubr.bf16.mxu0 0
    %955 = vmatmul.mubr.bf16.gmra.mxu0 %v917
    %v956 = vpop.f32.mrf.mxu0
    %v957 = vadd.f32 0.0, %v956
    %v958 = vpop.f32.mrf.mxu0
    %v959 = vpop.f32.mrf.mxu0
    %v960 = vpop.f32.mrf.mxu0
    %961 = vdwg.mxu0
    %v963 = vsel %vm868, %v446, 0
    %v966 = vsel %vm872, %v864, 0
    %968 = vmatprep.subr.bf16.mxu0 0
    %969 = vmatpush1.bf16.msra.mxu0 0
    %970 = vmatprep.subr.bf16.mxu0 0
    %971 = vmatpush1.bf16.msra.mxu0 0
    %972 = vmatprep.subr.bf16.mxu0 0
    %973 = vmatpush1.bf16.msra.mxu0 0
    %974 = vmatprep.subr.bf16.mxu0 0
    %975 = vmatpush1.bf16.msra.mxu0 0
    %976 = vmatprep.subr.bf16.mxu0 0
    %977 = vmatpush1.bf16.msra.mxu0 0
    %978 = vmatprep.subr.bf16.mxu0 0
    %979 = vmatpush1.bf16.msra.mxu0 0
    %980 = vmatprep.subr.bf16.mxu0 0
    %981 = vmatpush1.bf16.msra.mxu0 0
    %982 = vmatprep.subr.bf16.mxu0 0
    %983 = vmatpush1.bf16.msra.mxu0 %v966
    %984 = vmatprep.subr.bf16.mxu0 0
    %985 = vmatpush2.bf16.msra.mxu0 0
    %986 = vmatprep.subr.bf16.mxu0 0
    %987 = vmatpush2.bf16.msra.mxu0 0
    %988 = vmatprep.subr.bf16.mxu0 0
    %989 = vmatpush2.bf16.msra.mxu0 0
    %990 = vmatprep.subr.bf16.mxu0 0
    %991 = vmatpush2.bf16.msra.mxu0 0
    %992 = vmatprep.subr.bf16.mxu0 0
    %993 = vmatpush2.bf16.msra.mxu0 0
    %994 = vmatprep.subr.bf16.mxu0 0
    %995 = vmatpush2.bf16.msra.mxu0 0
    %996 = vmatprep.subr.bf16.mxu0 0
    %997 = vmatpush2.bf16.msra.mxu0 0
    %998 = vmatprep.subr.bf16.mxu0 0
    %999 = vmatpush2.bf16.msra.mxu0 0
    %1000 = vmatprep.mubr.bf16.mxu0 0
    %1001 = vmatmul.mubr.bf16.gmra.mxu0 %v963
    %v1002 = vpop.f32.mrf.mxu0
    %v1003 = vadd.f32 0.0, %v1002
    %v1004 = vpop.f32.mrf.mxu0
    %v1005 = vpop.f32.mrf.mxu0
    %v1006 = vpop.f32.mrf.mxu0
    %1007 = vdwg.mxu0
    %v1009 = vsel %vm868, %v449, 0
    %v1012 = vsel %vm872, %v867, 0
    %1014 = vmatprep.subr.bf16.mxu0 0
    %1015 = vmatpush1.bf16.msra.mxu0 0
    %1016 = vmatprep.subr.bf16.mxu0 0
    %1017 = vmatpush1.bf16.msra.mxu0 0
    %1018 = vmatprep.subr.bf16.mxu0 0
    %1019 = vmatpush1.bf16.msra.mxu0 0
    %1020 = vmatprep.subr.bf16.mxu0 0
    %1021 = vmatpush1.bf16.msra.mxu0 0
    %1022 = vmatprep.subr.bf16.mxu0 0
    %1023 = vmatpush1.bf16.msra.mxu0 0
    %1024 = vmatprep.subr.bf16.mxu0 0
    %1025 = vmatpush1.bf16.msra.mxu0 0
    %1026 = vmatprep.subr.bf16.mxu0 0
    %1027 = vmatpush1.bf16.msra.mxu0 0
    %1028 = vmatprep.subr.bf16.mxu0 0
    %1029 = vmatpush1.bf16.msra.mxu0 %v1012
    %1030 = vmatprep.subr.bf16.mxu0 0
    %1031 = vmatpush2.bf16.msra.mxu0 0
    %1032 = vmatprep.subr.bf16.mxu0 0
    %1033 = vmatpush2.bf16.msra.mxu0 0
    %1034 = vmatprep.subr.bf16.mxu0 0
    %1035 = vmatpush2.bf16.msra.mxu0 0
    %1036 = vmatprep.subr.bf16.mxu0 0
    %1037 = vmatpush2.bf16.msra.mxu0 0
    %1038 = vmatprep.subr.bf16.mxu0 0
    %1039 = vmatpush2.bf16.msra.mxu0 0
    %1040 = vmatprep.subr.bf16.mxu0 0
    %1041 = vmatpush2.bf16.msra.mxu0 0
    %1042 = vmatprep.subr.bf16.mxu0 0
    %1043 = vmatpush2.bf16.msra.mxu0 0
    %1044 = vmatprep.subr.bf16.mxu0 0
    %1045 = vmatpush2.bf16.msra.mxu0 0
    %1046 = vmatprep.mubr.bf16.mxu0 0
    %1047 = vmatmul.mubr.bf16.gmra.mxu0 %v1009
    %v1048 = vpop.f32.mrf.mxu0
    %v1049 = vadd.f32 0.0, %v1048
    %v1050 = vpop.f32.mrf.mxu0
    %v1051 = vpop.f32.mrf.mxu0
    %v1052 = vpop.f32.mrf.mxu0
    %1053 = vdwg.mxu0
    %v1054 = vsel %vm128, 1, 0
    %vm1055 = vcmp.eq.s32.totalorder %v1054, 1
    %v1056 = vsel %vm1055, %v911, -1e+30
    %v1057 = vsel %vm1055, %v957, -1e+30
    %v1058 = vsel %vm1055, %v1003, -1e+30
    %v1059 = vsel %vm1055, %v1049, -1e+30
    %v1060 = vsel %vm868, %v1056, -inf
    %1061 = vmax.xlane.f32.xlu0 %v1060
    %v1062 = vpop.xlane.xlu0 %1061
    %v1063 = vsel %vm868, %v1057, -inf
    %1064 = vmax.xlane.f32.xlu0 %v1063
    %v1065 = vpop.xlane.xlu0 %1064
    %v1066 = vsel %vm868, %v1058, -inf
    %1067 = vmax.xlane.f32.xlu0 %v1066
    %v1068 = vpop.xlane.xlu0 %1067
    %v1069 = vsel %vm868, %v1059, -inf
    %1070 = vmax.xlane.f32.xlu0 %v1069
    %v1071 = vpop.xlane.xlu0 %1070
    %v1072 = vsub.f32 %v1056, %v1062
    %v1073 = vsub.f32 %v1057, %v1065
    %v1074 = vsub.f32 %v1058, %v1068
    %v1075 = vsub.f32 %v1059, %v1071
    %v1076 = vmul.f32 %v1072, 1.442695
    %v1077 = vpow.pop %v1076
    %v1078 = vmul.f32 %v1073, 1.442695
    %v1079 = vpow.pop %v1078
    %v1080 = vmul.f32 %v1074, 1.442695
    %v1081 = vpow.pop %v1080
    %v1082 = vmul.f32 %v1075, 1.442695
    %v1083 = vpow.pop %v1082
    %v1084 = vsel %vm868, %v1077, 0.0
    %1085 = vadd.xlane.f32.xlu0 %v1084
    %v1086 = vpop.xlane.xlu0 %1085
    %v1087 = vsel %vm868, %v1079, 0.0
    %1088 = vadd.xlane.f32.xlu0 %v1087
    %v1089 = vpop.xlane.xlu0 %1088
    %v1090 = vsel %vm868, %v1081, 0.0
    %1091 = vadd.xlane.f32.xlu0 %v1090
    %v1092 = vpop.xlane.xlu0 %1091
    %v1093 = vsel %vm868, %v1083, 0.0
    %1094 = vadd.xlane.f32.xlu0 %v1093
    %v1095 = vpop.xlane.xlu0 %1094
    %v1096 = vrcp.pop %v1086
    %v1097 = vrcp.pop %v1089
    %v1098 = vrcp.pop %v1092
    %v1099 = vrcp.pop %v1095
    %v1100 = vmul.f32 %v1077, %v1096
    %v1101 = vmul.f32 %v1079, %v1097
    %v1102 = vmul.f32 %v1081, %v1098
    %v1103 = vmul.f32 %v1083, %v1099
    %v1104 = vpack.c.bf16 %v1100, %v1100
    %v1105 = vpack.c.bf16 %v1101, %v1101
    %v1106 = vpack.c.bf16 %v1102, %v1102
    %v1107 = vpack.c.bf16 %v1103, %v1103
    %v1108 = vpack.c.bf16 %v344, %v344
    %v1109 = vpack.c.bf16 %v368, %v368
    %v1110 = vpack.c.bf16 %v351, %v351
    %v1111 = vpack.c.bf16 %v369, %v369
    %v1112 = vpack.c.bf16 %v360, %v360
    %v1113 = vpack.c.bf16 %v370, %v370
    %v1114 = vpack.c.bf16 %v367, %v367
    %v1115 = vpack.c.bf16 %v371, %v371
    %1116 = vxpose.xlu0.c.b16.start [1/8] %v1108, 128
    %1117 = vxpose.xlu0.c.b16.cont [2/8] 0, 128
    %1118 = vxpose.xlu0.c.b16.cont [3/8] 0, 128
    %1119 = vxpose.xlu0.c.b16.cont [4/8] 0, 128
    %1120 = vxpose.xlu0.c.b16.cont [5/8] 0, 128
    %1121 = vxpose.xlu0.c.b16.cont [6/8] 0, 128
    %1122 = vxpose.xlu0.c.b16.cont [7/8] 0, 128
    %1123 = vxpose.xlu0.c.b16.end [8/8] 0, 128
    %v1124 = vpop.trf.xlu0
    %v1125 = vpop.trf.xlu0
    %v1126 = vpop.trf.xlu0
    %v1127 = vpop.trf.xlu0
    %v1128 = vpop.trf.xlu0
    %v1129 = vpop.trf.xlu0
    %v1130 = vpop.trf.xlu0
    %v1131 = vpop.trf.xlu0
    %1132 = vxpose.xlu0.c.b16.start [1/8] %v1109, 128
    %1133 = vxpose.xlu0.c.b16.cont [2/8] 0, 128
    %1134 = vxpose.xlu0.c.b16.cont [3/8] 0, 128
    %1135 = vxpose.xlu0.c.b16.cont [4/8] 0, 128
    %1136 = vxpose.xlu0.c.b16.cont [5/8] 0, 128
    %1137 = vxpose.xlu0.c.b16.cont [6/8] 0, 128
    %1138 = vxpose.xlu0.c.b16.cont [7/8] 0, 128
    %1139 = vxpose.xlu0.c.b16.end [8/8] 0, 128
    %v1140 = vpop.trf.xlu0
    %v1141 = vpop.trf.xlu0
    %v1142 = vpop.trf.xlu0
    %v1143 = vpop.trf.xlu0
    %v1144 = vpop.trf.xlu0
    %v1145 = vpop.trf.xlu0
    %v1146 = vpop.trf.xlu0
    %v1147 = vpop.trf.xlu0
    %1148 = vxpose.xlu0.c.b16.start [1/8] %v1110, 128
    %1149 = vxpose.xlu0.c.b16.cont [2/8] 0, 128
    %1150 = vxpose.xlu0.c.b16.cont [3/8] 0, 128
    %1151 = vxpose.xlu0.c.b16.cont [4/8] 0, 128
    %1152 = vxpose.xlu0.c.b16.cont [5/8] 0, 128
    %1153 = vxpose.xlu0.c.b16.cont [6/8] 0, 128
    %1154 = vxpose.xlu0.c.b16.cont [7/8] 0, 128
    %1155 = vxpose.xlu0.c.b16.end [8/8] 0, 128
    %v1156 = vpop.trf.xlu0
    %v1157 = vpop.trf.xlu0
    %v1158 = vpop.trf.xlu0
    %v1159 = vpop.trf.xlu0
    %v1160 = vpop.trf.xlu0
    %v1161 = vpop.trf.xlu0
    %v1162 = vpop.trf.xlu0
    %v1163 = vpop.trf.xlu0
    %1164 = vxpose.xlu0.c.b16.start [1/8] %v1111, 128
    %1165 = vxpose.xlu0.c.b16.cont [2/8] 0, 128
    %1166 = vxpose.xlu0.c.b16.cont [3/8] 0, 128
    %1167 = vxpose.xlu0.c.b16.cont [4/8] 0, 128
    %1168 = vxpose.xlu0.c.b16.cont [5/8] 0, 128
    %1169 = vxpose.xlu0.c.b16.cont [6/8] 0, 128
    %1170 = vxpose.xlu0.c.b16.cont [7/8] 0, 128
    %1171 = vxpose.xlu0.c.b16.end [8/8] 0, 128
    %v1172 = vpop.trf.xlu0
    %v1173 = vpop.trf.xlu0
    %v1174 = vpop.trf.xlu0
    %v1175 = vpop.trf.xlu0
    %v1176 = vpop.trf.xlu0
    %v1177 = vpop.trf.xlu0
    %v1178 = vpop.trf.xlu0
    %v1179 = vpop.trf.xlu0
    %1180 = vxpose.xlu0.c.b16.start [1/8] %v1112, 128
    %1181 = vxpose.xlu0.c.b16.cont [2/8] 0, 128
    %1182 = vxpose.xlu0.c.b16.cont [3/8] 0, 128
    %1183 = vxpose.xlu0.c.b16.cont [4/8] 0, 128
    %1184 = vxpose.xlu0.c.b16.cont [5/8] 0, 128
    %1185 = vxpose.xlu0.c.b16.cont [6/8] 0, 128
    %1186 = vxpose.xlu0.c.b16.cont [7/8] 0, 128
    %1187 = vxpose.xlu0.c.b16.end [8/8] 0, 128
    %v1188 = vpop.trf.xlu0
    %v1189 = vpop.trf.xlu0
    %v1190 = vpop.trf.xlu0
    %v1191 = vpop.trf.xlu0
    %v1192 = vpop.trf.xlu0
    %v1193 = vpop.trf.xlu0
    %v1194 = vpop.trf.xlu0
    %v1195 = vpop.trf.xlu0
    %1196 = vxpose.xlu0.c.b16.start [1/8] %v1113, 128
    %1197 = vxpose.xlu0.c.b16.cont [2/8] 0, 128
    %1198 = vxpose.xlu0.c.b16.cont [3/8] 0, 128
    %1199 = vxpose.xlu0.c.b16.cont [4/8] 0, 128
    %1200 = vxpose.xlu0.c.b16.cont [5/8] 0, 128
    %1201 = vxpose.xlu0.c.b16.cont [6/8] 0, 128
    %1202 = vxpose.xlu0.c.b16.cont [7/8] 0, 128
    %1203 = vxpose.xlu0.c.b16.end [8/8] 0, 128
    %v1204 = vpop.trf.xlu0
    %v1205 = vpop.trf.xlu0
    %v1206 = vpop.trf.xlu0
    %v1207 = vpop.trf.xlu0
    %v1208 = vpop.trf.xlu0
    %v1209 = vpop.trf.xlu0
    %v1210 = vpop.trf.xlu0
    %v1211 = vpop.trf.xlu0
    %1212 = vxpose.xlu0.c.b16.start [1/8] %v1114, 128
    %1213 = vxpose.xlu0.c.b16.cont [2/8] 0, 128
    %1214 = vxpose.xlu0.c.b16.cont [3/8] 0, 128
    %1215 = vxpose.xlu0.c.b16.cont [4/8] 0, 128
    %1216 = vxpose.xlu0.c.b16.cont [5/8] 0, 128
    %1217 = vxpose.xlu0.c.b16.cont [6/8] 0, 128
    %1218 = vxpose.xlu0.c.b16.cont [7/8] 0, 128
    %1219 = vxpose.xlu0.c.b16.end [8/8] 0, 128
    %v1220 = vpop.trf.xlu0
    %v1221 = vpop.trf.xlu0
    %v1222 = vpop.trf.xlu0
    %v1223 = vpop.trf.xlu0
    %v1224 = vpop.trf.xlu0
    %v1225 = vpop.trf.xlu0
    %v1226 = vpop.trf.xlu0
    %v1227 = vpop.trf.xlu0
    %1228 = vxpose.xlu0.c.b16.start [1/8] %v1115, 128
    %1229 = vxpose.xlu0.c.b16.cont [2/8] 0, 128
    %1230 = vxpose.xlu0.c.b16.cont [3/8] 0, 128
    %1231 = vxpose.xlu0.c.b16.cont [4/8] 0, 128
    %1232 = vxpose.xlu0.c.b16.cont [5/8] 0, 128
    %1233 = vxpose.xlu0.c.b16.cont [6/8] 0, 128
    %1234 = vxpose.xlu0.c.b16.cont [7/8] 0, 128
    %1235 = vxpose.xlu0.c.b16.end [8/8] 0, 128
    %v1236 = vpop.trf.xlu0
    %v1237 = vpop.trf.xlu0
    %v1238 = vpop.trf.xlu0
    %v1239 = vpop.trf.xlu0
    %v1240 = vpop.trf.xlu0
    %v1241 = vpop.trf.xlu0
    %v1242 = vpop.trf.xlu0
    %v1243 = vpop.trf.xlu0
    %v1244 = vcombine.low %v1124, %v1188
    %v1246 = vunpack.c.l.s4 1983009808
    %v1247 = vunpack.c.0.s8 %v1246
    %v1248 = vlaneseq
    %v1249 = vshrl.u32 %v1248, 7
    %v1250 = vsub.s32 %v1247, %v1249
    %v1251 = vrot.slane %v1244, %v1250
    %v1252 = vcombine.low %v1156, %v1220
    %v1254 = vunpack.c.l.s4 1983009808
    %v1255 = vunpack.c.0.s8 %v1254
    %v1256 = vlaneseq
    %v1257 = vshrl.u32 %v1256, 7
    %v1258 = vsub.s32 %v1255, %v1257
    %v1259 = vrot.slane %v1252, %v1258
    %v1260 = vcombine.low %v1251, %v1259
    %v1261 = vcombine.high %v1251, %v1259
    %v1263 = vunpack.c.l.s4 1934713408
    %v1264 = vunpack.c.0.s8 %v1263
    %v1265 = vlaneseq
    %v1266 = vshrl.u32 %v1265, 7
    %v1267 = vsub.s32 %v1264, %v1266
    %v1268 = vrot.slane %v1260, %v1267
    %v1270 = vunpack.c.l.s4 1934713408
    %v1271 = vunpack.c.0.s8 %v1270
    %v1272 = vlaneseq
    %v1273 = vshrl.u32 %v1272, 7
    %v1274 = vsub.s32 %v1271, %v1273
    %v1275 = vrot.slane %v1261, %v1274
    %v1276 = vcombine.high %v1268, 0
    %v1277 = vcombine.high %v1275, 0
    %v1278 = vcombine.low %v1140, %v1204
    %v1280 = vunpack.c.l.s4 1983009808
    %v1281 = vunpack.c.0.s8 %v1280
    %v1282 = vlaneseq
    %v1283 = vshrl.u32 %v1282, 7
    %v1284 = vsub.s32 %v1281, %v1283
    %v1285 = vrot.slane %v1278, %v1284
    %v1286 = vcombine.low %v1172, %v1236
    %v1288 = vunpack.c.l.s4 1983009808
    %v1289 = vunpack.c.0.s8 %v1288
    %v1290 = vlaneseq
    %v1291 = vshrl.u32 %v1290, 7
    %v1292 = vsub.s32 %v1289, %v1291
    %v1293 = vrot.slane %v1286, %v1292
    %v1294 = vcombine.low %v1285, %v1293
    %v1295 = vcombine.high %v1285, %v1293
    %v1297 = vunpack.c.l.s4 1934713408
    %v1298 = vunpack.c.0.s8 %v1297
    %v1299 = vlaneseq
    %v1300 = vshrl.u32 %v1299, 7
    %v1301 = vsub.s32 %v1298, %v1300
    %v1302 = vrot.slane %v1294, %v1301
    %v1304 = vunpack.c.l.s4 1934713408
    %v1305 = vunpack.c.0.s8 %v1304
    %v1306 = vlaneseq
    %v1307 = vshrl.u32 %v1306, 7
    %v1308 = vsub.s32 %v1305, %v1307
    %v1309 = vrot.slane %v1295, %v1308
    %v1310 = vcombine.high %v1302, 0
    %v1311 = vcombine.high %v1309, 0
    %v1314 = vpack.i.b16 %v1302, %v1268
    %v1316 = vshrl.u32 %v1268, 16
    %v1317 = vshrl.u32 %v1302, 16
    %v1318 = vpack.i.b16 %v1317, %v1316
    %v1322 = vpack.i.b16 %v1310, %v1276
    %v1324 = vshrl.u32 %v1276, 16
    %v1325 = vshrl.u32 %v1310, 16
    %v1326 = vpack.i.b16 %v1325, %v1324
    %v1330 = vpack.i.b16 %v1309, %v1275
    %v1332 = vshrl.u32 %v1275, 16
    %v1333 = vshrl.u32 %v1309, 16
    %v1334 = vpack.i.b16 %v1333, %v1332
    %v1338 = vpack.i.b16 %v1311, %v1277
    %v1340 = vshrl.u32 %v1277, 16
    %v1341 = vshrl.u32 %v1311, 16
    %v1342 = vpack.i.b16 %v1341, %v1340
    %1344 = vxpose.xlu0.c.b16.start [1/8] %v1314, 128
    %1345 = vxpose.xlu0.c.b16.cont [2/8] 0, 128
    %1346 = vxpose.xlu0.c.b16.cont [3/8] 0, 128
    %1347 = vxpose.xlu0.c.b16.cont [4/8] 0, 128
    %1348 = vxpose.xlu0.c.b16.cont [5/8] 0, 128
    %1349 = vxpose.xlu0.c.b16.cont [6/8] 0, 128
    %1350 = vxpose.xlu0.c.b16.cont [7/8] 0, 128
    %1351 = vxpose.xlu0.c.b16.end [8/8] 0, 128
    %v1352 = vpop.trf.xlu0
    %v1353 = vpop.trf.xlu0
    %v1354 = vpop.trf.xlu0
    %v1355 = vpop.trf.xlu0
    %v1356 = vpop.trf.xlu0
    %v1357 = vpop.trf.xlu0
    %v1358 = vpop.trf.xlu0
    %v1359 = vpop.trf.xlu0
    %1360 = vxpose.xlu0.c.b16.start [1/8] %v1318, 128
    %1361 = vxpose.xlu0.c.b16.cont [2/8] 0, 128
    %1362 = vxpose.xlu0.c.b16.cont [3/8] 0, 128
    %1363 = vxpose.xlu0.c.b16.cont [4/8] 0, 128
    %1364 = vxpose.xlu0.c.b16.cont [5/8] 0, 128
    %1365 = vxpose.xlu0.c.b16.cont [6/8] 0, 128
    %1366 = vxpose.xlu0.c.b16.cont [7/8] 0, 128
    %1367 = vxpose.xlu0.c.b16.end [8/8] 0, 128
    %v1368 = vpop.trf.xlu0
    %v1369 = vpop.trf.xlu0
    %v1370 = vpop.trf.xlu0
    %v1371 = vpop.trf.xlu0
    %v1372 = vpop.trf.xlu0
    %v1373 = vpop.trf.xlu0
    %v1374 = vpop.trf.xlu0
    %v1375 = vpop.trf.xlu0
    %1376 = vxpose.xlu0.c.b16.start [1/8] %v1322, 128
    %1377 = vxpose.xlu0.c.b16.cont [2/8] 0, 128
    %1378 = vxpose.xlu0.c.b16.cont [3/8] 0, 128
    %1379 = vxpose.xlu0.c.b16.cont [4/8] 0, 128
    %1380 = vxpose.xlu0.c.b16.cont [5/8] 0, 128
    %1381 = vxpose.xlu0.c.b16.cont [6/8] 0, 128
    %1382 = vxpose.xlu0.c.b16.cont [7/8] 0, 128
    %1383 = vxpose.xlu0.c.b16.end [8/8] 0, 128
    %v1384 = vpop.trf.xlu0
    %v1385 = vpop.trf.xlu0
    %v1386 = vpop.trf.xlu0
    %v1387 = vpop.trf.xlu0
    %v1388 = vpop.trf.xlu0
    %v1389 = vpop.trf.xlu0
    %v1390 = vpop.trf.xlu0
    %v1391 = vpop.trf.xlu0
    %1392 = vxpose.xlu0.c.b16.start [1/8] %v1326, 128
    %1393 = vxpose.xlu0.c.b16.cont [2/8] 0, 128
    %1394 = vxpose.xlu0.c.b16.cont [3/8] 0, 128
    %1395 = vxpose.xlu0.c.b16.cont [4/8] 0, 128
    %1396 = vxpose.xlu0.c.b16.cont [5/8] 0, 128
    %1397 = vxpose.xlu0.c.b16.cont [6/8] 0, 128
    %1398 = vxpose.xlu0.c.b16.cont [7/8] 0, 128
    %1399 = vxpose.xlu0.c.b16.end [8/8] 0, 128
    %v1400 = vpop.trf.xlu0
    %v1401 = vpop.trf.xlu0
    %v1402 = vpop.trf.xlu0
    %v1403 = vpop.trf.xlu0
    %v1404 = vpop.trf.xlu0
    %v1405 = vpop.trf.xlu0
    %v1406 = vpop.trf.xlu0
    %v1407 = vpop.trf.xlu0
    %1408 = vxpose.xlu0.c.b16.start [1/8] %v1330, 128
    %1409 = vxpose.xlu0.c.b16.cont [2/8] 0, 128
    %1410 = vxpose.xlu0.c.b16.cont [3/8] 0, 128
    %1411 = vxpose.xlu0.c.b16.cont [4/8] 0, 128
    %1412 = vxpose.xlu0.c.b16.cont [5/8] 0, 128
    %1413 = vxpose.xlu0.c.b16.cont [6/8] 0, 128
    %1414 = vxpose.xlu0.c.b16.cont [7/8] 0, 128
    %1415 = vxpose.xlu0.c.b16.end [8/8] 0, 128
    %v1416 = vpop.trf.xlu0
    %v1417 = vpop.trf.xlu0
    %v1418 = vpop.trf.xlu0
    %v1419 = vpop.trf.xlu0
    %v1420 = vpop.trf.xlu0
    %v1421 = vpop.trf.xlu0
    %v1422 = vpop.trf.xlu0
    %v1423 = vpop.trf.xlu0
    %1424 = vxpose.xlu0.c.b16.start [1/8] %v1334, 128
    %1425 = vxpose.xlu0.c.b16.cont [2/8] 0, 128
    %1426 = vxpose.xlu0.c.b16.cont [3/8] 0, 128
    %1427 = vxpose.xlu0.c.b16.cont [4/8] 0, 128
    %1428 = vxpose.xlu0.c.b16.cont [5/8] 0, 128
    %1429 = vxpose.xlu0.c.b16.cont [6/8] 0, 128
    %1430 = vxpose.xlu0.c.b16.cont [7/8] 0, 128
    %1431 = vxpose.xlu0.c.b16.end [8/8] 0, 128
    %v1432 = vpop.trf.xlu0
    %v1433 = vpop.trf.xlu0
    %v1434 = vpop.trf.xlu0
    %v1435 = vpop.trf.xlu0
    %v1436 = vpop.trf.xlu0
    %v1437 = vpop.trf.xlu0
    %v1438 = vpop.trf.xlu0
    %v1439 = vpop.trf.xlu0
    %1440 = vxpose.xlu0.c.b16.start [1/8] %v1338, 128
    %1441 = vxpose.xlu0.c.b16.cont [2/8] 0, 128
    %1442 = vxpose.xlu0.c.b16.cont [3/8] 0, 128
    %1443 = vxpose.xlu0.c.b16.cont [4/8] 0, 128
    %1444 = vxpose.xlu0.c.b16.cont [5/8] 0, 128
    %1445 = vxpose.xlu0.c.b16.cont [6/8] 0, 128
    %1446 = vxpose.xlu0.c.b16.cont [7/8] 0, 128
    %1447 = vxpose.xlu0.c.b16.end [8/8] 0, 128
    %v1448 = vpop.trf.xlu0
    %v1449 = vpop.trf.xlu0
    %v1450 = vpop.trf.xlu0
    %v1451 = vpop.trf.xlu0
    %v1452 = vpop.trf.xlu0
    %v1453 = vpop.trf.xlu0
    %v1454 = vpop.trf.xlu0
    %v1455 = vpop.trf.xlu0
    %1456 = vxpose.xlu0.c.b16.start [1/8] %v1342, 128
    %1457 = vxpose.xlu0.c.b16.cont [2/8] 0, 128
    %1458 = vxpose.xlu0.c.b16.cont [3/8] 0, 128
    %1459 = vxpose.xlu0.c.b16.cont [4/8] 0, 128
    %1460 = vxpose.xlu0.c.b16.cont [5/8] 0, 128
    %1461 = vxpose.xlu0.c.b16.cont [6/8] 0, 128
    %1462 = vxpose.xlu0.c.b16.cont [7/8] 0, 128
    %1463 = vxpose.xlu0.c.b16.end [8/8] 0, 128
    %v1464 = vpop.trf.xlu0
    %v1465 = vpop.trf.xlu0
    %v1466 = vpop.trf.xlu0
    %v1467 = vpop.trf.xlu0
    %v1468 = vpop.trf.xlu0
    %v1469 = vpop.trf.xlu0
    %v1470 = vpop.trf.xlu0
    %v1471 = vpop.trf.xlu0
    %v1472 = vcombine.low %v1352, %v1416
    %v1474 = vunpack.c.l.s4 1983009808
    %v1475 = vunpack.c.0.s8 %v1474
    %v1476 = vlaneseq
    %v1477 = vshrl.u32 %v1476, 7
    %v1478 = vsub.s32 %v1475, %v1477
    %v1479 = vrot.slane %v1472, %v1478
    %v1480 = vcombine.low %v1384, %v1448
    %v1482 = vunpack.c.l.s4 1983009808
    %v1483 = vunpack.c.0.s8 %v1482
    %v1484 = vlaneseq
    %v1485 = vshrl.u32 %v1484, 7
    %v1486 = vsub.s32 %v1483, %v1485
    %v1487 = vrot.slane %v1480, %v1486
    %v1488 = vcombine.low %v1479, %v1487
    %v1490 = vunpack.c.l.s4 1934713408
    %v1491 = vunpack.c.0.s8 %v1490
    %v1492 = vlaneseq
    %v1493 = vshrl.u32 %v1492, 7
    %v1494 = vsub.s32 %v1491, %v1493
    %v1495 = vrot.slane %v1488, %v1494
    %v1496 = vcombine.high %v1495, 0
    %v1497 = vcombine.low %v1368, %v1432
    %v1499 = vunpack.c.l.s4 1983009808
    %v1500 = vunpack.c.0.s8 %v1499
    %v1501 = vlaneseq
    %v1502 = vshrl.u32 %v1501, 7
    %v1503 = vsub.s32 %v1500, %v1502
    %v1504 = vrot.slane %v1497, %v1503
    %v1505 = vcombine.low %v1400, %v1464
    %v1507 = vunpack.c.l.s4 1983009808
    %v1508 = vunpack.c.0.s8 %v1507
    %v1509 = vlaneseq
    %v1510 = vshrl.u32 %v1509, 7
    %v1511 = vsub.s32 %v1508, %v1510
    %v1512 = vrot.slane %v1505, %v1511
    %v1513 = vcombine.low %v1504, %v1512
    %v1515 = vunpack.c.l.s4 1934713408
    %v1516 = vunpack.c.0.s8 %v1515
    %v1517 = vlaneseq
    %v1518 = vshrl.u32 %v1517, 7
    %v1519 = vsub.s32 %v1516, %v1518
    %v1520 = vrot.slane %v1513, %v1519
    %v1521 = vcombine.high %v1520, 0
    %v1524 = vpack.i.b16 %v1520, %v1495
    %v1525 = vshrl.u32 %v1495, 16
    %v1526 = vshrl.u32 %v1520, 16
    %v1527 = vpack.i.b16 %v1526, %v1525
    %v1530 = vpack.i.b16 %v1521, %v1496
    %v1531 = vshrl.u32 %v1496, 16
    %v1532 = vshrl.u32 %v1521, 16
    %v1533 = vpack.i.b16 %v1532, %v1531
    %v1535 = vsel %vm868, %v1524, 0
    %v1538 = vsel %vm868, %v1104, 0
    %1540 = vmatprep.subr.bf16.mxu0 0
    %1541 = vmatpush1.bf16.xpose.msra.mxu0 0
    %1542 = vmatprep.subr.bf16.mxu0 0
    %1543 = vmatpush1.bf16.xpose.msra.mxu0 0
    %1544 = vmatprep.subr.bf16.mxu0 0
    %1545 = vmatpush1.bf16.xpose.msra.mxu0 0
    %1546 = vmatprep.subr.bf16.mxu0 0
    %1547 = vmatpush1.bf16.xpose.msra.mxu0 0
    %1548 = vmatprep.subr.bf16.mxu0 0
    %1549 = vmatpush1.bf16.xpose.msra.mxu0 0
    %1550 = vmatprep.subr.bf16.mxu0 0
    %1551 = vmatpush1.bf16.xpose.msra.mxu0 0
    %1552 = vmatprep.subr.bf16.mxu0 0
    %1553 = vmatpush1.bf16.xpose.msra.mxu0 0
    %1554 = vmatprep.subr.bf16.mxu0 0
    %1555 = vmatpush1.bf16.xpose.msra.mxu0 %v1538
    %1556 = vmatprep.subr.bf16.mxu0 0
    %1557 = vmatpush2.bf16.xpose.msra.mxu0 0
    %1558 = vmatprep.subr.bf16.mxu0 0
    %1559 = vmatpush2.bf16.xpose.msra.mxu0 0
    %1560 = vmatprep.subr.bf16.mxu0 0
    %1561 = vmatpush2.bf16.xpose.msra.mxu0 0
    %1562 = vmatprep.subr.bf16.mxu0 0
    %1563 = vmatpush2.bf16.xpose.msra.mxu0 0
    %1564 = vmatprep.subr.bf16.mxu0 0
    %1565 = vmatpush2.bf16.xpose.msra.mxu0 0
    %1566 = vmatprep.subr.bf16.mxu0 0
    %1567 = vmatpush2.bf16.xpose.msra.mxu0 0
    %1568 = vmatprep.subr.bf16.mxu0 0
    %1569 = vmatpush2.bf16.xpose.msra.mxu0 0
    %1570 = vmatprep.subr.bf16.mxu0 0
    %1571 = vmatpush2.bf16.xpose.msra.mxu0 0
    %1572 = vmatprep.mubr.bf16.mxu0 0
    %1573 = vmatmul.mubr.bf16.gmra.mxu0 %v1535
    %v1574 = vpop.f32.mrf.mxu0
    %v1575 = vadd.f32 0.0, %v1574
    %v1576 = vpop.f32.mrf.mxu0
    %v1577 = vpop.f32.mrf.mxu0
    %v1578 = vpop.f32.mrf.mxu0
    %1579 = vdwg.mxu0
    %v1581 = vsel %vm868, %v1527, 0
    %v1584 = vsel %vm868, %v1105, 0
    %1586 = vmatprep.subr.bf16.mxu0 0
    %1587 = vmatpush1.bf16.xpose.msra.mxu0 0
    %1588 = vmatprep.subr.bf16.mxu0 0
    %1589 = vmatpush1.bf16.xpose.msra.mxu0 0
    %1590 = vmatprep.subr.bf16.mxu0 0
    %1591 = vmatpush1.bf16.xpose.msra.mxu0 0
    %1592 = vmatprep.subr.bf16.mxu0 0
    %1593 = vmatpush1.bf16.xpose.msra.mxu0 0
    %1594 = vmatprep.subr.bf16.mxu0 0
    %1595 = vmatpush1.bf16.xpose.msra.mxu0 0
    %1596 = vmatprep.subr.bf16.mxu0 0
    %1597 = vmatpush1.bf16.xpose.msra.mxu0 0
    %1598 = vmatprep.subr.bf16.mxu0 0
    %1599 = vmatpush1.bf16.xpose.msra.mxu0 0
    %1600 = vmatprep.subr.bf16.mxu0 0
    %1601 = vmatpush1.bf16.xpose.msra.mxu0 %v1584
    %1602 = vmatprep.subr.bf16.mxu0 0
    %1603 = vmatpush2.bf16.xpose.msra.mxu0 0
    %1604 = vmatprep.subr.bf16.mxu0 0
    %1605 = vmatpush2.bf16.xpose.msra.mxu0 0
    %1606 = vmatprep.subr.bf16.mxu0 0
    %1607 = vmatpush2.bf16.xpose.msra.mxu0 0
    %1608 = vmatprep.subr.bf16.mxu0 0
    %1609 = vmatpush2.bf16.xpose.msra.mxu0 0
    %1610 = vmatprep.subr.bf16.mxu0 0
    %1611 = vmatpush2.bf16.xpose.msra.mxu0 0
    %1612 = vmatprep.subr.bf16.mxu0 0
    %1613 = vmatpush2.bf16.xpose.msra.mxu0 0
    %1614 = vmatprep.subr.bf16.mxu0 0
    %1615 = vmatpush2.bf16.xpose.msra.mxu0 0
    %1616 = vmatprep.subr.bf16.mxu0 0
    %1617 = vmatpush2.bf16.xpose.msra.mxu0 0
    %1618 = vmatprep.mubr.bf16.mxu0 0
    %1619 = vmatmul.mubr.bf16.gmra.mxu0 %v1581
    %v1620 = vpop.f32.mrf.mxu0
    %v1621 = vadd.f32 0.0, %v1620
    %v1622 = vpop.f32.mrf.mxu0
    %v1623 = vpop.f32.mrf.mxu0
    %v1624 = vpop.f32.mrf.mxu0
    %1625 = vdwg.mxu0
    %v1627 = vsel %vm868, %v1530, 0
    %v1630 = vsel %vm868, %v1106, 0
    %1632 = vmatprep.subr.bf16.mxu0 0
    %1633 = vmatpush1.bf16.xpose.msra.mxu0 0
    %1634 = vmatprep.subr.bf16.mxu0 0
    %1635 = vmatpush1.bf16.xpose.msra.mxu0 0
    %1636 = vmatprep.subr.bf16.mxu0 0
    %1637 = vmatpush1.bf16.xpose.msra.mxu0 0
    %1638 = vmatprep.subr.bf16.mxu0 0
    %1639 = vmatpush1.bf16.xpose.msra.mxu0 0
    %1640 = vmatprep.subr.bf16.mxu0 0
    %1641 = vmatpush1.bf16.xpose.msra.mxu0 0
    %1642 = vmatprep.subr.bf16.mxu0 0
    %1643 = vmatpush1.bf16.xpose.msra.mxu0 0
    %1644 = vmatprep.subr.bf16.mxu0 0
    %1645 = vmatpush1.bf16.xpose.msra.mxu0 0
    %1646 = vmatprep.subr.bf16.mxu0 0
    %1647 = vmatpush1.bf16.xpose.msra.mxu0 %v1630
    %1648 = vmatprep.subr.bf16.mxu0 0
    %1649 = vmatpush2.bf16.xpose.msra.mxu0 0
    %1650 = vmatprep.subr.bf16.mxu0 0
    %1651 = vmatpush2.bf16.xpose.msra.mxu0 0
    %1652 = vmatprep.subr.bf16.mxu0 0
    %1653 = vmatpush2.bf16.xpose.msra.mxu0 0
    %1654 = vmatprep.subr.bf16.mxu0 0
    %1655 = vmatpush2.bf16.xpose.msra.mxu0 0
    %1656 = vmatprep.subr.bf16.mxu0 0
    %1657 = vmatpush2.bf16.xpose.msra.mxu0 0
    %1658 = vmatprep.subr.bf16.mxu0 0
    %1659 = vmatpush2.bf16.xpose.msra.mxu0 0
    %1660 = vmatprep.subr.bf16.mxu0 0
    %1661 = vmatpush2.bf16.xpose.msra.mxu0 0
    %1662 = vmatprep.subr.bf16.mxu0 0
    %1663 = vmatpush2.bf16.xpose.msra.mxu0 0
    %1664 = vmatprep.mubr.bf16.mxu0 0
    %1665 = vmatmul.mubr.bf16.gmra.mxu0 %v1627
    %v1666 = vpop.f32.mrf.mxu0
    %v1667 = vadd.f32 0.0, %v1666
    %v1668 = vpop.f32.mrf.mxu0
    %v1669 = vpop.f32.mrf.mxu0
    %v1670 = vpop.f32.mrf.mxu0
    %1671 = vdwg.mxu0
    %v1673 = vsel %vm868, %v1533, 0
    %v1676 = vsel %vm868, %v1107, 0
    %1678 = vmatprep.subr.bf16.mxu0 0
    %1679 = vmatpush1.bf16.xpose.msra.mxu0 0
    %1680 = vmatprep.subr.bf16.mxu0 0
    %1681 = vmatpush1.bf16.xpose.msra.mxu0 0
    %1682 = vmatprep.subr.bf16.mxu0 0
    %1683 = vmatpush1.bf16.xpose.msra.mxu0 0
    %1684 = vmatprep.subr.bf16.mxu0 0
    %1685 = vmatpush1.bf16.xpose.msra.mxu0 0
    %1686 = vmatprep.subr.bf16.mxu0 0
    %1687 = vmatpush1.bf16.xpose.msra.mxu0 0
    %1688 = vmatprep.subr.bf16.mxu0 0
    %1689 = vmatpush1.bf16.xpose.msra.mxu0 0
    %1690 = vmatprep.subr.bf16.mxu0 0
    %1691 = vmatpush1.bf16.xpose.msra.mxu0 0
    %1692 = vmatprep.subr.bf16.mxu0 0
    %1693 = vmatpush1.bf16.xpose.msra.mxu0 %v1676
    %1694 = vmatprep.subr.bf16.mxu0 0
    %1695 = vmatpush2.bf16.xpose.msra.mxu0 0
    %1696 = vmatprep.subr.bf16.mxu0 0
    %1697 = vmatpush2.bf16.xpose.msra.mxu0 0
    %1698 = vmatprep.subr.bf16.mxu0 0
    %1699 = vmatpush2.bf16.xpose.msra.mxu0 0
    %1700 = vmatprep.subr.bf16.mxu0 0
    %1701 = vmatpush2.bf16.xpose.msra.mxu0 0
    %1702 = vmatprep.subr.bf16.mxu0 0
    %1703 = vmatpush2.bf16.xpose.msra.mxu0 0
    %1704 = vmatprep.subr.bf16.mxu0 0
    %1705 = vmatpush2.bf16.xpose.msra.mxu0 0
    %1706 = vmatprep.subr.bf16.mxu0 0
    %1707 = vmatpush2.bf16.xpose.msra.mxu0 0
    %1708 = vmatprep.subr.bf16.mxu0 0
    %1709 = vmatpush2.bf16.xpose.msra.mxu0 0
    %1710 = vmatprep.mubr.bf16.mxu0 0
    %1711 = vmatmul.mubr.bf16.gmra.mxu0 %v1673
    %v1712 = vpop.f32.mrf.mxu0
    %v1713 = vadd.f32 0.0, %v1712
    %v1714 = vpop.f32.mrf.mxu0
    %v1715 = vpop.f32.mrf.mxu0
    %v1716 = vpop.f32.mrf.mxu0
    %1717 = vdwg.mxu0
    %1718 = vxpose.xlu0.b32.start [1/16] %v1575, 128
    %1719 = vxpose.xlu0.b32.cont [2/16] 0.0, 128
    %1720 = vxpose.xlu0.b32.cont [3/16] 0.0, 128
    %1721 = vxpose.xlu0.b32.cont [4/16] 0.0, 128
    %1722 = vxpose.xlu0.b32.cont [5/16] 0.0, 128
    %1723 = vxpose.xlu0.b32.cont [6/16] 0.0, 128
    %1724 = vxpose.xlu0.b32.cont [7/16] 0.0, 128
    %1725 = vxpose.xlu0.b32.cont [8/16] 0.0, 128
    %1726 = vxpose.xlu0.b32.cont [9/16] 0.0, 128
    %1727 = vxpose.xlu0.b32.cont [10/16] 0.0, 128
    %1728 = vxpose.xlu0.b32.cont [11/16] 0.0, 128
    %1729 = vxpose.xlu0.b32.cont [12/16] 0.0, 128
    %1730 = vxpose.xlu0.b32.cont [13/16] 0.0, 128
    %1731 = vxpose.xlu0.b32.cont [14/16] 0.0, 128
    %1732 = vxpose.xlu0.b32.cont [15/16] 0.0, 128
    %1733 = vxpose.xlu0.b32.end [16/16] 0.0, 128
    %v1734 = vpop.trf.xlu0
    %v1735 = vpop.trf.xlu0
    %v1736 = vpop.trf.xlu0
    %v1737 = vpop.trf.xlu0
    %v1738 = vpop.trf.xlu0
    %v1739 = vpop.trf.xlu0
    %v1740 = vpop.trf.xlu0
    %v1741 = vpop.trf.xlu0
    %v1742 = vpop.trf.xlu0
    %v1743 = vpop.trf.xlu0
    %v1744 = vpop.trf.xlu0
    %v1745 = vpop.trf.xlu0
    %v1746 = vpop.trf.xlu0
    %v1747 = vpop.trf.xlu0
    %v1748 = vpop.trf.xlu0
    %v1749 = vpop.trf.xlu0
    %1750 = vxpose.xlu0.b32.start [1/16] %v1621, 128
    %1751 = vxpose.xlu0.b32.cont [2/16] 0.0, 128
    %1752 = vxpose.xlu0.b32.cont [3/16] 0.0, 128
    %1753 = vxpose.xlu0.b32.cont [4/16] 0.0, 128
    %1754 = vxpose.xlu0.b32.cont [5/16] 0.0, 128
    %1755 = vxpose.xlu0.b32.cont [6/16] 0.0, 128
    %1756 = vxpose.xlu0.b32.cont [7/16] 0.0, 128
    %1757 = vxpose.xlu0.b32.cont [8/16] 0.0, 128
    %1758 = vxpose.xlu0.b32.cont [9/16] 0.0, 128
    %1759 = vxpose.xlu0.b32.cont [10/16] 0.0, 128
    %1760 = vxpose.xlu0.b32.cont [11/16] 0.0, 128
    %1761 = vxpose.xlu0.b32.cont [12/16] 0.0, 128
    %1762 = vxpose.xlu0.b32.cont [13/16] 0.0, 128
    %1763 = vxpose.xlu0.b32.cont [14/16] 0.0, 128
    %1764 = vxpose.xlu0.b32.cont [15/16] 0.0, 128
    %1765 = vxpose.xlu0.b32.end [16/16] 0.0, 128
    %v1766 = vpop.trf.xlu0
    %v1767 = vpop.trf.xlu0
    %v1768 = vpop.trf.xlu0
    %v1769 = vpop.trf.xlu0
    %v1770 = vpop.trf.xlu0
    %v1771 = vpop.trf.xlu0
    %v1772 = vpop.trf.xlu0
    %v1773 = vpop.trf.xlu0
    %v1774 = vpop.trf.xlu0
    %v1775 = vpop.trf.xlu0
    %v1776 = vpop.trf.xlu0
    %v1777 = vpop.trf.xlu0
    %v1778 = vpop.trf.xlu0
    %v1779 = vpop.trf.xlu0
    %v1780 = vpop.trf.xlu0
    %v1781 = vpop.trf.xlu0
    %1782 = vxpose.xlu0.b32.start [1/16] %v1667, 128
    %1783 = vxpose.xlu0.b32.cont [2/16] 0.0, 128
    %1784 = vxpose.xlu0.b32.cont [3/16] 0.0, 128
    %1785 = vxpose.xlu0.b32.cont [4/16] 0.0, 128
    %1786 = vxpose.xlu0.b32.cont [5/16] 0.0, 128
    %1787 = vxpose.xlu0.b32.cont [6/16] 0.0, 128
    %1788 = vxpose.xlu0.b32.cont [7/16] 0.0, 128
    %1789 = vxpose.xlu0.b32.cont [8/16] 0.0, 128
    %1790 = vxpose.xlu0.b32.cont [9/16] 0.0, 128
    %1791 = vxpose.xlu0.b32.cont [10/16] 0.0, 128
    %1792 = vxpose.xlu0.b32.cont [11/16] 0.0, 128
    %1793 = vxpose.xlu0.b32.cont [12/16] 0.0, 128
    %1794 = vxpose.xlu0.b32.cont [13/16] 0.0, 128
    %1795 = vxpose.xlu0.b32.cont [14/16] 0.0, 128
    %1796 = vxpose.xlu0.b32.cont [15/16] 0.0, 128
    %1797 = vxpose.xlu0.b32.end [16/16] 0.0, 128
    %v1798 = vpop.trf.xlu0
    %v1799 = vpop.trf.xlu0
    %v1800 = vpop.trf.xlu0
    %v1801 = vpop.trf.xlu0
    %v1802 = vpop.trf.xlu0
    %v1803 = vpop.trf.xlu0
    %v1804 = vpop.trf.xlu0
    %v1805 = vpop.trf.xlu0
    %v1806 = vpop.trf.xlu0
    %v1807 = vpop.trf.xlu0
    %v1808 = vpop.trf.xlu0
    %v1809 = vpop.trf.xlu0
    %v1810 = vpop.trf.xlu0
    %v1811 = vpop.trf.xlu0
    %v1812 = vpop.trf.xlu0
    %v1813 = vpop.trf.xlu0
    %1814 = vxpose.xlu0.b32.start [1/16] %v1713, 128
    %1815 = vxpose.xlu0.b32.cont [2/16] 0.0, 128
    %1816 = vxpose.xlu0.b32.cont [3/16] 0.0, 128
    %1817 = vxpose.xlu0.b32.cont [4/16] 0.0, 128
    %1818 = vxpose.xlu0.b32.cont [5/16] 0.0, 128
    %1819 = vxpose.xlu0.b32.cont [6/16] 0.0, 128
    %1820 = vxpose.xlu0.b32.cont [7/16] 0.0, 128
    %1821 = vxpose.xlu0.b32.cont [8/16] 0.0, 128
    %1822 = vxpose.xlu0.b32.cont [9/16] 0.0, 128
    %1823 = vxpose.xlu0.b32.cont [10/16] 0.0, 128
    %1824 = vxpose.xlu0.b32.cont [11/16] 0.0, 128
    %1825 = vxpose.xlu0.b32.cont [12/16] 0.0, 128
    %1826 = vxpose.xlu0.b32.cont [13/16] 0.0, 128
    %1827 = vxpose.xlu0.b32.cont [14/16] 0.0, 128
    %1828 = vxpose.xlu0.b32.cont [15/16] 0.0, 128
    %1829 = vxpose.xlu0.b32.end [16/16] 0.0, 128
    %v1830 = vpop.trf.xlu0
    %v1831 = vpop.trf.xlu0
    %v1832 = vpop.trf.xlu0
    %v1833 = vpop.trf.xlu0
    %v1834 = vpop.trf.xlu0
    %v1835 = vpop.trf.xlu0
    %v1836 = vpop.trf.xlu0
    %v1837 = vpop.trf.xlu0
    %v1838 = vpop.trf.xlu0
    %v1839 = vpop.trf.xlu0
    %v1840 = vpop.trf.xlu0
    %v1841 = vpop.trf.xlu0
    %v1842 = vpop.trf.xlu0
    %v1843 = vpop.trf.xlu0
    %v1844 = vpop.trf.xlu0
    %v1845 = vpop.trf.xlu0
    %v1846 = vcombine.low %v1734, %v1798
    %v1847 = vcombine.high %v1734, %v1798
    %v1849 = vunpack.c.l.s4 1983009808
    %v1850 = vunpack.c.0.s8 %v1849
    %v1851 = vlaneseq
    %v1852 = vshrl.u32 %v1851, 7
    %v1853 = vsub.s32 %v1850, %v1852
    %v1854 = vrot.slane %v1846, %v1853
    %v1856 = vunpack.c.l.s4 1983009808
    %v1857 = vunpack.c.0.s8 %v1856
    %v1858 = vlaneseq
    %v1859 = vshrl.u32 %v1858, 7
    %v1860 = vsub.s32 %v1857, %v1859
    %v1861 = vrot.slane %v1847, %v1860
    %v1862 = vcombine.low %v1766, %v1830
    %v1863 = vcombine.high %v1766, %v1830
    %v1865 = vunpack.c.l.s4 1983009808
    %v1866 = vunpack.c.0.s8 %v1865
    %v1867 = vlaneseq
    %v1868 = vshrl.u32 %v1867, 7
    %v1869 = vsub.s32 %v1866, %v1868
    %v1870 = vrot.slane %v1862, %v1869
    %v1872 = vunpack.c.l.s4 1983009808
    %v1873 = vunpack.c.0.s8 %v1872
    %v1874 = vlaneseq
    %v1875 = vshrl.u32 %v1874, 7
    %v1876 = vsub.s32 %v1873, %v1875
    %v1877 = vrot.slane %v1863, %v1876
    %v1878 = vcombine.low %v1854, %v1870
    %v1879 = vcombine.high %v1854, %v1870
    %v1881 = vunpack.c.l.s4 1934713408
    %v1882 = vunpack.c.0.s8 %v1881
    %v1883 = vlaneseq
    %v1884 = vshrl.u32 %v1883, 7
    %v1885 = vsub.s32 %v1882, %v1884
    %v1886 = vrot.slane %v1878, %v1885
    %v1888 = vunpack.c.l.s4 1934713408
    %v1889 = vunpack.c.0.s8 %v1888
    %v1890 = vlaneseq
    %v1891 = vshrl.u32 %v1890, 7
    %v1892 = vsub.s32 %v1889, %v1891
    %v1893 = vrot.slane %v1879, %v1892
    %v1894 = vcombine.low %v1861, %v1877
    %v1895 = vcombine.high %v1861, %v1877
    %v1897 = vunpack.c.l.s4 1934713408
    %v1898 = vunpack.c.0.s8 %v1897
    %v1899 = vlaneseq
    %v1900 = vshrl.u32 %v1899, 7
    %v1901 = vsub.s32 %v1898, %v1900
    %v1902 = vrot.slane %v1894, %v1901
    %v1904 = vunpack.c.l.s4 1934713408
    %v1905 = vunpack.c.0.s8 %v1904
    %v1906 = vlaneseq
    %v1907 = vshrl.u32 %v1906, 7
    %v1908 = vsub.s32 %v1905, %v1907
    %v1909 = vrot.slane %v1895, %v1908
    %v1910 = vcombine.high %v1886, 0.0
    %v1911 = vcombine.high %v1893, 0.0
    %v1912 = vcombine.high %v1902, 0.0
    %v1913 = vcombine.high %v1909, 0.0
    %v1914 = vcombine.low %v1886, %v1893
    %v1916 = vunpack.c.l.s4 1983009808
    %v1917 = vunpack.c.0.s8 %v1916
    %v1918 = vlaneseq
    %v1919 = vshrl.u32 %v1918, 7
    %v1920 = vsub.s32 %v1917, %v1919
    %v1921 = vrot.slane %v1914, %v1920
    %v1922 = vcombine.low %v1910, %v1911
    %v1924 = vunpack.c.l.s4 1983009808
    %v1925 = vunpack.c.0.s8 %v1924
    %v1926 = vlaneseq
    %v1927 = vshrl.u32 %v1926, 7
    %v1928 = vsub.s32 %v1925, %v1927
    %v1929 = vrot.slane %v1922, %v1928
    %v1930 = vcombine.low %v1902, %v1909
    %v1932 = vunpack.c.l.s4 1983009808
    %v1933 = vunpack.c.0.s8 %v1932
    %v1934 = vlaneseq
    %v1935 = vshrl.u32 %v1934, 7
    %v1936 = vsub.s32 %v1933, %v1935
    %v1937 = vrot.slane %v1930, %v1936
    %v1938 = vcombine.low %v1912, %v1913
    %v1940 = vunpack.c.l.s4 1983009808
    %v1941 = vunpack.c.0.s8 %v1940
    %v1942 = vlaneseq
    %v1943 = vshrl.u32 %v1942, 7
    %v1944 = vsub.s32 %v1941, %v1943
    %v1945 = vrot.slane %v1938, %v1944
    %v1946 = vcombine.low %v1921, %v1929
    %v1947 = vcombine.high %v1921, %v1929
    %v1949 = vunpack.c.l.s4 1934713408
    %v1950 = vunpack.c.0.s8 %v1949
    %v1951 = vlaneseq
    %v1952 = vshrl.u32 %v1951, 7
    %v1953 = vsub.s32 %v1950, %v1952
    %v1954 = vrot.slane %v1946, %v1953
    %v1956 = vunpack.c.l.s4 1934713408
    %v1957 = vunpack.c.0.s8 %v1956
    %v1958 = vlaneseq
    %v1959 = vshrl.u32 %v1958, 7
    %v1960 = vsub.s32 %v1957, %v1959
    %v1961 = vrot.slane %v1947, %v1960
    %v1962 = vcombine.low %v1937, %v1945
    %v1963 = vcombine.high %v1937, %v1945
    %v1965 = vunpack.c.l.s4 1934713408
    %v1966 = vunpack.c.0.s8 %v1965
    %v1967 = vlaneseq
    %v1968 = vshrl.u32 %v1967, 7
    %v1969 = vsub.s32 %v1966, %v1968
    %v1970 = vrot.slane %v1962, %v1969
    %v1972 = vunpack.c.l.s4 1934713408
    %v1973 = vunpack.c.0.s8 %v1972
    %v1974 = vlaneseq
    %v1975 = vshrl.u32 %v1974, 7
    %v1976 = vsub.s32 %v1973, %v1975
    %v1977 = vrot.slane %v1963, %v1976
    %v1978 = vcombine.low %v1954, %v1970
    %v1979 = vcombine.high %v1954, %v1970
    %v1980 = vcombine.low %v1961, %v1977
    %v1981 = vcombine.high %v1961, %v1977
    %1983 = vrot.lane.b32.xlu0 %v1979, 8
    %v1984 = vpop.permute.xlu0 %1983
    %1987 = vrot.lane.b32.xlu0 %v1980, 16
    %v1988 = vpop.permute.xlu0 %1987
    %1991 = vrot.lane.b32.xlu0 %v1981, 24
    %v1992 = vpop.permute.xlu0 %1991
    %v1994 = vsel %vm868, %v1978, %v1984
    %vm1995 = vcmask 130048
    %v1996 = vsel %vm1995, %v1994, %v1988
    %vm1997 = vcmask 195584
    %v1998 = vsel %vm1997, %v1996, %v1992
    %v1999 = vpack.c.bf16 %v1998, %v1998
    %v2001 = vlaneseq
    %v2002 = vshrl.u32 %v2001, 7
    %v2003 = vsub.s32 0, %v2002
    %v2004 = vrot.slane %v133, %v2003
    %v2010 = vunpack.c.l.b16 %v129
    %v2011 = vunpack.c.l.b16 %v130
    %v2012 = vunpack.c.l.b16 %v131
    %v2013 = vunpack.c.l.b16 %v132
    %v2014 = vpack.c.b16 %v2011, %v2010
    %v2015 = vpack.c.b16 %v2013, %v2012
    %v2019 = vsel %vm79, %v1999, 0
    %2021 = vmatprep.subr.bf16.mxu0 0
    %2022 = vmatpush1.bf16.msra.mxu0 0
    %2023 = vmatprep.subr.bf16.mxu0 0
    %2024 = vmatpush1.bf16.msra.mxu0 0
    %2025 = vmatprep.subr.bf16.mxu0 0
    %2026 = vmatpush1.bf16.msra.mxu0 0
    %2027 = vmatprep.subr.bf16.mxu0 0
    %2028 = vmatpush1.bf16.msra.mxu0 0
    %2029 = vmatprep.subr.bf16.mxu0 0
    %2030 = vmatpush1.bf16.msra.mxu0 0
    %2031 = vmatprep.subr.bf16.mxu0 0
    %2032 = vmatpush1.bf16.msra.mxu0 0
    %2033 = vmatprep.subr.bf16.mxu0 0
    %2034 = vmatpush1.bf16.msra.mxu0 %v2015
    %2035 = vmatprep.subr.bf16.mxu0 0
    %2036 = vmatpush1.bf16.msra.mxu0 %v2014
    %2037 = vmatprep.subr.bf16.mxu0 0
    %2038 = vmatpush2.bf16.msra.mxu0 0
    %2039 = vmatprep.subr.bf16.mxu0 0
    %2040 = vmatpush2.bf16.msra.mxu0 0
    %2041 = vmatprep.subr.bf16.mxu0 0
    %2042 = vmatpush2.bf16.msra.mxu0 0
    %2043 = vmatprep.subr.bf16.mxu0 0
    %2044 = vmatpush2.bf16.msra.mxu0 0
    %2045 = vmatprep.subr.bf16.mxu0 0
    %2046 = vmatpush2.bf16.msra.mxu0 0
    %2047 = vmatprep.subr.bf16.mxu0 0
    %2048 = vmatpush2.bf16.msra.mxu0 0
    %2049 = vmatprep.subr.bf16.mxu0 0
    %2050 = vmatpush2.bf16.msra.mxu0 0
    %2051 = vmatprep.subr.bf16.mxu0 0
    %2052 = vmatpush2.bf16.msra.mxu0 0
    %2053 = vmatprep.mubr.bf16.mxu0 0
    %2054 = vmatmul.mubr.bf16.gmra.mxu0 %v2019
    %v2055 = vpop.f32.mrf.mxu0
    %v2056 = vadd.f32 %v2004, %v2055
    %v2057 = vpop.f32.mrf.mxu0
    %v2058 = vpop.f32.mrf.mxu0
    %v2059 = vpop.f32.mrf.mxu0
    %2060 = vdwg.mxu0
    %2061 = vst.msk [vmem:[#allocation8] sm:$0xff] %vm79, %v2056
    %2063 = vrot.lane.b32.xlu0 %v121, 120
    %v2064 = vpop.permute.xlu0 %2063
    %2066 = vrot.lane.b32.xlu0 %v121, 112
    %v2067 = vpop.permute.xlu0 %2066
    %2069 = vrot.lane.b32.xlu0 %v121, 104
    %v2070 = vpop.permute.xlu0 %2069
    %v2072 = vcombine.low %v121, %v2067
    %v2073 = vcombine.high %v121, %v2067
    %v2075 = vunpack.c.l.s4 1983009808
    %v2076 = vunpack.c.0.s8 %v2075
    %v2077 = vlaneseq
    %v2078 = vshrl.u32 %v2077, 7
    %v2079 = vsub.s32 %v2076, %v2078
    %v2080 = vrot.slane %v2072, %v2079
    %v2082 = vunpack.c.l.s4 1983009808
    %v2083 = vunpack.c.0.s8 %v2082
    %v2084 = vlaneseq
    %v2085 = vshrl.u32 %v2084, 7
    %v2086 = vsub.s32 %v2083, %v2085
    %v2087 = vrot.slane %v2073, %v2086
    %v2088 = vcombine.low %v2064, %v2070
    %v2089 = vcombine.high %v2064, %v2070
    %v2091 = vunpack.c.l.s4 1983009808
    %v2092 = vunpack.c.0.s8 %v2091
    %v2093 = vlaneseq
    %v2094 = vshrl.u32 %v2093, 7
    %v2095 = vsub.s32 %v2092, %v2094
    %v2096 = vrot.slane %v2088, %v2095
    %v2098 = vunpack.c.l.s4 1983009808
    %v2099 = vunpack.c.0.s8 %v2098
    %v2100 = vlaneseq
    %v2101 = vshrl.u32 %v2100, 7
    %v2102 = vsub.s32 %v2099, %v2101
    %v2103 = vrot.slane %v2089, %v2102
    %v2104 = vcombine.low %v2080, %v2096
    %v2105 = vcombine.high %v2080, %v2096
    %v2107 = vunpack.c.l.s4 1934713408
    %v2108 = vunpack.c.0.s8 %v2107
    %v2109 = vlaneseq
    %v2110 = vshrl.u32 %v2109, 7
    %v2111 = vsub.s32 %v2108, %v2110
    %v2112 = vrot.slane %v2104, %v2111
    %v2114 = vunpack.c.l.s4 1934713408
    %v2115 = vunpack.c.0.s8 %v2114
    %v2116 = vlaneseq
    %v2117 = vshrl.u32 %v2116, 7
    %v2118 = vsub.s32 %v2115, %v2117
    %v2119 = vrot.slane %v2105, %v2118
    %v2120 = vcombine.low %v2087, %v2103
    %v2121 = vcombine.high %v2087, %v2103
    %v2123 = vunpack.c.l.s4 1934713408
    %v2124 = vunpack.c.0.s8 %v2123
    %v2125 = vlaneseq
    %v2126 = vshrl.u32 %v2125, 7
    %v2127 = vsub.s32 %v2124, %v2126
    %v2128 = vrot.slane %v2120, %v2127
    %v2130 = vunpack.c.l.s4 1934713408
    %v2131 = vunpack.c.0.s8 %v2130
    %v2132 = vlaneseq
    %v2133 = vshrl.u32 %v2132, 7
    %v2134 = vsub.s32 %v2131, %v2133
    %v2135 = vrot.slane %v2121, %v2134
    %v2136 = vcombine.high %v2112, 0.0
    %v2137 = vcombine.high %v2119, 0.0
    %v2138 = vcombine.high %v2128, 0.0
    %v2139 = vcombine.high %v2135, 0.0
    %2140 = vrot.lane.b32.xlu0 %v121, 96
    %v2141 = vpop.permute.xlu0 %2140
    %2142 = vrot.lane.b32.xlu0 %v2064, 96
    %v2143 = vpop.permute.xlu0 %2142
    %2144 = vrot.lane.b32.xlu0 %v2067, 96
    %v2145 = vpop.permute.xlu0 %2144
    %2146 = vrot.lane.b32.xlu0 %v2070, 96
    %v2147 = vpop.permute.xlu0 %2146
    %v2152 = vcombine.low %v2141, %v2145
    %v2153 = vcombine.high %v2141, %v2145
    %v2155 = vunpack.c.l.s4 1983009808
    %v2156 = vunpack.c.0.s8 %v2155
    %v2157 = vlaneseq
    %v2158 = vshrl.u32 %v2157, 7
    %v2159 = vsub.s32 %v2156, %v2158
    %v2160 = vrot.slane %v2152, %v2159
    %v2162 = vunpack.c.l.s4 1983009808
    %v2163 = vunpack.c.0.s8 %v2162
    %v2164 = vlaneseq
    %v2165 = vshrl.u32 %v2164, 7
    %v2166 = vsub.s32 %v2163, %v2165
    %v2167 = vrot.slane %v2153, %v2166
    %v2168 = vcombine.low %v2143, %v2147
    %v2169 = vcombine.high %v2143, %v2147
    %v2171 = vunpack.c.l.s4 1983009808
    %v2172 = vunpack.c.0.s8 %v2171
    %v2173 = vlaneseq
    %v2174 = vshrl.u32 %v2173, 7
    %v2175 = vsub.s32 %v2172, %v2174
    %v2176 = vrot.slane %v2168, %v2175
    %v2178 = vunpack.c.l.s4 1983009808
    %v2179 = vunpack.c.0.s8 %v2178
    %v2180 = vlaneseq
    %v2181 = vshrl.u32 %v2180, 7
    %v2182 = vsub.s32 %v2179, %v2181
    %v2183 = vrot.slane %v2169, %v2182
    %v2184 = vcombine.low %v2160, %v2176
    %v2185 = vcombine.high %v2160, %v2176
    %v2187 = vunpack.c.l.s4 1934713408
    %v2188 = vunpack.c.0.s8 %v2187
    %v2189 = vlaneseq
    %v2190 = vshrl.u32 %v2189, 7
    %v2191 = vsub.s32 %v2188, %v2190
    %v2192 = vrot.slane %v2184, %v2191
    %v2194 = vunpack.c.l.s4 1934713408
    %v2195 = vunpack.c.0.s8 %v2194
    %v2196 = vlaneseq
    %v2197 = vshrl.u32 %v2196, 7
    %v2198 = vsub.s32 %v2195, %v2197
    %v2199 = vrot.slane %v2185, %v2198
    %v2200 = vcombine.low %v2167, %v2183
    %v2201 = vcombine.high %v2167, %v2183
    %v2203 = vunpack.c.l.s4 1934713408
    %v2204 = vunpack.c.0.s8 %v2203
    %v2205 = vlaneseq
    %v2206 = vshrl.u32 %v2205, 7
    %v2207 = vsub.s32 %v2204, %v2206
    %v2208 = vrot.slane %v2200, %v2207
    %v2210 = vunpack.c.l.s4 1934713408
    %v2211 = vunpack.c.0.s8 %v2210
    %v2212 = vlaneseq
    %v2213 = vshrl.u32 %v2212, 7
    %v2214 = vsub.s32 %v2211, %v2213
    %v2215 = vrot.slane %v2201, %v2214
    %v2216 = vcombine.high %v2192, 0.0
    %v2217 = vcombine.high %v2199, 0.0
    %v2218 = vcombine.high %v2208, 0.0
    %v2219 = vcombine.high %v2215, 0.0
    %2220 = vrot.lane.b32.xlu0 %v121, 64
    %v2221 = vpop.permute.xlu0 %2220
    %2222 = vrot.lane.b32.xlu0 %v2064, 64
    %v2223 = vpop.permute.xlu0 %2222
    %2224 = vrot.lane.b32.xlu0 %v2067, 64
    %v2225 = vpop.permute.xlu0 %2224
    %2226 = vrot.lane.b32.xlu0 %v2070, 64
    %v2227 = vpop.permute.xlu0 %2226
    %v2232 = vcombine.low %v2221, %v2225
    %v2233 = vcombine.high %v2221, %v2225
    %v2235 = vunpack.c.l.s4 1983009808
    %v2236 = vunpack.c.0.s8 %v2235
    %v2237 = vlaneseq
    %v2238 = vshrl.u32 %v2237, 7
    %v2239 = vsub.s32 %v2236, %v2238
    %v2240 = vrot.slane %v2232, %v2239
    %v2242 = vunpack.c.l.s4 1983009808
    %v2243 = vunpack.c.0.s8 %v2242
    %v2244 = vlaneseq
    %v2245 = vshrl.u32 %v2244, 7
    %v2246 = vsub.s32 %v2243, %v2245
    %v2247 = vrot.slane %v2233, %v2246
    %v2248 = vcombine.low %v2223, %v2227
    %v2249 = vcombine.high %v2223, %v2227
    %v2251 = vunpack.c.l.s4 1983009808
    %v2252 = vunpack.c.0.s8 %v2251
    %v2253 = vlaneseq
    %v2254 = vshrl.u32 %v2253, 7
    %v2255 = vsub.s32 %v2252, %v2254
    %v2256 = vrot.slane %v2248, %v2255
    %v2258 = vunpack.c.l.s4 1983009808
    %v2259 = vunpack.c.0.s8 %v2258
    %v2260 = vlaneseq
    %v2261 = vshrl.u32 %v2260, 7
    %v2262 = vsub.s32 %v2259, %v2261
    %v2263 = vrot.slane %v2249, %v2262
    %v2264 = vcombine.low %v2240, %v2256
    %v2265 = vcombine.high %v2240, %v2256
    %v2267 = vunpack.c.l.s4 1934713408
    %v2268 = vunpack.c.0.s8 %v2267
    %v2269 = vlaneseq
    %v2270 = vshrl.u32 %v2269, 7
    %v2271 = vsub.s32 %v2268, %v2270
    %v2272 = vrot.slane %v2264, %v2271
    %v2274 = vunpack.c.l.s4 1934713408
    %v2275 = vunpack.c.0.s8 %v2274
    %v2276 = vlaneseq
    %v2277 = vshrl.u32 %v2276, 7
    %v2278 = vsub.s32 %v2275, %v2277
    %v2279 = vrot.slane %v2265, %v2278
    %v2280 = vcombine.low %v2247, %v2263
    %v2281 = vcombine.high %v2247, %v2263
    %v2283 = vunpack.c.l.s4 1934713408
    %v2284 = vunpack.c.0.s8 %v2283
    %v2285 = vlaneseq
    %v2286 = vshrl.u32 %v2285, 7
    %v2287 = vsub.s32 %v2284, %v2286
    %v2288 = vrot.slane %v2280, %v2287
    %v2290 = vunpack.c.l.s4 1934713408
    %v2291 = vunpack.c.0.s8 %v2290
    %v2292 = vlaneseq
    %v2293 = vshrl.u32 %v2292, 7
    %v2294 = vsub.s32 %v2291, %v2293
    %v2295 = vrot.slane %v2281, %v2294
    %v2296 = vcombine.high %v2272, 0.0
    %v2297 = vcombine.high %v2279, 0.0
    %v2298 = vcombine.high %v2288, 0.0
    %v2299 = vcombine.high %v2295, 0.0
    %v2300 = vpack.c.bf16 %v2112, %v2112
    %v2301 = vpack.c.bf16 %v2136, %v2136
    %v2302 = vpack.c.bf16 %v2119, %v2119
    %v2303 = vpack.c.bf16 %v2137, %v2137
    %v2304 = vpack.c.bf16 %v2128, %v2128
    %v2305 = vpack.c.bf16 %v2138, %v2138
    %v2306 = vpack.c.bf16 %v2135, %v2135
    %v2307 = vpack.c.bf16 %v2139, %v2139
    %v2308 = vpack.c.bf16 %v2192, %v2192
    %v2309 = vpack.c.bf16 %v2216, %v2216
    %v2310 = vpack.c.bf16 %v2199, %v2199
    %v2311 = vpack.c.bf16 %v2217, %v2217
    %v2312 = vpack.c.bf16 %v2208, %v2208
    %v2313 = vpack.c.bf16 %v2218, %v2218
    %v2314 = vpack.c.bf16 %v2215, %v2215
    %v2315 = vpack.c.bf16 %v2219, %v2219
    %v2316 = vcombine.low %v2300, %v2304
    %v2318 = vunpack.c.l.s4 1983009808
    %v2319 = vunpack.c.0.s8 %v2318
    %v2320 = vlaneseq
    %v2321 = vshrl.u32 %v2320, 7
    %v2322 = vsub.s32 %v2319, %v2321
    %v2323 = vrot.slane %v2316, %v2322
    %v2324 = vcombine.low %v2302, %v2306
    %v2326 = vunpack.c.l.s4 1983009808
    %v2327 = vunpack.c.0.s8 %v2326
    %v2328 = vlaneseq
    %v2329 = vshrl.u32 %v2328, 7
    %v2330 = vsub.s32 %v2327, %v2329
    %v2331 = vrot.slane %v2324, %v2330
    %v2332 = vcombine.low %v2323, %v2331
    %v2334 = vunpack.c.l.s4 1934713408
    %v2335 = vunpack.c.0.s8 %v2334
    %v2336 = vlaneseq
    %v2337 = vshrl.u32 %v2336, 7
    %v2338 = vsub.s32 %v2335, %v2337
    %v2339 = vrot.slane %v2332, %v2338
    %v2340 = vcombine.high %v2339, 0
    %v2341 = vcombine.low %v2301, %v2305
    %v2343 = vunpack.c.l.s4 1983009808
    %v2344 = vunpack.c.0.s8 %v2343
    %v2345 = vlaneseq
    %v2346 = vshrl.u32 %v2345, 7
    %v2347 = vsub.s32 %v2344, %v2346
    %v2348 = vrot.slane %v2341, %v2347
    %v2349 = vcombine.low %v2303, %v2307
    %v2351 = vunpack.c.l.s4 1983009808
    %v2352 = vunpack.c.0.s8 %v2351
    %v2353 = vlaneseq
    %v2354 = vshrl.u32 %v2353, 7
    %v2355 = vsub.s32 %v2352, %v2354
    %v2356 = vrot.slane %v2349, %v2355
    %v2357 = vcombine.low %v2348, %v2356
    %v2359 = vunpack.c.l.s4 1934713408
    %v2360 = vunpack.c.0.s8 %v2359
    %v2361 = vlaneseq
    %v2362 = vshrl.u32 %v2361, 7
    %v2363 = vsub.s32 %v2360, %v2362
    %v2364 = vrot.slane %v2357, %v2363
    %v2365 = vcombine.high %v2364, 0
    %v2368 = vpack.i.b16 %v2364, %v2339
    %v2369 = vshrl.u32 %v2339, 16
    %v2370 = vshrl.u32 %v2364, 16
    %v2371 = vpack.i.b16 %v2370, %v2369
    %v2374 = vpack.i.b16 %v2365, %v2340
    %v2375 = vshrl.u32 %v2340, 16
    %v2376 = vshrl.u32 %v2365, 16
    %v2377 = vpack.i.b16 %v2376, %v2375
    %2378 = vxpose.xlu0.c.b16.start [1/8] %v2308, 128
    %2379 = vxpose.xlu0.c.b16.cont [2/8] 0, 128
    %2380 = vxpose.xlu0.c.b16.cont [3/8] 0, 128
    %2381 = vxpose.xlu0.c.b16.cont [4/8] 0, 128
    %2382 = vxpose.xlu0.c.b16.cont [5/8] 0, 128
    %2383 = vxpose.xlu0.c.b16.cont [6/8] 0, 128
    %2384 = vxpose.xlu0.c.b16.cont [7/8] 0, 128
    %2385 = vxpose.xlu0.c.b16.end [8/8] 0, 128
    %v2386 = vpop.trf.xlu0
    %v2387 = vpop.trf.xlu0
    %v2388 = vpop.trf.xlu0
    %v2389 = vpop.trf.xlu0
    %v2390 = vpop.trf.xlu0
    %v2391 = vpop.trf.xlu0
    %v2392 = vpop.trf.xlu0
    %v2393 = vpop.trf.xlu0
    %2394 = vxpose.xlu0.c.b16.start [1/8] %v2309, 128
    %2395 = vxpose.xlu0.c.b16.cont [2/8] 0, 128
    %2396 = vxpose.xlu0.c.b16.cont [3/8] 0, 128
    %2397 = vxpose.xlu0.c.b16.cont [4/8] 0, 128
    %2398 = vxpose.xlu0.c.b16.cont [5/8] 0, 128
    %2399 = vxpose.xlu0.c.b16.cont [6/8] 0, 128
    %2400 = vxpose.xlu0.c.b16.cont [7/8] 0, 128
    %2401 = vxpose.xlu0.c.b16.end [8/8] 0, 128
    %v2402 = vpop.trf.xlu0
    %v2403 = vpop.trf.xlu0
    %v2404 = vpop.trf.xlu0
    %v2405 = vpop.trf.xlu0
    %v2406 = vpop.trf.xlu0
    %v2407 = vpop.trf.xlu0
    %v2408 = vpop.trf.xlu0
    %v2409 = vpop.trf.xlu0
    %2410 = vxpose.xlu0.c.b16.start [1/8] %v2310, 128
    %2411 = vxpose.xlu0.c.b16.cont [2/8] 0, 128
    %2412 = vxpose.xlu0.c.b16.cont [3/8] 0, 128
    %2413 = vxpose.xlu0.c.b16.cont [4/8] 0, 128
    %2414 = vxpose.xlu0.c.b16.cont [5/8] 0, 128
    %2415 = vxpose.xlu0.c.b16.cont [6/8] 0, 128
    %2416 = vxpose.xlu0.c.b16.cont [7/8] 0, 128
    %2417 = vxpose.xlu0.c.b16.end [8/8] 0, 128
    %v2418 = vpop.trf.xlu0
    %v2419 = vpop.trf.xlu0
    %v2420 = vpop.trf.xlu0
    %v2421 = vpop.trf.xlu0
    %v2422 = vpop.trf.xlu0
    %v2423 = vpop.trf.xlu0
    %v2424 = vpop.trf.xlu0
    %v2425 = vpop.trf.xlu0
    %2426 = vxpose.xlu0.c.b16.start [1/8] %v2311, 128
    %2427 = vxpose.xlu0.c.b16.cont [2/8] 0, 128
    %2428 = vxpose.xlu0.c.b16.cont [3/8] 0, 128
    %2429 = vxpose.xlu0.c.b16.cont [4/8] 0, 128
    %2430 = vxpose.xlu0.c.b16.cont [5/8] 0, 128
    %2431 = vxpose.xlu0.c.b16.cont [6/8] 0, 128
    %2432 = vxpose.xlu0.c.b16.cont [7/8] 0, 128
    %2433 = vxpose.xlu0.c.b16.end [8/8] 0, 128
    %v2434 = vpop.trf.xlu0
    %v2435 = vpop.trf.xlu0
    %v2436 = vpop.trf.xlu0
    %v2437 = vpop.trf.xlu0
    %v2438 = vpop.trf.xlu0
    %v2439 = vpop.trf.xlu0
    %v2440 = vpop.trf.xlu0
    %v2441 = vpop.trf.xlu0
    %2442 = vxpose.xlu0.c.b16.start [1/8] %v2312, 128
    %2443 = vxpose.xlu0.c.b16.cont [2/8] 0, 128
    %2444 = vxpose.xlu0.c.b16.cont [3/8] 0, 128
    %2445 = vxpose.xlu0.c.b16.cont [4/8] 0, 128
    %2446 = vxpose.xlu0.c.b16.cont [5/8] 0, 128
    %2447 = vxpose.xlu0.c.b16.cont [6/8] 0, 128
    %2448 = vxpose.xlu0.c.b16.cont [7/8] 0, 128
    %2449 = vxpose.xlu0.c.b16.end [8/8] 0, 128
    %v2450 = vpop.trf.xlu0
    %v2451 = vpop.trf.xlu0
    %v2452 = vpop.trf.xlu0
    %v2453 = vpop.trf.xlu0
    %v2454 = vpop.trf.xlu0
    %v2455 = vpop.trf.xlu0
    %v2456 = vpop.trf.xlu0
    %v2457 = vpop.trf.xlu0
    %2458 = vxpose.xlu0.c.b16.start [1/8] %v2313, 128
    %2459 = vxpose.xlu0.c.b16.cont [2/8] 0, 128
    %2460 = vxpose.xlu0.c.b16.cont [3/8] 0, 128
    %2461 = vxpose.xlu0.c.b16.cont [4/8] 0, 128
    %2462 = vxpose.xlu0.c.b16.cont [5/8] 0, 128
    %2463 = vxpose.xlu0.c.b16.cont [6/8] 0, 128
    %2464 = vxpose.xlu0.c.b16.cont [7/8] 0, 128
    %2465 = vxpose.xlu0.c.b16.end [8/8] 0, 128
    %v2466 = vpop.trf.xlu0
    %v2467 = vpop.trf.xlu0
    %v2468 = vpop.trf.xlu0
    %v2469 = vpop.trf.xlu0
    %v2470 = vpop.trf.xlu0
    %v2471 = vpop.trf.xlu0
    %v2472 = vpop.trf.xlu0
    %v2473 = vpop.trf.xlu0
    %2474 = vxpose.xlu0.c.b16.start [1/8] %v2314, 128
    %2475 = vxpose.xlu0.c.b16.cont [2/8] 0, 128
    %2476 = vxpose.xlu0.c.b16.cont [3/8] 0, 128
    %2477 = vxpose.xlu0.c.b16.cont [4/8] 0, 128
    %2478 = vxpose.xlu0.c.b16.cont [5/8] 0, 128
    %2479 = vxpose.xlu0.c.b16.cont [6/8] 0, 128
    %2480 = vxpose.xlu0.c.b16.cont [7/8] 0, 128
    %2481 = vxpose.xlu0.c.b16.end [8/8] 0, 128
    %v2482 = vpop.trf.xlu0
    %v2483 = vpop.trf.xlu0
    %v2484 = vpop.trf.xlu0
    %v2485 = vpop.trf.xlu0
    %v2486 = vpop.trf.xlu0
    %v2487 = vpop.trf.xlu0
    %v2488 = vpop.trf.xlu0
    %v2489 = vpop.trf.xlu0
    %2490 = vxpose.xlu0.c.b16.start [1/8] %v2315, 128
    %2491 = vxpose.xlu0.c.b16.cont [2/8] 0, 128
    %2492 = vxpose.xlu0.c.b16.cont [3/8] 0, 128
    %2493 = vxpose.xlu0.c.b16.cont [4/8] 0, 128
    %2494 = vxpose.xlu0.c.b16.cont [5/8] 0, 128
    %2495 = vxpose.xlu0.c.b16.cont [6/8] 0, 128
    %2496 = vxpose.xlu0.c.b16.cont [7/8] 0, 128
    %2497 = vxpose.xlu0.c.b16.end [8/8] 0, 128
    %v2498 = vpop.trf.xlu0
    %v2499 = vpop.trf.xlu0
    %v2500 = vpop.trf.xlu0
    %v2501 = vpop.trf.xlu0
    %v2502 = vpop.trf.xlu0
    %v2503 = vpop.trf.xlu0
    %v2504 = vpop.trf.xlu0
    %v2505 = vpop.trf.xlu0
    %v2506 = vcombine.low %v2386, %v2450
    %v2508 = vunpack.c.l.s4 1983009808
    %v2509 = vunpack.c.0.s8 %v2508
    %v2510 = vlaneseq
    %v2511 = vshrl.u32 %v2510, 7
    %v2512 = vsub.s32 %v2509, %v2511
    %v2513 = vrot.slane %v2506, %v2512
    %v2514 = vcombine.low %v2418, %v2482
    %v2516 = vunpack.c.l.s4 1983009808
    %v2517 = vunpack.c.0.s8 %v2516
    %v2518 = vlaneseq
    %v2519 = vshrl.u32 %v2518, 7
    %v2520 = vsub.s32 %v2517, %v2519
    %v2521 = vrot.slane %v2514, %v2520
    %v2522 = vcombine.low %v2513, %v2521
    %v2523 = vcombine.high %v2513, %v2521
    %v2525 = vunpack.c.l.s4 1934713408
    %v2526 = vunpack.c.0.s8 %v2525
    %v2527 = vlaneseq
    %v2528 = vshrl.u32 %v2527, 7
    %v2529 = vsub.s32 %v2526, %v2528
    %v2530 = vrot.slane %v2522, %v2529
    %v2532 = vunpack.c.l.s4 1934713408
    %v2533 = vunpack.c.0.s8 %v2532
    %v2534 = vlaneseq
    %v2535 = vshrl.u32 %v2534, 7
    %v2536 = vsub.s32 %v2533, %v2535
    %v2537 = vrot.slane %v2523, %v2536
    %v2538 = vcombine.high %v2530, 0
    %v2539 = vcombine.high %v2537, 0
    %v2540 = vcombine.low %v2402, %v2466
    %v2542 = vunpack.c.l.s4 1983009808
    %v2543 = vunpack.c.0.s8 %v2542
    %v2544 = vlaneseq
    %v2545 = vshrl.u32 %v2544, 7
    %v2546 = vsub.s32 %v2543, %v2545
    %v2547 = vrot.slane %v2540, %v2546
    %v2548 = vcombine.low %v2434, %v2498
    %v2550 = vunpack.c.l.s4 1983009808
    %v2551 = vunpack.c.0.s8 %v2550
    %v2552 = vlaneseq
    %v2553 = vshrl.u32 %v2552, 7
    %v2554 = vsub.s32 %v2551, %v2553
    %v2555 = vrot.slane %v2548, %v2554
    %v2556 = vcombine.low %v2547, %v2555
    %v2557 = vcombine.high %v2547, %v2555
    %v2559 = vunpack.c.l.s4 1934713408
    %v2560 = vunpack.c.0.s8 %v2559
    %v2561 = vlaneseq
    %v2562 = vshrl.u32 %v2561, 7
    %v2563 = vsub.s32 %v2560, %v2562
    %v2564 = vrot.slane %v2556, %v2563
    %v2566 = vunpack.c.l.s4 1934713408
    %v2567 = vunpack.c.0.s8 %v2566
    %v2568 = vlaneseq
    %v2569 = vshrl.u32 %v2568, 7
    %v2570 = vsub.s32 %v2567, %v2569
    %v2571 = vrot.slane %v2557, %v2570
    %v2572 = vcombine.high %v2564, 0
    %v2573 = vcombine.high %v2571, 0
    %v2576 = vpack.i.b16 %v2564, %v2530
    %v2578 = vshrl.u32 %v2530, 16
    %v2579 = vshrl.u32 %v2564, 16
    %v2580 = vpack.i.b16 %v2579, %v2578
    %v2584 = vpack.i.b16 %v2572, %v2538
    %v2586 = vshrl.u32 %v2538, 16
    %v2587 = vshrl.u32 %v2572, 16
    %v2588 = vpack.i.b16 %v2587, %v2586
    %v2592 = vpack.i.b16 %v2571, %v2537
    %v2594 = vshrl.u32 %v2537, 16
    %v2595 = vshrl.u32 %v2571, 16
    %v2596 = vpack.i.b16 %v2595, %v2594
    %v2600 = vpack.i.b16 %v2573, %v2539
    %v2602 = vshrl.u32 %v2539, 16
    %v2603 = vshrl.u32 %v2573, 16
    %v2604 = vpack.i.b16 %v2603, %v2602
    %2606 = vxpose.xlu0.c.b16.start [1/8] %v2576, 128
    %2607 = vxpose.xlu0.c.b16.cont [2/8] 0, 128
    %2608 = vxpose.xlu0.c.b16.cont [3/8] 0, 128
    %2609 = vxpose.xlu0.c.b16.cont [4/8] 0, 128
    %2610 = vxpose.xlu0.c.b16.cont [5/8] 0, 128
    %2611 = vxpose.xlu0.c.b16.cont [6/8] 0, 128
    %2612 = vxpose.xlu0.c.b16.cont [7/8] 0, 128
    %2613 = vxpose.xlu0.c.b16.end [8/8] 0, 128
    %v2614 = vpop.trf.xlu0
    %v2615 = vpop.trf.xlu0
    %v2616 = vpop.trf.xlu0
    %v2617 = vpop.trf.xlu0
    %v2618 = vpop.trf.xlu0
    %v2619 = vpop.trf.xlu0
    %v2620 = vpop.trf.xlu0
    %v2621 = vpop.trf.xlu0
    %2622 = vxpose.xlu0.c.b16.start [1/8] %v2580, 128
    %2623 = vxpose.xlu0.c.b16.cont [2/8] 0, 128
    %2624 = vxpose.xlu0.c.b16.cont [3/8] 0, 128
    %2625 = vxpose.xlu0.c.b16.cont [4/8] 0, 128
    %2626 = vxpose.xlu0.c.b16.cont [5/8] 0, 128
    %2627 = vxpose.xlu0.c.b16.cont [6/8] 0, 128
    %2628 = vxpose.xlu0.c.b16.cont [7/8] 0, 128
    %2629 = vxpose.xlu0.c.b16.end [8/8] 0, 128
    %v2630 = vpop.trf.xlu0
    %v2631 = vpop.trf.xlu0
    %v2632 = vpop.trf.xlu0
    %v2633 = vpop.trf.xlu0
    %v2634 = vpop.trf.xlu0
    %v2635 = vpop.trf.xlu0
    %v2636 = vpop.trf.xlu0
    %v2637 = vpop.trf.xlu0
    %2638 = vxpose.xlu0.c.b16.start [1/8] %v2584, 128
    %2639 = vxpose.xlu0.c.b16.cont [2/8] 0, 128
    %2640 = vxpose.xlu0.c.b16.cont [3/8] 0, 128
    %2641 = vxpose.xlu0.c.b16.cont [4/8] 0, 128
    %2642 = vxpose.xlu0.c.b16.cont [5/8] 0, 128
    %2643 = vxpose.xlu0.c.b16.cont [6/8] 0, 128
    %2644 = vxpose.xlu0.c.b16.cont [7/8] 0, 128
    %2645 = vxpose.xlu0.c.b16.end [8/8] 0, 128
    %v2646 = vpop.trf.xlu0
    %v2647 = vpop.trf.xlu0
    %v2648 = vpop.trf.xlu0
    %v2649 = vpop.trf.xlu0
    %v2650 = vpop.trf.xlu0
    %v2651 = vpop.trf.xlu0
    %v2652 = vpop.trf.xlu0
    %v2653 = vpop.trf.xlu0
    %2654 = vxpose.xlu0.c.b16.start [1/8] %v2588, 128
    %2655 = vxpose.xlu0.c.b16.cont [2/8] 0, 128
    %2656 = vxpose.xlu0.c.b16.cont [3/8] 0, 128
    %2657 = vxpose.xlu0.c.b16.cont [4/8] 0, 128
    %2658 = vxpose.xlu0.c.b16.cont [5/8] 0, 128
    %2659 = vxpose.xlu0.c.b16.cont [6/8] 0, 128
    %2660 = vxpose.xlu0.c.b16.cont [7/8] 0, 128
    %2661 = vxpose.xlu0.c.b16.end [8/8] 0, 128
    %v2662 = vpop.trf.xlu0
    %v2663 = vpop.trf.xlu0
    %v2664 = vpop.trf.xlu0
    %v2665 = vpop.trf.xlu0
    %v2666 = vpop.trf.xlu0
    %v2667 = vpop.trf.xlu0
    %v2668 = vpop.trf.xlu0
    %v2669 = vpop.trf.xlu0
    %2670 = vxpose.xlu0.c.b16.start [1/8] %v2592, 128
    %2671 = vxpose.xlu0.c.b16.cont [2/8] 0, 128
    %2672 = vxpose.xlu0.c.b16.cont [3/8] 0, 128
    %2673 = vxpose.xlu0.c.b16.cont [4/8] 0, 128
    %2674 = vxpose.xlu0.c.b16.cont [5/8] 0, 128
    %2675 = vxpose.xlu0.c.b16.cont [6/8] 0, 128
    %2676 = vxpose.xlu0.c.b16.cont [7/8] 0, 128
    %2677 = vxpose.xlu0.c.b16.end [8/8] 0, 128
    %v2678 = vpop.trf.xlu0
    %v2679 = vpop.trf.xlu0
    %v2680 = vpop.trf.xlu0
    %v2681 = vpop.trf.xlu0
    %v2682 = vpop.trf.xlu0
    %v2683 = vpop.trf.xlu0
    %v2684 = vpop.trf.xlu0
    %v2685 = vpop.trf.xlu0
    %2686 = vxpose.xlu0.c.b16.start [1/8] %v2596, 128
    %2687 = vxpose.xlu0.c.b16.cont [2/8] 0, 128
    %2688 = vxpose.xlu0.c.b16.cont [3/8] 0, 128
    %2689 = vxpose.xlu0.c.b16.cont [4/8] 0, 128
    %2690 = vxpose.xlu0.c.b16.cont [5/8] 0, 128
    %2691 = vxpose.xlu0.c.b16.cont [6/8] 0, 128
    %2692 = vxpose.xlu0.c.b16.cont [7/8] 0, 128
    %2693 = vxpose.xlu0.c.b16.end [8/8] 0, 128
    %v2694 = vpop.trf.xlu0
    %v2695 = vpop.trf.xlu0
    %v2696 = vpop.trf.xlu0
    %v2697 = vpop.trf.xlu0
    %v2698 = vpop.trf.xlu0
    %v2699 = vpop.trf.xlu0
    %v2700 = vpop.trf.xlu0
    %v2701 = vpop.trf.xlu0
    %2702 = vxpose.xlu0.c.b16.start [1/8] %v2600, 128
    %2703 = vxpose.xlu0.c.b16.cont [2/8] 0, 128
    %2704 = vxpose.xlu0.c.b16.cont [3/8] 0, 128
    %2705 = vxpose.xlu0.c.b16.cont [4/8] 0, 128
    %2706 = vxpose.xlu0.c.b16.cont [5/8] 0, 128
    %2707 = vxpose.xlu0.c.b16.cont [6/8] 0, 128
    %2708 = vxpose.xlu0.c.b16.cont [7/8] 0, 128
    %2709 = vxpose.xlu0.c.b16.end [8/8] 0, 128
    %v2710 = vpop.trf.xlu0
    %v2711 = vpop.trf.xlu0
    %v2712 = vpop.trf.xlu0
    %v2713 = vpop.trf.xlu0
    %v2714 = vpop.trf.xlu0
    %v2715 = vpop.trf.xlu0
    %v2716 = vpop.trf.xlu0
    %v2717 = vpop.trf.xlu0
    %2718 = vxpose.xlu0.c.b16.start [1/8] %v2604, 128
    %2719 = vxpose.xlu0.c.b16.cont [2/8] 0, 128
    %2720 = vxpose.xlu0.c.b16.cont [3/8] 0, 128
    %2721 = vxpose.xlu0.c.b16.cont [4/8] 0, 128
    %2722 = vxpose.xlu0.c.b16.cont [5/8] 0, 128
    %2723 = vxpose.xlu0.c.b16.cont [6/8] 0, 128
    %2724 = vxpose.xlu0.c.b16.cont [7/8] 0, 128
    %2725 = vxpose.xlu0.c.b16.end [8/8] 0, 128
    %v2726 = vpop.trf.xlu0
    %v2727 = vpop.trf.xlu0
    %v2728 = vpop.trf.xlu0
    %v2729 = vpop.trf.xlu0
    %v2730 = vpop.trf.xlu0
    %v2731 = vpop.trf.xlu0
    %v2732 = vpop.trf.xlu0
    %v2733 = vpop.trf.xlu0
    %v2734 = vcombine.low %v2614, %v2678
    %v2736 = vunpack.c.l.s4 1983009808
    %v2737 = vunpack.c.0.s8 %v2736
    %v2738 = vlaneseq
    %v2739 = vshrl.u32 %v2738, 7
    %v2740 = vsub.s32 %v2737, %v2739
    %v2741 = vrot.slane %v2734, %v2740
    %v2742 = vcombine.low %v2646, %v2710
    %v2744 = vunpack.c.l.s4 1983009808
    %v2745 = vunpack.c.0.s8 %v2744
    %v2746 = vlaneseq
    %v2747 = vshrl.u32 %v2746, 7
    %v2748 = vsub.s32 %v2745, %v2747
    %v2749 = vrot.slane %v2742, %v2748
    %v2750 = vcombine.low %v2741, %v2749
    %v2752 = vunpack.c.l.s4 1934713408
    %v2753 = vunpack.c.0.s8 %v2752
    %v2754 = vlaneseq
    %v2755 = vshrl.u32 %v2754, 7
    %v2756 = vsub.s32 %v2753, %v2755
    %v2757 = vrot.slane %v2750, %v2756
    %v2758 = vcombine.high %v2757, 0
    %v2759 = vcombine.low %v2630, %v2694
    %v2761 = vunpack.c.l.s4 1983009808
    %v2762 = vunpack.c.0.s8 %v2761
    %v2763 = vlaneseq
    %v2764 = vshrl.u32 %v2763, 7
    %v2765 = vsub.s32 %v2762, %v2764
    %v2766 = vrot.slane %v2759, %v2765
    %v2767 = vcombine.low %v2662, %v2726
    %v2769 = vunpack.c.l.s4 1983009808
    %v2770 = vunpack.c.0.s8 %v2769
    %v2771 = vlaneseq
    %v2772 = vshrl.u32 %v2771, 7
    %v2773 = vsub.s32 %v2770, %v2772
    %v2774 = vrot.slane %v2767, %v2773
    %v2775 = vcombine.low %v2766, %v2774
    %v2777 = vunpack.c.l.s4 1934713408
    %v2778 = vunpack.c.0.s8 %v2777
    %v2779 = vlaneseq
    %v2780 = vshrl.u32 %v2779, 7
    %v2781 = vsub.s32 %v2778, %v2780
    %v2782 = vrot.slane %v2775, %v2781
    %v2783 = vcombine.high %v2782, 0
    %v2786 = vpack.i.b16 %v2782, %v2757
    %v2787 = vshrl.u32 %v2757, 16
    %v2788 = vshrl.u32 %v2782, 16
    %v2789 = vpack.i.b16 %v2788, %v2787
    %v2792 = vpack.i.b16 %v2783, %v2758
    %v2793 = vshrl.u32 %v2758, 16
    %v2794 = vshrl.u32 %v2783, 16
    %v2795 = vpack.i.b16 %v2794, %v2793
    %v2797 = vsel %vm868, %v2368, 0
    %v2800 = vsel %vm872, %v2786, 0
    %2802 = vmatprep.subr.bf16.mxu0 0
    %2803 = vmatpush1.bf16.msra.mxu0 0
    %2804 = vmatprep.subr.bf16.mxu0 0
    %2805 = vmatpush1.bf16.msra.mxu0 0
    %2806 = vmatprep.subr.bf16.mxu0 0
    %2807 = vmatpush1.bf16.msra.mxu0 0
    %2808 = vmatprep.subr.bf16.mxu0 0
    %2809 = vmatpush1.bf16.msra.mxu0 0
    %2810 = vmatprep.subr.bf16.mxu0 0
    %2811 = vmatpush1.bf16.msra.mxu0 0
    %2812 = vmatprep.subr.bf16.mxu0 0
    %2813 = vmatpush1.bf16.msra.mxu0 0
    %2814 = vmatprep.subr.bf16.mxu0 0
    %2815 = vmatpush1.bf16.msra.mxu0 0
    %2816 = vmatprep.subr.bf16.mxu0 0
    %2817 = vmatpush1.bf16.msra.mxu0 %v2800
    %2818 = vmatprep.subr.bf16.mxu0 0
    %2819 = vmatpush2.bf16.msra.mxu0 0
    %2820 = vmatprep.subr.bf16.mxu0 0
    %2821 = vmatpush2.bf16.msra.mxu0 0
    %2822 = vmatprep.subr.bf16.mxu0 0
    %2823 = vmatpush2.bf16.msra.mxu0 0
    %2824 = vmatprep.subr.bf16.mxu0 0
    %2825 = vmatpush2.bf16.msra.mxu0 0
    %2826 = vmatprep.subr.bf16.mxu0 0
    %2827 = vmatpush2.bf16.msra.mxu0 0
    %2828 = vmatprep.subr.bf16.mxu0 0
    %2829 = vmatpush2.bf16.msra.mxu0 0
    %2830 = vmatprep.subr.bf16.mxu0 0
    %2831 = vmatpush2.bf16.msra.mxu0 0
    %2832 = vmatprep.subr.bf16.mxu0 0
    %2833 = vmatpush2.bf16.msra.mxu0 0
    %2834 = vmatprep.mubr.bf16.mxu0 0
    %2835 = vmatmul.mubr.bf16.gmra.mxu0 %v2797
    %v2836 = vpop.f32.mrf.mxu0
    %v2837 = vadd.f32 0.0, %v2836
    %v2838 = vpop.f32.mrf.mxu0
    %v2839 = vpop.f32.mrf.mxu0
    %v2840 = vpop.f32.mrf.mxu0
    %2841 = vdwg.mxu0
    %v2843 = vsel %vm868, %v2371, 0
    %v2846 = vsel %vm872, %v2789, 0
    %2848 = vmatprep.subr.bf16.mxu0 0
    %2849 = vmatpush1.bf16.msra.mxu0 0
    %2850 = vmatprep.subr.bf16.mxu0 0
    %2851 = vmatpush1.bf16.msra.mxu0 0
    %2852 = vmatprep.subr.bf16.mxu0 0
    %2853 = vmatpush1.bf16.msra.mxu0 0
    %2854 = vmatprep.subr.bf16.mxu0 0
    %2855 = vmatpush1.bf16.msra.mxu0 0
    %2856 = vmatprep.subr.bf16.mxu0 0
    %2857 = vmatpush1.bf16.msra.mxu0 0
    %2858 = vmatprep.subr.bf16.mxu0 0
    %2859 = vmatpush1.bf16.msra.mxu0 0
    %2860 = vmatprep.subr.bf16.mxu0 0
    %2861 = vmatpush1.bf16.msra.mxu0 0
    %2862 = vmatprep.subr.bf16.mxu0 0
    %2863 = vmatpush1.bf16.msra.mxu0 %v2846
    %2864 = vmatprep.subr.bf16.mxu0 0
    %2865 = vmatpush2.bf16.msra.mxu0 0
    %2866 = vmatprep.subr.bf16.mxu0 0
    %2867 = vmatpush2.bf16.msra.mxu0 0
    %2868 = vmatprep.subr.bf16.mxu0 0
    %2869 = vmatpush2.bf16.msra.mxu0 0
    %2870 = vmatprep.subr.bf16.mxu0 0
    %2871 = vmatpush2.bf16.msra.mxu0 0
    %2872 = vmatprep.subr.bf16.mxu0 0
    %2873 = vmatpush2.bf16.msra.mxu0 0
    %2874 = vmatprep.subr.bf16.mxu0 0
    %2875 = vmatpush2.bf16.msra.mxu0 0
    %2876 = vmatprep.subr.bf16.mxu0 0
    %2877 = vmatpush2.bf16.msra.mxu0 0
    %2878 = vmatprep.subr.bf16.mxu0 0
    %2879 = vmatpush2.bf16.msra.mxu0 0
    %2880 = vmatprep.mubr.bf16.mxu0 0
    %2881 = vmatmul.mubr.bf16.gmra.mxu0 %v2843
    %v2882 = vpop.f32.mrf.mxu0
    %v2883 = vadd.f32 0.0, %v2882
    %v2884 = vpop.f32.mrf.mxu0
    %v2885 = vpop.f32.mrf.mxu0
    %v2886 = vpop.f32.mrf.mxu0
    %2887 = vdwg.mxu0
    %v2889 = vsel %vm868, %v2374, 0
    %v2892 = vsel %vm872, %v2792, 0
    %2894 = vmatprep.subr.bf16.mxu0 0
    %2895 = vmatpush1.bf16.msra.mxu0 0
    %2896 = vmatprep.subr.bf16.mxu0 0
    %2897 = vmatpush1.bf16.msra.mxu0 0
    %2898 = vmatprep.subr.bf16.mxu0 0
    %2899 = vmatpush1.bf16.msra.mxu0 0
    %2900 = vmatprep.subr.bf16.mxu0 0
    %2901 = vmatpush1.bf16.msra.mxu0 0
    %2902 = vmatprep.subr.bf16.mxu0 0
    %2903 = vmatpush1.bf16.msra.mxu0 0
    %2904 = vmatprep.subr.bf16.mxu0 0
    %2905 = vmatpush1.bf16.msra.mxu0 0
    %2906 = vmatprep.subr.bf16.mxu0 0
    %2907 = vmatpush1.bf16.msra.mxu0 0
    %2908 = vmatprep.subr.bf16.mxu0 0
    %2909 = vmatpush1.bf16.msra.mxu0 %v2892
    %2910 = vmatprep.subr.bf16.mxu0 0
    %2911 = vmatpush2.bf16.msra.mxu0 0
    %2912 = vmatprep.subr.bf16.mxu0 0
    %2913 = vmatpush2.bf16.msra.mxu0 0
    %2914 = vmatprep.subr.bf16.mxu0 0
    %2915 = vmatpush2.bf16.msra.mxu0 0
    %2916 = vmatprep.subr.bf16.mxu0 0
    %2917 = vmatpush2.bf16.msra.mxu0 0
    %2918 = vmatprep.subr.bf16.mxu0 0
    %2919 = vmatpush2.bf16.msra.mxu0 0
    %2920 = vmatprep.subr.bf16.mxu0 0
    %2921 = vmatpush2.bf16.msra.mxu0 0
    %2922 = vmatprep.subr.bf16.mxu0 0
    %2923 = vmatpush2.bf16.msra.mxu0 0
    %2924 = vmatprep.subr.bf16.mxu0 0
    %2925 = vmatpush2.bf16.msra.mxu0 0
    %2926 = vmatprep.mubr.bf16.mxu0 0
    %2927 = vmatmul.mubr.bf16.gmra.mxu0 %v2889
    %v2928 = vpop.f32.mrf.mxu0
    %v2929 = vadd.f32 0.0, %v2928
    %v2930 = vpop.f32.mrf.mxu0
    %v2931 = vpop.f32.mrf.mxu0
    %v2932 = vpop.f32.mrf.mxu0
    %2933 = vdwg.mxu0
    %v2935 = vsel %vm868, %v2377, 0
    %v2938 = vsel %vm872, %v2795, 0
    %2940 = vmatprep.subr.bf16.mxu0 0
    %2941 = vmatpush1.bf16.msra.mxu0 0
    %2942 = vmatprep.subr.bf16.mxu0 0
    %2943 = vmatpush1.bf16.msra.mxu0 0
    %2944 = vmatprep.subr.bf16.mxu0 0
    %2945 = vmatpush1.bf16.msra.mxu0 0
    %2946 = vmatprep.subr.bf16.mxu0 0
    %2947 = vmatpush1.bf16.msra.mxu0 0
    %2948 = vmatprep.subr.bf16.mxu0 0
    %2949 = vmatpush1.bf16.msra.mxu0 0
    %2950 = vmatprep.subr.bf16.mxu0 0
    %2951 = vmatpush1.bf16.msra.mxu0 0
    %2952 = vmatprep.subr.bf16.mxu0 0
    %2953 = vmatpush1.bf16.msra.mxu0 0
    %2954 = vmatprep.subr.bf16.mxu0 0
    %2955 = vmatpush1.bf16.msra.mxu0 %v2938
    %2956 = vmatprep.subr.bf16.mxu0 0
    %2957 = vmatpush2.bf16.msra.mxu0 0
    %2958 = vmatprep.subr.bf16.mxu0 0
    %2959 = vmatpush2.bf16.msra.mxu0 0
    %2960 = vmatprep.subr.bf16.mxu0 0
    %2961 = vmatpush2.bf16.msra.mxu0 0
    %2962 = vmatprep.subr.bf16.mxu0 0
    %2963 = vmatpush2.bf16.msra.mxu0 0
    %2964 = vmatprep.subr.bf16.mxu0 0
    %2965 = vmatpush2.bf16.msra.mxu0 0
    %2966 = vmatprep.subr.bf16.mxu0 0
    %2967 = vmatpush2.bf16.msra.mxu0 0
    %2968 = vmatprep.subr.bf16.mxu0 0
    %2969 = vmatpush2.bf16.msra.mxu0 0
    %2970 = vmatprep.subr.bf16.mxu0 0
    %2971 = vmatpush2.bf16.msra.mxu0 0
    %2972 = vmatprep.mubr.bf16.mxu0 0
    %2973 = vmatmul.mubr.bf16.gmra.mxu0 %v2935
    %v2974 = vpop.f32.mrf.mxu0
    %v2975 = vadd.f32 0.0, %v2974
    %v2976 = vpop.f32.mrf.mxu0
    %v2977 = vpop.f32.mrf.mxu0
    %v2978 = vpop.f32.mrf.mxu0
    %2979 = vdwg.mxu0
    %v2980 = vsel %vm1055, %v2837, -1e+30
    %v2981 = vsel %vm1055, %v2883, -1e+30
    %v2982 = vsel %vm1055, %v2929, -1e+30
    %v2983 = vsel %vm1055, %v2975, -1e+30
    %v2984 = vsel %vm868, %v2980, -inf
    %2985 = vmax.xlane.f32.xlu0 %v2984
    %v2986 = vpop.xlane.xlu0 %2985
    %v2987 = vsel %vm868, %v2981, -inf
    %2988 = vmax.xlane.f32.xlu0 %v2987
    %v2989 = vpop.xlane.xlu0 %2988
    %v2990 = vsel %vm868, %v2982, -inf
    %2991 = vmax.xlane.f32.xlu0 %v2990
    %v2992 = vpop.xlane.xlu0 %2991
    %v2993 = vsel %vm868, %v2983, -inf
    %2994 = vmax.xlane.f32.xlu0 %v2993
    %v2995 = vpop.xlane.xlu0 %2994
    %v2996 = vsub.f32 %v2980, %v2986
    %v2997 = vsub.f32 %v2981, %v2989
    %v2998 = vsub.f32 %v2982, %v2992
    %v2999 = vsub.f32 %v2983, %v2995
    %v3000 = vmul.f32 %v2996, 1.442695
    %v3001 = vpow.pop %v3000
    %v3002 = vmul.f32 %v2997, 1.442695
    %v3003 = vpow.pop %v3002
    %v3004 = vmul.f32 %v2998, 1.442695
    %v3005 = vpow.pop %v3004
    %v3006 = vmul.f32 %v2999, 1.442695
    %v3007 = vpow.pop %v3006
    %v3008 = vsel %vm868, %v3001, 0.0
    %3009 = vadd.xlane.f32.xlu0 %v3008
    %v3010 = vpop.xlane.xlu0 %3009
    %v3011 = vsel %vm868, %v3003, 0.0
    %3012 = vadd.xlane.f32.xlu0 %v3011
    %v3013 = vpop.xlane.xlu0 %3012
    %v3014 = vsel %vm868, %v3005, 0.0
    %3015 = vadd.xlane.f32.xlu0 %v3014
    %v3016 = vpop.xlane.xlu0 %3015
    %v3017 = vsel %vm868, %v3007, 0.0
    %3018 = vadd.xlane.f32.xlu0 %v3017
    %v3019 = vpop.xlane.xlu0 %3018
    %v3020 = vrcp.pop %v3010
    %v3021 = vrcp.pop %v3013
    %v3022 = vrcp.pop %v3016
    %v3023 = vrcp.pop %v3019
    %v3024 = vmul.f32 %v3001, %v3020
    %v3025 = vmul.f32 %v3003, %v3021
    %v3026 = vmul.f32 %v3005, %v3022
    %v3027 = vmul.f32 %v3007, %v3023
    %v3028 = vpack.c.bf16 %v3024, %v3024
    %v3029 = vpack.c.bf16 %v3025, %v3025
    %v3030 = vpack.c.bf16 %v3026, %v3026
    %v3031 = vpack.c.bf16 %v3027, %v3027
    %v3032 = vpack.c.bf16 %v2272, %v2272
    %v3033 = vpack.c.bf16 %v2296, %v2296
    %v3034 = vpack.c.bf16 %v2279, %v2279
    %v3035 = vpack.c.bf16 %v2297, %v2297
    %v3036 = vpack.c.bf16 %v2288, %v2288
    %v3037 = vpack.c.bf16 %v2298, %v2298
    %v3038 = vpack.c.bf16 %v2295, %v2295
    %v3039 = vpack.c.bf16 %v2299, %v2299
    %3040 = vxpose.xlu0.c.b16.start [1/8] %v3032, 128
    %3041 = vxpose.xlu0.c.b16.cont [2/8] 0, 128
    %3042 = vxpose.xlu0.c.b16.cont [3/8] 0, 128
    %3043 = vxpose.xlu0.c.b16.cont [4/8] 0, 128
    %3044 = vxpose.xlu0.c.b16.cont [5/8] 0, 128
    %3045 = vxpose.xlu0.c.b16.cont [6/8] 0, 128
    %3046 = vxpose.xlu0.c.b16.cont [7/8] 0, 128
    %3047 = vxpose.xlu0.c.b16.end [8/8] 0, 128
    %v3048 = vpop.trf.xlu0
    %v3049 = vpop.trf.xlu0
    %v3050 = vpop.trf.xlu0
    %v3051 = vpop.trf.xlu0
    %v3052 = vpop.trf.xlu0
    %v3053 = vpop.trf.xlu0
    %v3054 = vpop.trf.xlu0
    %v3055 = vpop.trf.xlu0
    %3056 = vxpose.xlu0.c.b16.start [1/8] %v3033, 128
    %3057 = vxpose.xlu0.c.b16.cont [2/8] 0, 128
    %3058 = vxpose.xlu0.c.b16.cont [3/8] 0, 128
    %3059 = vxpose.xlu0.c.b16.cont [4/8] 0, 128
    %3060 = vxpose.xlu0.c.b16.cont [5/8] 0, 128
    %3061 = vxpose.xlu0.c.b16.cont [6/8] 0, 128
    %3062 = vxpose.xlu0.c.b16.cont [7/8] 0, 128
    %3063 = vxpose.xlu0.c.b16.end [8/8] 0, 128
    %v3064 = vpop.trf.xlu0
    %v3065 = vpop.trf.xlu0
    %v3066 = vpop.trf.xlu0
    %v3067 = vpop.trf.xlu0
    %v3068 = vpop.trf.xlu0
    %v3069 = vpop.trf.xlu0
    %v3070 = vpop.trf.xlu0
    %v3071 = vpop.trf.xlu0
    %3072 = vxpose.xlu0.c.b16.start [1/8] %v3034, 128
    %3073 = vxpose.xlu0.c.b16.cont [2/8] 0, 128
    %3074 = vxpose.xlu0.c.b16.cont [3/8] 0, 128
    %3075 = vxpose.xlu0.c.b16.cont [4/8] 0, 128
    %3076 = vxpose.xlu0.c.b16.cont [5/8] 0, 128
    %3077 = vxpose.xlu0.c.b16.cont [6/8] 0, 128
    %3078 = vxpose.xlu0.c.b16.cont [7/8] 0, 128
    %3079 = vxpose.xlu0.c.b16.end [8/8] 0, 128
    %v3080 = vpop.trf.xlu0
    %v3081 = vpop.trf.xlu0
    %v3082 = vpop.trf.xlu0
    %v3083 = vpop.trf.xlu0
    %v3084 = vpop.trf.xlu0
    %v3085 = vpop.trf.xlu0
    %v3086 = vpop.trf.xlu0
    %v3087 = vpop.trf.xlu0
    %3088 = vxpose.xlu0.c.b16.start [1/8] %v3035, 128
    %3089 = vxpose.xlu0.c.b16.cont [2/8] 0, 128
    %3090 = vxpose.xlu0.c.b16.cont [3/8] 0, 128
    %3091 = vxpose.xlu0.c.b16.cont [4/8] 0, 128
    %3092 = vxpose.xlu0.c.b16.cont [5/8] 0, 128
    %3093 = vxpose.xlu0.c.b16.cont [6/8] 0, 128
    %3094 = vxpose.xlu0.c.b16.cont [7/8] 0, 128
    %3095 = vxpose.xlu0.c.b16.end [8/8] 0, 128
    %v3096 = vpop.trf.xlu0
    %v3097 = vpop.trf.xlu0
    %v3098 = vpop.trf.xlu0
    %v3099 = vpop.trf.xlu0
    %v3100 = vpop.trf.xlu0
    %v3101 = vpop.trf.xlu0
    %v3102 = vpop.trf.xlu0
    %v3103 = vpop.trf.xlu0
    %3104 = vxpose.xlu0.c.b16.start [1/8] %v3036, 128
    %3105 = vxpose.xlu0.c.b16.cont [2/8] 0, 128
    %3106 = vxpose.xlu0.c.b16.cont [3/8] 0, 128
    %3107 = vxpose.xlu0.c.b16.cont [4/8] 0, 128
    %3108 = vxpose.xlu0.c.b16.cont [5/8] 0, 128
    %3109 = vxpose.xlu0.c.b16.cont [6/8] 0, 128
    %3110 = vxpose.xlu0.c.b16.cont [7/8] 0, 128
    %3111 = vxpose.xlu0.c.b16.end [8/8] 0, 128
    %v3112 = vpop.trf.xlu0
    %v3113 = vpop.trf.xlu0
    %v3114 = vpop.trf.xlu0
    %v3115 = vpop.trf.xlu0
    %v3116 = vpop.trf.xlu0
    %v3117 = vpop.trf.xlu0
    %v3118 = vpop.trf.xlu0
    %v3119 = vpop.trf.xlu0
    %3120 = vxpose.xlu0.c.b16.start [1/8] %v3037, 128
    %3121 = vxpose.xlu0.c.b16.cont [2/8] 0, 128
    %3122 = vxpose.xlu0.c.b16.cont [3/8] 0, 128
    %3123 = vxpose.xlu0.c.b16.cont [4/8] 0, 128
    %3124 = vxpose.xlu0.c.b16.cont [5/8] 0, 128
    %3125 = vxpose.xlu0.c.b16.cont [6/8] 0, 128
    %3126 = vxpose.xlu0.c.b16.cont [7/8] 0, 128
    %3127 = vxpose.xlu0.c.b16.end [8/8] 0, 128
    %v3128 = vpop.trf.xlu0
    %v3129 = vpop.trf.xlu0
    %v3130 = vpop.trf.xlu0
    %v3131 = vpop.trf.xlu0
    %v3132 = vpop.trf.xlu0
    %v3133 = vpop.trf.xlu0
    %v3134 = vpop.trf.xlu0
    %v3135 = vpop.trf.xlu0
    %3136 = vxpose.xlu0.c.b16.start [1/8] %v3038, 128
    %3137 = vxpose.xlu0.c.b16.cont [2/8] 0, 128
    %3138 = vxpose.xlu0.c.b16.cont [3/8] 0, 128
    %3139 = vxpose.xlu0.c.b16.cont [4/8] 0, 128
    %3140 = vxpose.xlu0.c.b16.cont [5/8] 0, 128
    %3141 = vxpose.xlu0.c.b16.cont [6/8] 0, 128
    %3142 = vxpose.xlu0.c.b16.cont [7/8] 0, 128
    %3143 = vxpose.xlu0.c.b16.end [8/8] 0, 128
    %v3144 = vpop.trf.xlu0
    %v3145 = vpop.trf.xlu0
    %v3146 = vpop.trf.xlu0
    %v3147 = vpop.trf.xlu0
    %v3148 = vpop.trf.xlu0
    %v3149 = vpop.trf.xlu0
    %v3150 = vpop.trf.xlu0
    %v3151 = vpop.trf.xlu0
    %3152 = vxpose.xlu0.c.b16.start [1/8] %v3039, 128
    %3153 = vxpose.xlu0.c.b16.cont [2/8] 0, 128
    %3154 = vxpose.xlu0.c.b16.cont [3/8] 0, 128
    %3155 = vxpose.xlu0.c.b16.cont [4/8] 0, 128
    %3156 = vxpose.xlu0.c.b16.cont [5/8] 0, 128
    %3157 = vxpose.xlu0.c.b16.cont [6/8] 0, 128
    %3158 = vxpose.xlu0.c.b16.cont [7/8] 0, 128
    %3159 = vxpose.xlu0.c.b16.end [8/8] 0, 128
    %v3160 = vpop.trf.xlu0
    %v3161 = vpop.trf.xlu0
    %v3162 = vpop.trf.xlu0
    %v3163 = vpop.trf.xlu0
    %v3164 = vpop.trf.xlu0
    %v3165 = vpop.trf.xlu0
    %v3166 = vpop.trf.xlu0
    %v3167 = vpop.trf.xlu0
    %v3168 = vcombine.low %v3048, %v3112
    %v3170 = vunpack.c.l.s4 1983009808
    %v3171 = vunpack.c.0.s8 %v3170
    %v3172 = vlaneseq
    %v3173 = vshrl.u32 %v3172, 7
    %v3174 = vsub.s32 %v3171, %v3173
    %v3175 = vrot.slane %v3168, %v3174
    %v3176 = vcombine.low %v3080, %v3144
    %v3178 = vunpack.c.l.s4 1983009808
    %v3179 = vunpack.c.0.s8 %v3178
    %v3180 = vlaneseq
    %v3181 = vshrl.u32 %v3180, 7
    %v3182 = vsub.s32 %v3179, %v3181
    %v3183 = vrot.slane %v3176, %v3182
    %v3184 = vcombine.low %v3175, %v3183
    %v3185 = vcombine.high %v3175, %v3183
    %v3187 = vunpack.c.l.s4 1934713408
    %v3188 = vunpack.c.0.s8 %v3187
    %v3189 = vlaneseq
    %v3190 = vshrl.u32 %v3189, 7
    %v3191 = vsub.s32 %v3188, %v3190
    %v3192 = vrot.slane %v3184, %v3191
    %v3194 = vunpack.c.l.s4 1934713408
    %v3195 = vunpack.c.0.s8 %v3194
    %v3196 = vlaneseq
    %v3197 = vshrl.u32 %v3196, 7
    %v3198 = vsub.s32 %v3195, %v3197
    %v3199 = vrot.slane %v3185, %v3198
    %v3200 = vcombine.high %v3192, 0
    %v3201 = vcombine.high %v3199, 0
    %v3202 = vcombine.low %v3064, %v3128
    %v3204 = vunpack.c.l.s4 1983009808
    %v3205 = vunpack.c.0.s8 %v3204
    %v3206 = vlaneseq
    %v3207 = vshrl.u32 %v3206, 7
    %v3208 = vsub.s32 %v3205, %v3207
    %v3209 = vrot.slane %v3202, %v3208
    %v3210 = vcombine.low %v3096, %v3160
    %v3212 = vunpack.c.l.s4 1983009808
    %v3213 = vunpack.c.0.s8 %v3212
    %v3214 = vlaneseq
    %v3215 = vshrl.u32 %v3214, 7
    %v3216 = vsub.s32 %v3213, %v3215
    %v3217 = vrot.slane %v3210, %v3216
    %v3218 = vcombine.low %v3209, %v3217
    %v3219 = vcombine.high %v3209, %v3217
    %v3221 = vunpack.c.l.s4 1934713408
    %v3222 = vunpack.c.0.s8 %v3221
    %v3223 = vlaneseq
    %v3224 = vshrl.u32 %v3223, 7
    %v3225 = vsub.s32 %v3222, %v3224
    %v3226 = vrot.slane %v3218, %v3225
    %v3228 = vunpack.c.l.s4 1934713408
    %v3229 = vunpack.c.0.s8 %v3228
    %v3230 = vlaneseq
    %v3231 = vshrl.u32 %v3230, 7
    %v3232 = vsub.s32 %v3229, %v3231
    %v3233 = vrot.slane %v3219, %v3232
    %v3234 = vcombine.high %v3226, 0
    %v3235 = vcombine.high %v3233, 0
    %v3238 = vpack.i.b16 %v3226, %v3192
    %v3240 = vshrl.u32 %v3192, 16
    %v3241 = vshrl.u32 %v3226, 16
    %v3242 = vpack.i.b16 %v3241, %v3240
    %v3246 = vpack.i.b16 %v3234, %v3200
    %v3248 = vshrl.u32 %v3200, 16
    %v3249 = vshrl.u32 %v3234, 16
    %v3250 = vpack.i.b16 %v3249, %v3248
    %v3254 = vpack.i.b16 %v3233, %v3199
    %v3256 = vshrl.u32 %v3199, 16
    %v3257 = vshrl.u32 %v3233, 16
    %v3258 = vpack.i.b16 %v3257, %v3256
    %v3262 = vpack.i.b16 %v3235, %v3201
    %v3264 = vshrl.u32 %v3201, 16
    %v3265 = vshrl.u32 %v3235, 16
    %v3266 = vpack.i.b16 %v3265, %v3264
    %3268 = vxpose.xlu0.c.b16.start [1/8] %v3238, 128
    %3269 = vxpose.xlu0.c.b16.cont [2/8] 0, 128
    %3270 = vxpose.xlu0.c.b16.cont [3/8] 0, 128
    %3271 = vxpose.xlu0.c.b16.cont [4/8] 0, 128
    %3272 = vxpose.xlu0.c.b16.cont [5/8] 0, 128
    %3273 = vxpose.xlu0.c.b16.cont [6/8] 0, 128
    %3274 = vxpose.xlu0.c.b16.cont [7/8] 0, 128
    %3275 = vxpose.xlu0.c.b16.end [8/8] 0, 128
    %v3276 = vpop.trf.xlu0
    %v3277 = vpop.trf.xlu0
    %v3278 = vpop.trf.xlu0
    %v3279 = vpop.trf.xlu0
    %v3280 = vpop.trf.xlu0
    %v3281 = vpop.trf.xlu0
    %v3282 = vpop.trf.xlu0
    %v3283 = vpop.trf.xlu0
    %3284 = vxpose.xlu0.c.b16.start [1/8] %v3242, 128
    %3285 = vxpose.xlu0.c.b16.cont [2/8] 0, 128
    %3286 = vxpose.xlu0.c.b16.cont [3/8] 0, 128
    %3287 = vxpose.xlu0.c.b16.cont [4/8] 0, 128
    %3288 = vxpose.xlu0.c.b16.cont [5/8] 0, 128
    %3289 = vxpose.xlu0.c.b16.cont [6/8] 0, 128
    %3290 = vxpose.xlu0.c.b16.cont [7/8] 0, 128
    %3291 = vxpose.xlu0.c.b16.end [8/8] 0, 128
    %v3292 = vpop.trf.xlu0
    %v3293 = vpop.trf.xlu0
    %v3294 = vpop.trf.xlu0
    %v3295 = vpop.trf.xlu0
    %v3296 = vpop.trf.xlu0
    %v3297 = vpop.trf.xlu0
    %v3298 = vpop.trf.xlu0
    %v3299 = vpop.trf.xlu0
    %3300 = vxpose.xlu0.c.b16.start [1/8] %v3246, 128
    %3301 = vxpose.xlu0.c.b16.cont [2/8] 0, 128
    %3302 = vxpose.xlu0.c.b16.cont [3/8] 0, 128
    %3303 = vxpose.xlu0.c.b16.cont [4/8] 0, 128
    %3304 = vxpose.xlu0.c.b16.cont [5/8] 0, 128
    %3305 = vxpose.xlu0.c.b16.cont [6/8] 0, 128
    %3306 = vxpose.xlu0.c.b16.cont [7/8] 0, 128
    %3307 = vxpose.xlu0.c.b16.end [8/8] 0, 128
    %v3308 = vpop.trf.xlu0
    %v3309 = vpop.trf.xlu0
    %v3310 = vpop.trf.xlu0
    %v3311 = vpop.trf.xlu0
    %v3312 = vpop.trf.xlu0
    %v3313 = vpop.trf.xlu0
    %v3314 = vpop.trf.xlu0
    %v3315 = vpop.trf.xlu0
    %3316 = vxpose.xlu0.c.b16.start [1/8] %v3250, 128
    %3317 = vxpose.xlu0.c.b16.cont [2/8] 0, 128
    %3318 = vxpose.xlu0.c.b16.cont [3/8] 0, 128
    %3319 = vxpose.xlu0.c.b16.cont [4/8] 0, 128
    %3320 = vxpose.xlu0.c.b16.cont [5/8] 0, 128
    %3321 = vxpose.xlu0.c.b16.cont [6/8] 0, 128
    %3322 = vxpose.xlu0.c.b16.cont [7/8] 0, 128
    %3323 = vxpose.xlu0.c.b16.end [8/8] 0, 128
    %v3324 = vpop.trf.xlu0
    %v3325 = vpop.trf.xlu0
    %v3326 = vpop.trf.xlu0
    %v3327 = vpop.trf.xlu0
    %v3328 = vpop.trf.xlu0
    %v3329 = vpop.trf.xlu0
    %v3330 = vpop.trf.xlu0
    %v3331 = vpop.trf.xlu0
    %3332 = vxpose.xlu0.c.b16.start [1/8] %v3254, 128
    %3333 = vxpose.xlu0.c.b16.cont [2/8] 0, 128
    %3334 = vxpose.xlu0.c.b16.cont [3/8] 0, 128
    %3335 = vxpose.xlu0.c.b16.cont [4/8] 0, 128
    %3336 = vxpose.xlu0.c.b16.cont [5/8] 0, 128
    %3337 = vxpose.xlu0.c.b16.cont [6/8] 0, 128
    %3338 = vxpose.xlu0.c.b16.cont [7/8] 0, 128
    %3339 = vxpose.xlu0.c.b16.end [8/8] 0, 128
    %v3340 = vpop.trf.xlu0
    %v3341 = vpop.trf.xlu0
    %v3342 = vpop.trf.xlu0
    %v3343 = vpop.trf.xlu0
    %v3344 = vpop.trf.xlu0
    %v3345 = vpop.trf.xlu0
    %v3346 = vpop.trf.xlu0
    %v3347 = vpop.trf.xlu0
    %3348 = vxpose.xlu0.c.b16.start [1/8] %v3258, 128
    %3349 = vxpose.xlu0.c.b16.cont [2/8] 0, 128
    %3350 = vxpose.xlu0.c.b16.cont [3/8] 0, 128
    %3351 = vxpose.xlu0.c.b16.cont [4/8] 0, 128
    %3352 = vxpose.xlu0.c.b16.cont [5/8] 0, 128
    %3353 = vxpose.xlu0.c.b16.cont [6/8] 0, 128
    %3354 = vxpose.xlu0.c.b16.cont [7/8] 0, 128
    %3355 = vxpose.xlu0.c.b16.end [8/8] 0, 128
    %v3356 = vpop.trf.xlu0
    %v3357 = vpop.trf.xlu0
    %v3358 = vpop.trf.xlu0
    %v3359 = vpop.trf.xlu0
    %v3360 = vpop.trf.xlu0
    %v3361 = vpop.trf.xlu0
    %v3362 = vpop.trf.xlu0
    %v3363 = vpop.trf.xlu0
    %3364 = vxpose.xlu0.c.b16.start [1/8] %v3262, 128
    %3365 = vxpose.xlu0.c.b16.cont [2/8] 0, 128
    %3366 = vxpose.xlu0.c.b16.cont [3/8] 0, 128
    %3367 = vxpose.xlu0.c.b16.cont [4/8] 0, 128
    %3368 = vxpose.xlu0.c.b16.cont [5/8] 0, 128
    %3369 = vxpose.xlu0.c.b16.cont [6/8] 0, 128
    %3370 = vxpose.xlu0.c.b16.cont [7/8] 0, 128
    %3371 = vxpose.xlu0.c.b16.end [8/8] 0, 128
    %v3372 = vpop.trf.xlu0
    %v3373 = vpop.trf.xlu0
    %v3374 = vpop.trf.xlu0
    %v3375 = vpop.trf.xlu0
    %v3376 = vpop.trf.xlu0
    %v3377 = vpop.trf.xlu0
    %v3378 = vpop.trf.xlu0
    %v3379 = vpop.trf.xlu0
    %3380 = vxpose.xlu0.c.b16.start [1/8] %v3266, 128
    %3381 = vxpose.xlu0.c.b16.cont [2/8] 0, 128
    %3382 = vxpose.xlu0.c.b16.cont [3/8] 0, 128
    %3383 = vxpose.xlu0.c.b16.cont [4/8] 0, 128
    %3384 = vxpose.xlu0.c.b16.cont [5/8] 0, 128
    %3385 = vxpose.xlu0.c.b16.cont [6/8] 0, 128
    %3386 = vxpose.xlu0.c.b16.cont [7/8] 0, 128
    %3387 = vxpose.xlu0.c.b16.end [8/8] 0, 128
    %v3388 = vpop.trf.xlu0
    %v3389 = vpop.trf.xlu0
    %v3390 = vpop.trf.xlu0
    %v3391 = vpop.trf.xlu0
    %v3392 = vpop.trf.xlu0
    %v3393 = vpop.trf.xlu0
    %v3394 = vpop.trf.xlu0
    %v3395 = vpop.trf.xlu0
    %v3396 = vcombine.low %v3276, %v3340
    %v3398 = vunpack.c.l.s4 1983009808
    %v3399 = vunpack.c.0.s8 %v3398
    %v3400 = vlaneseq
    %v3401 = vshrl.u32 %v3400, 7
    %v3402 = vsub.s32 %v3399, %v3401
    %v3403 = vrot.slane %v3396, %v3402
    %v3404 = vcombine.low %v3308, %v3372
    %v3406 = vunpack.c.l.s4 1983009808
    %v3407 = vunpack.c.0.s8 %v3406
    %v3408 = vlaneseq
    %v3409 = vshrl.u32 %v3408, 7
    %v3410 = vsub.s32 %v3407, %v3409
    %v3411 = vrot.slane %v3404, %v3410
    %v3412 = vcombine.low %v3403, %v3411
    %v3414 = vunpack.c.l.s4 1934713408
    %v3415 = vunpack.c.0.s8 %v3414
    %v3416 = vlaneseq
    %v3417 = vshrl.u32 %v3416, 7
    %v3418 = vsub.s32 %v3415, %v3417
    %v3419 = vrot.slane %v3412, %v3418
    %v3420 = vcombine.high %v3419, 0
    %v3421 = vcombine.low %v3292, %v3356
    %v3423 = vunpack.c.l.s4 1983009808
    %v3424 = vunpack.c.0.s8 %v3423
    %v3425 = vlaneseq
    %v3426 = vshrl.u32 %v3425, 7
    %v3427 = vsub.s32 %v3424, %v3426
    %v3428 = vrot.slane %v3421, %v3427
    %v3429 = vcombine.low %v3324, %v3388
    %v3431 = vunpack.c.l.s4 1983009808
    %v3432 = vunpack.c.0.s8 %v3431
    %v3433 = vlaneseq
    %v3434 = vshrl.u32 %v3433, 7
    %v3435 = vsub.s32 %v3432, %v3434
    %v3436 = vrot.slane %v3429, %v3435
    %v3437 = vcombine.low %v3428, %v3436
    %v3439 = vunpack.c.l.s4 1934713408
    %v3440 = vunpack.c.0.s8 %v3439
    %v3441 = vlaneseq
    %v3442 = vshrl.u32 %v3441, 7
    %v3443 = vsub.s32 %v3440, %v3442
    %v3444 = vrot.slane %v3437, %v3443
    %v3445 = vcombine.high %v3444, 0
    %v3448 = vpack.i.b16 %v3444, %v3419
    %v3449 = vshrl.u32 %v3419, 16
    %v3450 = vshrl.u32 %v3444, 16
    %v3451 = vpack.i.b16 %v3450, %v3449
    %v3454 = vpack.i.b16 %v3445, %v3420
    %v3455 = vshrl.u32 %v3420, 16
    %v3456 = vshrl.u32 %v3445, 16
    %v3457 = vpack.i.b16 %v3456, %v3455
    %v3459 = vsel %vm868, %v3448, 0
    %v3462 = vsel %vm868, %v3028, 0
    %3464 = vmatprep.subr.bf16.mxu0 0
    %3465 = vmatpush1.bf16.xpose.msra.mxu0 0
    %3466 = vmatprep.subr.bf16.mxu0 0
    %3467 = vmatpush1.bf16.xpose.msra.mxu0 0
    %3468 = vmatprep.subr.bf16.mxu0 0
    %3469 = vmatpush1.bf16.xpose.msra.mxu0 0
    %3470 = vmatprep.subr.bf16.mxu0 0
    %3471 = vmatpush1.bf16.xpose.msra.mxu0 0
    %3472 = vmatprep.subr.bf16.mxu0 0
    %3473 = vmatpush1.bf16.xpose.msra.mxu0 0
    %3474 = vmatprep.subr.bf16.mxu0 0
    %3475 = vmatpush1.bf16.xpose.msra.mxu0 0
    %3476 = vmatprep.subr.bf16.mxu0 0
    %3477 = vmatpush1.bf16.xpose.msra.mxu0 0
    %3478 = vmatprep.subr.bf16.mxu0 0
    %3479 = vmatpush1.bf16.xpose.msra.mxu0 %v3462
    %3480 = vmatprep.subr.bf16.mxu0 0
    %3481 = vmatpush2.bf16.xpose.msra.mxu0 0
    %3482 = vmatprep.subr.bf16.mxu0 0
    %3483 = vmatpush2.bf16.xpose.msra.mxu0 0
    %3484 = vmatprep.subr.bf16.mxu0 0
    %3485 = vmatpush2.bf16.xpose.msra.mxu0 0
    %3486 = vmatprep.subr.bf16.mxu0 0
    %3487 = vmatpush2.bf16.xpose.msra.mxu0 0
    %3488 = vmatprep.subr.bf16.mxu0 0
    %3489 = vmatpush2.bf16.xpose.msra.mxu0 0
    %3490 = vmatprep.subr.bf16.mxu0 0
    %3491 = vmatpush2.bf16.xpose.msra.mxu0 0
    %3492 = vmatprep.subr.bf16.mxu0 0
    %3493 = vmatpush2.bf16.xpose.msra.mxu0 0
    %3494 = vmatprep.subr.bf16.mxu0 0
    %3495 = vmatpush2.bf16.xpose.msra.mxu0 0
    %3496 = vmatprep.mubr.bf16.mxu0 0
    %3497 = vmatmul.mubr.bf16.gmra.mxu0 %v3459
    %v3498 = vpop.f32.mrf.mxu0
    %v3499 = vadd.f32 0.0, %v3498
    %v3500 = vpop.f32.mrf.mxu0
    %v3501 = vpop.f32.mrf.mxu0
    %v3502 = vpop.f32.mrf.mxu0
    %3503 = vdwg.mxu0
    %v3505 = vsel %vm868, %v3451, 0
    %v3508 = vsel %vm868, %v3029, 0
    %3510 = vmatprep.subr.bf16.mxu0 0
    %3511 = vmatpush1.bf16.xpose.msra.mxu0 0
    %3512 = vmatprep.subr.bf16.mxu0 0
    %3513 = vmatpush1.bf16.xpose.msra.mxu0 0
    %3514 = vmatprep.subr.bf16.mxu0 0
    %3515 = vmatpush1.bf16.xpose.msra.mxu0 0
    %3516 = vmatprep.subr.bf16.mxu0 0
    %3517 = vmatpush1.bf16.xpose.msra.mxu0 0
    %3518 = vmatprep.subr.bf16.mxu0 0
    %3519 = vmatpush1.bf16.xpose.msra.mxu0 0
    %3520 = vmatprep.subr.bf16.mxu0 0
    %3521 = vmatpush1.bf16.xpose.msra.mxu0 0
    %3522 = vmatprep.subr.bf16.mxu0 0
    %3523 = vmatpush1.bf16.xpose.msra.mxu0 0
    %3524 = vmatprep.subr.bf16.mxu0 0
    %3525 = vmatpush1.bf16.xpose.msra.mxu0 %v3508
    %3526 = vmatprep.subr.bf16.mxu0 0
    %3527 = vmatpush2.bf16.xpose.msra.mxu0 0
    %3528 = vmatprep.subr.bf16.mxu0 0
    %3529 = vmatpush2.bf16.xpose.msra.mxu0 0
    %3530 = vmatprep.subr.bf16.mxu0 0
    %3531 = vmatpush2.bf16.xpose.msra.mxu0 0
    %3532 = vmatprep.subr.bf16.mxu0 0
    %3533 = vmatpush2.bf16.xpose.msra.mxu0 0
    %3534 = vmatprep.subr.bf16.mxu0 0
    %3535 = vmatpush2.bf16.xpose.msra.mxu0 0
    %3536 = vmatprep.subr.bf16.mxu0 0
    %3537 = vmatpush2.bf16.xpose.msra.mxu0 0
    %3538 = vmatprep.subr.bf16.mxu0 0
    %3539 = vmatpush2.bf16.xpose.msra.mxu0 0
    %3540 = vmatprep.subr.bf16.mxu0 0
    %3541 = vmatpush2.bf16.xpose.msra.mxu0 0
    %3542 = vmatprep.mubr.bf16.mxu0 0
    %3543 = vmatmul.mubr.bf16.gmra.mxu0 %v3505
    %v3544 = vpop.f32.mrf.mxu0
    %v3545 = vadd.f32 0.0, %v3544
    %v3546 = vpop.f32.mrf.mxu0
    %v3547 = vpop.f32.mrf.mxu0
    %v3548 = vpop.f32.mrf.mxu0
    %3549 = vdwg.mxu0
    %v3551 = vsel %vm868, %v3454, 0
    %v3554 = vsel %vm868, %v3030, 0
    %3556 = vmatprep.subr.bf16.mxu0 0
    %3557 = vmatpush1.bf16.xpose.msra.mxu0 0
    %3558 = vmatprep.subr.bf16.mxu0 0
    %3559 = vmatpush1.bf16.xpose.msra.mxu0 0
    %3560 = vmatprep.subr.bf16.mxu0 0
    %3561 = vmatpush1.bf16.xpose.msra.mxu0 0
    %3562 = vmatprep.subr.bf16.mxu0 0
    %3563 = vmatpush1.bf16.xpose.msra.mxu0 0
    %3564 = vmatprep.subr.bf16.mxu0 0
    %3565 = vmatpush1.bf16.xpose.msra.mxu0 0
    %3566 = vmatprep.subr.bf16.mxu0 0
    %3567 = vmatpush1.bf16.xpose.msra.mxu0 0
    %3568 = vmatprep.subr.bf16.mxu0 0
    %3569 = vmatpush1.bf16.xpose.msra.mxu0 0
    %3570 = vmatprep.subr.bf16.mxu0 0
    %3571 = vmatpush1.bf16.xpose.msra.mxu0 %v3554
    %3572 = vmatprep.subr.bf16.mxu0 0
    %3573 = vmatpush2.bf16.xpose.msra.mxu0 0
    %3574 = vmatprep.subr.bf16.mxu0 0
    %3575 = vmatpush2.bf16.xpose.msra.mxu0 0
    %3576 = vmatprep.subr.bf16.mxu0 0
    %3577 = vmatpush2.bf16.xpose.msra.mxu0 0
    %3578 = vmatprep.subr.bf16.mxu0 0
    %3579 = vmatpush2.bf16.xpose.msra.mxu0 0
    %3580 = vmatprep.subr.bf16.mxu0 0
    %3581 = vmatpush2.bf16.xpose.msra.mxu0 0
    %3582 = vmatprep.subr.bf16.mxu0 0
    %3583 = vmatpush2.bf16.xpose.msra.mxu0 0
    %3584 = vmatprep.subr.bf16.mxu0 0
    %3585 = vmatpush2.bf16.xpose.msra.mxu0 0
    %3586 = vmatprep.subr.bf16.mxu0 0
    %3587 = vmatpush2.bf16.xpose.msra.mxu0 0
    %3588 = vmatprep.mubr.bf16.mxu0 0
    %3589 = vmatmul.mubr.bf16.gmra.mxu0 %v3551
    %v3590 = vpop.f32.mrf.mxu0
    %v3591 = vadd.f32 0.0, %v3590
    %v3592 = vpop.f32.mrf.mxu0
    %v3593 = vpop.f32.mrf.mxu0
    %v3594 = vpop.f32.mrf.mxu0
    %3595 = vdwg.mxu0
    %v3597 = vsel %vm868, %v3457, 0
    %v3600 = vsel %vm868, %v3031, 0
    %3602 = vmatprep.subr.bf16.mxu0 0
    %3603 = vmatpush1.bf16.xpose.msra.mxu0 0
    %3604 = vmatprep.subr.bf16.mxu0 0
    %3605 = vmatpush1.bf16.xpose.msra.mxu0 0
    %3606 = vmatprep.subr.bf16.mxu0 0
    %3607 = vmatpush1.bf16.xpose.msra.mxu0 0
    %3608 = vmatprep.subr.bf16.mxu0 0
    %3609 = vmatpush1.bf16.xpose.msra.mxu0 0
    %3610 = vmatprep.subr.bf16.mxu0 0
    %3611 = vmatpush1.bf16.xpose.msra.mxu0 0
    %3612 = vmatprep.subr.bf16.mxu0 0
    %3613 = vmatpush1.bf16.xpose.msra.mxu0 0
    %3614 = vmatprep.subr.bf16.mxu0 0
    %3615 = vmatpush1.bf16.xpose.msra.mxu0 0
    %3616 = vmatprep.subr.bf16.mxu0 0
    %3617 = vmatpush1.bf16.xpose.msra.mxu0 %v3600
    %3618 = vmatprep.subr.bf16.mxu0 0
    %3619 = vmatpush2.bf16.xpose.msra.mxu0 0
    %3620 = vmatprep.subr.bf16.mxu0 0
    %3621 = vmatpush2.bf16.xpose.msra.mxu0 0
    %3622 = vmatprep.subr.bf16.mxu0 0
    %3623 = vmatpush2.bf16.xpose.msra.mxu0 0
    %3624 = vmatprep.subr.bf16.mxu0 0
    %3625 = vmatpush2.bf16.xpose.msra.mxu0 0
    %3626 = vmatprep.subr.bf16.mxu0 0
    %3627 = vmatpush2.bf16.xpose.msra.mxu0 0
    %3628 = vmatprep.subr.bf16.mxu0 0
    %3629 = vmatpush2.bf16.xpose.msra.mxu0 0
    %3630 = vmatprep.subr.bf16.mxu0 0
    %3631 = vmatpush2.bf16.xpose.msra.mxu0 0
    %3632 = vmatprep.subr.bf16.mxu0 0
    %3633 = vmatpush2.bf16.xpose.msra.mxu0 0
    %3634 = vmatprep.mubr.bf16.mxu0 0
    %3635 = vmatmul.mubr.bf16.gmra.mxu0 %v3597
    %v3636 = vpop.f32.mrf.mxu0
    %v3637 = vadd.f32 0.0, %v3636
    %v3638 = vpop.f32.mrf.mxu0
    %v3639 = vpop.f32.mrf.mxu0
    %v3640 = vpop.f32.mrf.mxu0
    %3641 = vdwg.mxu0
    %3642 = vxpose.xlu0.b32.start [1/16] %v3499, 128
    %3643 = vxpose.xlu0.b32.cont [2/16] 0.0, 128
    %3644 = vxpose.xlu0.b32.cont [3/16] 0.0, 128
    %3645 = vxpose.xlu0.b32.cont [4/16] 0.0, 128
    %3646 = vxpose.xlu0.b32.cont [5/16] 0.0, 128
    %3647 = vxpose.xlu0.b32.cont [6/16] 0.0, 128
    %3648 = vxpose.xlu0.b32.cont [7/16] 0.0, 128
    %3649 = vxpose.xlu0.b32.cont [8/16] 0.0, 128
    %3650 = vxpose.xlu0.b32.cont [9/16] 0.0, 128
    %3651 = vxpose.xlu0.b32.cont [10/16] 0.0, 128
    %3652 = vxpose.xlu0.b32.cont [11/16] 0.0, 128
    %3653 = vxpose.xlu0.b32.cont [12/16] 0.0, 128
    %3654 = vxpose.xlu0.b32.cont [13/16] 0.0, 128
    %3655 = vxpose.xlu0.b32.cont [14/16] 0.0, 128
    %3656 = vxpose.xlu0.b32.cont [15/16] 0.0, 128
    %3657 = vxpose.xlu0.b32.end [16/16] 0.0, 128
    %v3658 = vpop.trf.xlu0
    %v3659 = vpop.trf.xlu0
    %v3660 = vpop.trf.xlu0
    %v3661 = vpop.trf.xlu0
    %v3662 = vpop.trf.xlu0
    %v3663 = vpop.trf.xlu0
    %v3664 = vpop.trf.xlu0
    %v3665 = vpop.trf.xlu0
    %v3666 = vpop.trf.xlu0
    %v3667 = vpop.trf.xlu0
    %v3668 = vpop.trf.xlu0
    %v3669 = vpop.trf.xlu0
    %v3670 = vpop.trf.xlu0
    %v3671 = vpop.trf.xlu0
    %v3672 = vpop.trf.xlu0
    %v3673 = vpop.trf.xlu0
    %3674 = vxpose.xlu0.b32.start [1/16] %v3545, 128
    %3675 = vxpose.xlu0.b32.cont [2/16] 0.0, 128
    %3676 = vxpose.xlu0.b32.cont [3/16] 0.0, 128
    %3677 = vxpose.xlu0.b32.cont [4/16] 0.0, 128
    %3678 = vxpose.xlu0.b32.cont [5/16] 0.0, 128
    %3679 = vxpose.xlu0.b32.cont [6/16] 0.0, 128
    %3680 = vxpose.xlu0.b32.cont [7/16] 0.0, 128
    %3681 = vxpose.xlu0.b32.cont [8/16] 0.0, 128
    %3682 = vxpose.xlu0.b32.cont [9/16] 0.0, 128
    %3683 = vxpose.xlu0.b32.cont [10/16] 0.0, 128
    %3684 = vxpose.xlu0.b32.cont [11/16] 0.0, 128
    %3685 = vxpose.xlu0.b32.cont [12/16] 0.0, 128
    %3686 = vxpose.xlu0.b32.cont [13/16] 0.0, 128
    %3687 = vxpose.xlu0.b32.cont [14/16] 0.0, 128
    %3688 = vxpose.xlu0.b32.cont [15/16] 0.0, 128
    %3689 = vxpose.xlu0.b32.end [16/16] 0.0, 128
    %v3690 = vpop.trf.xlu0
    %v3691 = vpop.trf.xlu0
    %v3692 = vpop.trf.xlu0
    %v3693 = vpop.trf.xlu0
    %v3694 = vpop.trf.xlu0
    %v3695 = vpop.trf.xlu0
    %v3696 = vpop.trf.xlu0
    %v3697 = vpop.trf.xlu0
    %v3698 = vpop.trf.xlu0
    %v3699 = vpop.trf.xlu0
    %v3700 = vpop.trf.xlu0
    %v3701 = vpop.trf.xlu0
    %v3702 = vpop.trf.xlu0
    %v3703 = vpop.trf.xlu0
    %v3704 = vpop.trf.xlu0
    %v3705 = vpop.trf.xlu0
    %3706 = vxpose.xlu0.b32.start [1/16] %v3591, 128
    %3707 = vxpose.xlu0.b32.cont [2/16] 0.0, 128
    %3708 = vxpose.xlu0.b32.cont [3/16] 0.0, 128
    %3709 = vxpose.xlu0.b32.cont [4/16] 0.0, 128
    %3710 = vxpose.xlu0.b32.cont [5/16] 0.0, 128
    %3711 = vxpose.xlu0.b32.cont [6/16] 0.0, 128
    %3712 = vxpose.xlu0.b32.cont [7/16] 0.0, 128
    %3713 = vxpose.xlu0.b32.cont [8/16] 0.0, 128
    %3714 = vxpose.xlu0.b32.cont [9/16] 0.0, 128
    %3715 = vxpose.xlu0.b32.cont [10/16] 0.0, 128
    %3716 = vxpose.xlu0.b32.cont [11/16] 0.0, 128
    %3717 = vxpose.xlu0.b32.cont [12/16] 0.0, 128
    %3718 = vxpose.xlu0.b32.cont [13/16] 0.0, 128
    %3719 = vxpose.xlu0.b32.cont [14/16] 0.0, 128
    %3720 = vxpose.xlu0.b32.cont [15/16] 0.0, 128
    %3721 = vxpose.xlu0.b32.end [16/16] 0.0, 128
    %v3722 = vpop.trf.xlu0
    %v3723 = vpop.trf.xlu0
    %v3724 = vpop.trf.xlu0
    %v3725 = vpop.trf.xlu0
    %v3726 = vpop.trf.xlu0
    %v3727 = vpop.trf.xlu0
    %v3728 = vpop.trf.xlu0
    %v3729 = vpop.trf.xlu0
    %v3730 = vpop.trf.xlu0
    %v3731 = vpop.trf.xlu0
    %v3732 = vpop.trf.xlu0
    %v3733 = vpop.trf.xlu0
    %v3734 = vpop.trf.xlu0
    %v3735 = vpop.trf.xlu0
    %v3736 = vpop.trf.xlu0
    %v3737 = vpop.trf.xlu0
    %3738 = vxpose.xlu0.b32.start [1/16] %v3637, 128
    %3739 = vxpose.xlu0.b32.cont [2/16] 0.0, 128
    %3740 = vxpose.xlu0.b32.cont [3/16] 0.0, 128
    %3741 = vxpose.xlu0.b32.cont [4/16] 0.0, 128
    %3742 = vxpose.xlu0.b32.cont [5/16] 0.0, 128
    %3743 = vxpose.xlu0.b32.cont [6/16] 0.0, 128
    %3744 = vxpose.xlu0.b32.cont [7/16] 0.0, 128
    %3745 = vxpose.xlu0.b32.cont [8/16] 0.0, 128
    %3746 = vxpose.xlu0.b32.cont [9/16] 0.0, 128
    %3747 = vxpose.xlu0.b32.cont [10/16] 0.0, 128
    %3748 = vxpose.xlu0.b32.cont [11/16] 0.0, 128
    %3749 = vxpose.xlu0.b32.cont [12/16] 0.0, 128
    %3750 = vxpose.xlu0.b32.cont [13/16] 0.0, 128
    %3751 = vxpose.xlu0.b32.cont [14/16] 0.0, 128
    %3752 = vxpose.xlu0.b32.cont [15/16] 0.0, 128
    %3753 = vxpose.xlu0.b32.end [16/16] 0.0, 128
    %v3754 = vpop.trf.xlu0
    %v3755 = vpop.trf.xlu0
    %v3756 = vpop.trf.xlu0
    %v3757 = vpop.trf.xlu0
    %v3758 = vpop.trf.xlu0
    %v3759 = vpop.trf.xlu0
    %v3760 = vpop.trf.xlu0
    %v3761 = vpop.trf.xlu0
    %v3762 = vpop.trf.xlu0
    %v3763 = vpop.trf.xlu0
    %v3764 = vpop.trf.xlu0
    %v3765 = vpop.trf.xlu0
    %v3766 = vpop.trf.xlu0
    %v3767 = vpop.trf.xlu0
    %v3768 = vpop.trf.xlu0
    %v3769 = vpop.trf.xlu0
    %v3770 = vcombine.low %v3658, %v3722
    %v3771 = vcombine.high %v3658, %v3722
    %v3773 = vunpack.c.l.s4 1983009808
    %v3774 = vunpack.c.0.s8 %v3773
    %v3775 = vlaneseq
    %v3776 = vshrl.u32 %v3775, 7
    %v3777 = vsub.s32 %v3774, %v3776
    %v3778 = vrot.slane %v3770, %v3777
    %v3780 = vunpack.c.l.s4 1983009808
    %v3781 = vunpack.c.0.s8 %v3780
    %v3782 = vlaneseq
    %v3783 = vshrl.u32 %v3782, 7
    %v3784 = vsub.s32 %v3781, %v3783
    %v3785 = vrot.slane %v3771, %v3784
    %v3786 = vcombine.low %v3690, %v3754
    %v3787 = vcombine.high %v3690, %v3754
    %v3789 = vunpack.c.l.s4 1983009808
    %v3790 = vunpack.c.0.s8 %v3789
    %v3791 = vlaneseq
    %v3792 = vshrl.u32 %v3791, 7
    %v3793 = vsub.s32 %v3790, %v3792
    %v3794 = vrot.slane %v3786, %v3793
    %v3796 = vunpack.c.l.s4 1983009808
    %v3797 = vunpack.c.0.s8 %v3796
    %v3798 = vlaneseq
    %v3799 = vshrl.u32 %v3798, 7
    %v3800 = vsub.s32 %v3797, %v3799
    %v3801 = vrot.slane %v3787, %v3800
    %v3802 = vcombine.low %v3778, %v3794
    %v3803 = vcombine.high %v3778, %v3794
    %v3805 = vunpack.c.l.s4 1934713408
    %v3806 = vunpack.c.0.s8 %v3805
    %v3807 = vlaneseq
    %v3808 = vshrl.u32 %v3807, 7
    %v3809 = vsub.s32 %v3806, %v3808
    %v3810 = vrot.slane %v3802, %v3809
    %v3812 = vunpack.c.l.s4 1934713408
    %v3813 = vunpack.c.0.s8 %v3812
    %v3814 = vlaneseq
    %v3815 = vshrl.u32 %v3814, 7
    %v3816 = vsub.s32 %v3813, %v3815
    %v3817 = vrot.slane %v3803, %v3816
    %v3818 = vcombine.low %v3785, %v3801
    %v3819 = vcombine.high %v3785, %v3801
    %v3821 = vunpack.c.l.s4 1934713408
    %v3822 = vunpack.c.0.s8 %v3821
    %v3823 = vlaneseq
    %v3824 = vshrl.u32 %v3823, 7
    %v3825 = vsub.s32 %v3822, %v3824
    %v3826 = vrot.slane %v3818, %v3825
    %v3828 = vunpack.c.l.s4 1934713408
    %v3829 = vunpack.c.0.s8 %v3828
    %v3830 = vlaneseq
    %v3831 = vshrl.u32 %v3830, 7
    %v3832 = vsub.s32 %v3829, %v3831
    %v3833 = vrot.slane %v3819, %v3832
    %v3834 = vcombine.high %v3810, 0.0
    %v3835 = vcombine.high %v3817, 0.0
    %v3836 = vcombine.high %v3826, 0.0
    %v3837 = vcombine.high %v3833, 0.0
    %v3838 = vcombine.low %v3810, %v3817
    %v3840 = vunpack.c.l.s4 1983009808
    %v3841 = vunpack.c.0.s8 %v3840
    %v3842 = vlaneseq
    %v3843 = vshrl.u32 %v3842, 7
    %v3844 = vsub.s32 %v3841, %v3843
    %v3845 = vrot.slane %v3838, %v3844
    %v3846 = vcombine.low %v3834, %v3835
    %v3848 = vunpack.c.l.s4 1983009808
    %v3849 = vunpack.c.0.s8 %v3848
    %v3850 = vlaneseq
    %v3851 = vshrl.u32 %v3850, 7
    %v3852 = vsub.s32 %v3849, %v3851
    %v3853 = vrot.slane %v3846, %v3852
    %v3854 = vcombine.low %v3826, %v3833
    %v3856 = vunpack.c.l.s4 1983009808
    %v3857 = vunpack.c.0.s8 %v3856
    %v3858 = vlaneseq
    %v3859 = vshrl.u32 %v3858, 7
    %v3860 = vsub.s32 %v3857, %v3859
    %v3861 = vrot.slane %v3854, %v3860
    %v3862 = vcombine.low %v3836, %v3837
    %v3864 = vunpack.c.l.s4 1983009808
    %v3865 = vunpack.c.0.s8 %v3864
    %v3866 = vlaneseq
    %v3867 = vshrl.u32 %v3866, 7
    %v3868 = vsub.s32 %v3865, %v3867
    %v3869 = vrot.slane %v3862, %v3868
    %v3870 = vcombine.low %v3845, %v3853
    %v3871 = vcombine.high %v3845, %v3853
    %v3873 = vunpack.c.l.s4 1934713408
    %v3874 = vunpack.c.0.s8 %v3873
    %v3875 = vlaneseq
    %v3876 = vshrl.u32 %v3875, 7
    %v3877 = vsub.s32 %v3874, %v3876
    %v3878 = vrot.slane %v3870, %v3877
    %v3880 = vunpack.c.l.s4 1934713408
    %v3881 = vunpack.c.0.s8 %v3880
    %v3882 = vlaneseq
    %v3883 = vshrl.u32 %v3882, 7
    %v3884 = vsub.s32 %v3881, %v3883
    %v3885 = vrot.slane %v3871, %v3884
    %v3886 = vcombine.low %v3861, %v3869
    %v3887 = vcombine.high %v3861, %v3869
    %v3889 = vunpack.c.l.s4 1934713408
    %v3890 = vunpack.c.0.s8 %v3889
    %v3891 = vlaneseq
    %v3892 = vshrl.u32 %v3891, 7
    %v3893 = vsub.s32 %v3890, %v3892
    %v3894 = vrot.slane %v3886, %v3893
    %v3896 = vunpack.c.l.s4 1934713408
    %v3897 = vunpack.c.0.s8 %v3896
    %v3898 = vlaneseq
    %v3899 = vshrl.u32 %v3898, 7
    %v3900 = vsub.s32 %v3897, %v3899
    %v3901 = vrot.slane %v3887, %v3900
    %v3902 = vcombine.low %v3878, %v3894
    %v3903 = vcombine.high %v3878, %v3894
    %v3904 = vcombine.low %v3885, %v3901
    %v3905 = vcombine.high %v3885, %v3901
    %3907 = vrot.lane.b32.xlu0 %v3903, 8
    %v3908 = vpop.permute.xlu0 %3907
    %3911 = vrot.lane.b32.xlu0 %v3904, 16
    %v3912 = vpop.permute.xlu0 %3911
    %3915 = vrot.lane.b32.xlu0 %v3905, 24
    %v3916 = vpop.permute.xlu0 %3915
    %v3918 = vsel %vm868, %v3902, %v3908
    %v3919 = vsel %vm1995, %v3918, %v3912
    %v3920 = vsel %vm1997, %v3919, %v3916
    %v3921 = vpack.c.bf16 %v3920, %v3920
    %v3923 = vsel %vm79, %v3921, 0
    %3925 = vmatprep.subr.bf16.mxu0 0
    %3926 = vmatpush1.bf16.msra.mxu0 0
    %3927 = vmatprep.subr.bf16.mxu0 0
    %3928 = vmatpush1.bf16.msra.mxu0 0
    %3929 = vmatprep.subr.bf16.mxu0 0
    %3930 = vmatpush1.bf16.msra.mxu0 0
    %3931 = vmatprep.subr.bf16.mxu0 0
    %3932 = vmatpush1.bf16.msra.mxu0 0
    %3933 = vmatprep.subr.bf16.mxu0 0
    %3934 = vmatpush1.bf16.msra.mxu0 0
    %3935 = vmatprep.subr.bf16.mxu0 0
    %3936 = vmatpush1.bf16.msra.mxu0 0
    %3937 = vmatprep.subr.bf16.mxu0 0
    %3938 = vmatpush1.bf16.msra.mxu0 %v2015
    %3939 = vmatprep.subr.bf16.mxu0 0
    %3940 = vmatpush1.bf16.msra.mxu0 %v2014
    %3941 = vmatprep.subr.bf16.mxu0 0
    %3942 = vmatpush2.bf16.msra.mxu0 0
    %3943 = vmatprep.subr.bf16.mxu0 0
    %3944 = vmatpush2.bf16.msra.mxu0 0
    %3945 = vmatprep.subr.bf16.mxu0 0
    %3946 = vmatpush2.bf16.msra.mxu0 0
    %3947 = vmatprep.subr.bf16.mxu0 0
    %3948 = vmatpush2.bf16.msra.mxu0 0
    %3949 = vmatprep.subr.bf16.mxu0 0
    %3950 = vmatpush2.bf16.msra.mxu0 0
    %3951 = vmatprep.subr.bf16.mxu0 0
    %3952 = vmatpush2.bf16.msra.mxu0 0
    %3953 = vmatprep.subr.bf16.mxu0 0
    %3954 = vmatpush2.bf16.msra.mxu0 0
    %3955 = vmatprep.subr.bf16.mxu0 0
    %3956 = vmatpush2.bf16.msra.mxu0 0
    %3957 = vmatprep.mubr.bf16.mxu0 0
    %3958 = vmatmul.mubr.bf16.gmra.mxu0 %v3923
    %v3959 = vpop.f32.mrf.mxu0
    %v3960 = vadd.f32 %v2004, %v3959
    %v3961 = vpop.f32.mrf.mxu0
    %v3962 = vpop.f32.mrf.mxu0
    %v3963 = vpop.f32.mrf.mxu0
    %3964 = vdwg.mxu0
    %s3965 = scalar_lea.vmem [#allocation8], 8
    %3966 = vst.msk [vmem:[%s3965] sm:$0xff] %vm79, %v3960
    // Predicated region
    $region30: #{tpu_custom_call.1} parent=1 // pred_check
      _
    $region31: #{tpu_custom_call.1} parent=1 // pred_check_branch
      %3968 = sbr.rel (0) target = $region33
    $region32: #{tpu_custom_call.1} parent=1 // pred_region
      %s3970 = ssub.s32 256, 256
      %3971 = vsyncadd [#allocation4], %s3970
      %s3972 = sshll.u32 [#allocation8], 4
      %s3973 = int_to_ptr.vmem [resolvable:$true] %s3972
      %3978 = dma.vmem_to_hbm [thread:$0]  %s3973, 256, %s4, [#allocation4], 128, 128, 8
    $region33: #{tpu_custom_call.1} parent=1 // pred_fallthru
      _
    // Predicated region
    $region34: #{tpu_custom_call.1} parent=1 // pred_check
      _
    $region35: #{tpu_custom_call.1} parent=1 // pred_check_branch
      %3980 = sbr.rel (0) target = $region37
    $region36: #{tpu_custom_call.1} parent=1 // pred_region
      %3981 = dma.done [#allocation4], 256
    $region37: #{tpu_custom_call.1} parent=1 // pred_fallthru
      _
    %3982 = vsyncpa [#allocation3], 1
    %3983 = vsyncpa [#allocation6], 1
    %3984 = vsyncpa [#allocation4], 1

</llo_original>
